<compile_context>
chip_gen: v6e
topology: v6e:2x2x1
jax: 0.10.0
libtpu: 0.0.40
codegen_flags: <defaults>
</compile_context>

<pallas_src>
import functools

import jax
import jax.numpy as jnp
from jax.experimental import pallas as pl
from jax.experimental.pallas import tpu as pltpu

_VP = 128  # one-hot lane padding (vreg-aligned concat with context)


def _param_layout(H, E, A, V, T):
    """Row offsets of every parameter inside the packed (rows, 128) blob."""
    segs = [
        ("w_in", _VP + E),   # fused [emb@W_ih_emb (padded) ; W_ih_ctx] -> 3H
        ("whh", H),          # GRU hidden weights -> 3H
        ("w_out", H + E),    # fused output fc [hidden half ; context half] -> V
        ("Wt", H),           # attention query proj -> A
        ("Vt", E),           # attention value proj -> A
        ("sboth", T),        # conv shift matrix [Sm | Sp] -> 2T
        ("small", 16),       # bias / conv rows (one vector per sublane row)
    ]
    off, rows = {}, 0
    for name, n in segs:
        off[name] = rows
        rows += -(-n // 8) * 8   # keep every segment sublane (8) aligned
    return off, rows


def _decoder_decode_kernel(enc_ref, params_ref, logp_ref, *,
                           sos_id, H, E, A, V, T, off, approx_recip):
    f32 = jnp.float32
    B, max_len, _ = logp_ref.shape
    H3 = 3 * H

    def wslice(name, nrows, ncols):
        r0 = off[name]
        return params_ref[r0:r0 + nrows, 0:ncols]

    # ---- once-per-launch loads (all step-invariant) ----
    S = off["small"]
    bih = params_ref[S + 0:S + 1, 0:H3]                           # (1, 3H)
    bhh = params_ref[S + 1:S + 2, 0:H3]
    convb = params_ref[S + 2:S + 3, 0:A]                          # (1, A)
    ba = params_ref[S + 3:S + 4, 0:A]
    fcw = params_ref[S + 4:S + 5, 0:A]
    fcb = params_ref[S + 5:S + 6, 0:1]                            # (1, 1)
    fcob = params_ref[S + 6:S + 7, 0:V]                           # (1, V)
    cw0 = params_ref[S + 7:S + 8, 0:A]                            # conv taps
    cw1 = params_ref[S + 8:S + 9, 0:A]
    cw2 = params_ref[S + 9:S + 10, 0:A]

    enc = enc_ref[...]                                            # (B, T, E)
    Vt = wslice("Vt", E, A)                                       # (E, A)
    # step-invariant enc @ V projection (was a separate host XLA dispatch)
    vv = jnp.stack([jnp.dot(enc[b], Vt, preferred_element_type=f32)
                    for b in range(B)], axis=0)                   # (B, T, A)

    lane_iota = jax.lax.broadcasted_iota(jnp.int32, (B, _VP), 1)
    vocab_iota = jax.lax.broadcasted_iota(jnp.int32, (B, V), 1)

    # ---- initial decode state (decoder_hidden=None -> zeros; input = SOS) ----
    h = jnp.zeros((B, H), f32)
    c = jnp.zeros((B, E), f32)
    aw = jnp.zeros((B, T), f32)
    oh = (lane_iota == sos_id).astype(f32)                        # (B, 128)

    # Whole greedy decode in one launch; MAX_LEN is tiny so the loop is fully
    # unrolled at trace time (static output stores, no grid-step overhead).
    # TODO(synk): for long MAX_LEN switch to lax.fori_loop(unroll=False) (or a
    # grid axis) with a dynamic-sublane store to bound code size.
    for t in range(max_len):
        # -- GRU cell on cat([embedded, context]), PyTorch gate order r|z|n --
        # embedding lookup is folded into w_in; one-hot padded to lane 128 so
        # this concat is vreg-aligned (no relayout).
        x_in = jnp.concatenate([oh, c], axis=-1)                  # (B, 128+E)
        gi = jnp.dot(x_in, wslice("w_in", _VP + E, H3),
                     preferred_element_type=f32) + bih            # (B, 3H)
        gh = jnp.dot(h, wslice("whh", H, H3),
                     preferred_element_type=f32) + bhh
        r = jax.nn.sigmoid(gi[:, 0:H] + gh[:, 0:H])
        z = jax.nn.sigmoid(gi[:, H:2 * H] + gh[:, H:2 * H])
        n = jnp.tanh(gi[:, 2 * H:H3] + r * gh[:, 2 * H:H3])
        h = (1.0 - z) * n + z * h                                 # (B, H)

        # -- location-aware attention --
        # Conv1d(in=1, out=A, k=3, pad=1): neighbour taps via the precomputed
        # (T, 2T) shift matrix (one tiny matmul).
        sh = jnp.dot(aw, wslice("sboth", T, 2 * T),
                     preferred_element_type=f32)                  # (B, 2T)
        conv_attn = (sh[:, 0:T][:, :, None] * cw0[None]
                     + aw[:, :, None] * cw1[None]
                     + sh[:, T:2 * T][:, :, None] * cw2[None]
                     + convb[None])                               # (B, T, A)
        wq = jnp.dot(h, wslice("Wt", H, A), preferred_element_type=f32)
        s = jnp.tanh(wq[:, None, :] + vv + conv_attn + ba[None])
        score = jnp.sum(s * fcw[None], axis=-1) + fcb             # (B, T)

        smax = jnp.max(score, axis=-1, keepdims=True)
        sexp = jnp.exp(score - smax)
        denom = jnp.sum(sexp, axis=-1, keepdims=True)
        if approx_recip:
            aw = sexp * pl.reciprocal(denom, approx=True)
        else:
            aw = sexp / denom                                     # (B, T)
        # context = attn @ enc as a batched MXU matmul (torch.bmm equivalent)
        c = jnp.einsum("bqt,bte->bqe", aw[:, None, :], enc,
                       preferred_element_type=f32)[:, 0, :]       # (B, E)

        # -- output projection + log_softmax on cat([output, context]) --
        # kept as two dots on one fused (H+E, V) weight: avoids an unaligned
        # minor-dim concat of [h | c] at lane offset 32.
        w_out = wslice("w_out", H + E, V)
        logits = (jnp.dot(h, w_out[0:H, :], preferred_element_type=f32)
                  + jnp.dot(c, w_out[H:H + E, :], preferred_element_type=f32)
                  + fcob)                                         # (B, V)
        lmax = jnp.max(logits, axis=-1, keepdims=True)
        lse = jnp.log(jnp.sum(jnp.exp(logits - lmax), axis=-1,
                              keepdims=True)) + lmax
        logp = logits - lse
        logp_ref[:, t:t + 1, :] = logp[:, None, :]   # resident output, 1 writeback

        # greedy symbol (topk(1)[1]) as next step's padded one-hot input
        is_max = logp == jnp.max(logp, axis=-1, keepdims=True)
        sym = jnp.min(jnp.where(is_max, vocab_iota, V), axis=-1, keepdims=True)
        oh = (lane_iota == sym).astype(f32)


def make_decode_fn(B, T, E, H, A, V, max_len, sos_id, approx_recip=False):
    off, rows = _param_layout(H, E, A, V, T)
    kernel = functools.partial(_decoder_decode_kernel, sos_id=sos_id,
                               H=H, E=E, A=A, V=V, T=T, off=off,
                               approx_recip=approx_recip)
    call = pl.pallas_call(
        kernel,
        out_shape=jax.ShapeDtypeStruct((B, max_len, V), jnp.float32),
        grid=(1,),
        in_specs=[pl.BlockSpec((B, T, E), lambda i: (0, 0, 0)),
                  pl.BlockSpec((rows, 128), lambda i: (0, 0))],
        out_specs=pl.BlockSpec((B, max_len, V), lambda i: (0, 0, 0)),
        compiler_params=pltpu.CompilerParams(
            dimension_semantics=("arbitrary",)),
    )

    @jax.jit
    def decode(enc, packed_params):
        # no host-side einsum / matmul / transpose: one dispatch per decode
        return call(enc, packed_params)            # (B, max_len, V)

    return decode


def pack_params(p, T):
    """Parameter-only prep, done ONCE (outside the decode dispatch path)."""
    H = p["whh"].shape[0]
    E = p["wih_c"].shape[0]
    A = p["Wt"].shape[1]
    V = p["emb"].shape[0]
    H3 = 3 * H
    off, rows = _param_layout(H, E, A, V, T)
    hi = jax.lax.Precision.HIGHEST

    # embedding folded into the GRU input projection; one-hot segment padded
    # to a 128-lane boundary so the in-kernel concat stays vreg-aligned.
    e2g = jnp.dot(p["emb"], p["wih_e"], precision=hi)             # (V, 3H)
    w_in = jnp.zeros((_VP + E, H3), jnp.float32)
    w_in = w_in.at[:V].set(e2g)
    w_in = w_in.at[_VP:].set(p["wih_c"])

    w_out = jnp.concatenate([p["fco_h"], p["fco_c"]], axis=0)     # (H+E, V)

    # fused Conv1d shift taps: aw @ [Sm | Sp] -> [aw[t-1] | aw[t+1]]
    r_i = jax.lax.broadcasted_iota(jnp.int32, (T, T), 0)
    c_i = jax.lax.broadcasted_iota(jnp.int32, (T, T), 1)
    sboth = jnp.concatenate([(c_i == r_i + 1).astype(jnp.float32),
                             (c_i == r_i - 1).astype(jnp.float32)], axis=1)

    def row(v):
        v = jnp.asarray(v, jnp.float32).reshape(1, -1)
        return jnp.pad(v, ((0, 0), (0, 128 - v.shape[1])))

    small = jnp.concatenate([
        row(p["bih"]), row(p["bhh"]), row(p["convb"]), row(p["ba"]),
        row(p["fcw"]), row(p["fcb"]), row(p["fcob"]),
        row(p["convw"][0]), row(p["convw"][1]), row(p["convw"][2]),
        jnp.zeros((6, 128), jnp.float32),
    ], axis=0)                                                    # (16, 128)

    packed = jnp.zeros((rows, 128), jnp.float32)
    for name, mat in [("w_in", w_in), ("whh", p["whh"]), ("w_out", w_out),
                      ("Wt", p["Wt"]), ("Vt", p["Vt"]), ("sboth", sboth),
                      ("small", small)]:
        mat = jnp.asarray(mat, jnp.float32)
        packed = packed.at[off[name]:off[name] + mat.shape[0],
                           :mat.shape[1]].set(mat)
    return packed


def init_params(key, V, H, E, A):
    ks = jax.random.split(key, 16)

    def rn(k, shape, scale=0.1):
        return (scale * jax.random.normal(k, shape)).astype(jnp.float32)

    wih = rn(ks[0], (3 * H, H + E))           # torch GRU weight_ih_l0
    whh = rn(ks[1], (3 * H, H))               # torch GRU weight_hh_l0
    fco = rn(ks[2], (H + E, V))               # torch fc weight (V, H+E), transposed
    return dict(
        emb=rn(ks[3], (V, H)),
        wih_e=jnp.transpose(wih[:, :H]),      # (H, 3H)
        wih_c=jnp.transpose(wih[:, H:]),      # (E, 3H)
        whh=jnp.transpose(whh),               # (H, 3H)
        bih=rn(ks[4], (1, 3 * H)),
        bhh=rn(ks[5], (1, 3 * H)),
        convw=rn(ks[6], (3, A)),              # Conv1d weight (A,1,3) as (k, A)
        convb=rn(ks[7], (1, A)),
        Wt=rn(ks[8], (H, A)),                 # W: Linear(H, A, bias=False), transposed
        Vt=rn(ks[9], (E, A)),                 # V: Linear(E, A, bias=False), transposed
        ba=rn(ks[10], (1, A)),                # Attention.b
        fcw=rn(ks[11], (1, A)),               # fc: Linear(A, 1) weight
        fcb=rn(ks[12], (1, 1)),               # fc bias
        fco_h=fco[:H, :],                     # (H, V)
        fco_c=fco[H:, :],                     # (E, V)
        fcob=rn(ks[13], (1, V)),
    )


def reference_decode(enc, p, max_len, sos_id):
    """Pure-JAX greedy decode, faithful to the PyTorch forward (TF ratio 0)."""
    B, T, E = enc.shape
    H = p["whh"].shape[0]
    ids = jnp.full((B,), sos_id, dtype=jnp.int32)
    h = jnp.zeros((B, H), jnp.float32)
    c = jnp.zeros((B, E), jnp.float32)
    aw = jnp.zeros((B, T), jnp.float32)
    outs = []
    for _ in range(max_len):
        emb = p["emb"][ids]
        gi = emb @ p["wih_e"] + c @ p["wih_c"] + p["bih"]
        gh = h @ p["whh"] + p["bhh"]
        r = jax.nn.sigmoid(gi[:, :H] + gh[:, :H])
        z = jax.nn.sigmoid(gi[:, H:2 * H] + gh[:, H:2 * H])
        n = jnp.tanh(gi[:, 2 * H:] + r * gh[:, 2 * H:])
        h = (1.0 - z) * n + z * h
        aw_pad = jnp.pad(aw, ((0, 0), (1, 1)))
        taps = jnp.stack([aw_pad[:, 0:T], aw_pad[:, 1:T + 1], aw_pad[:, 2:T + 2]],
                         axis=-1)
        conv_attn = jnp.einsum("btk,ka->bta", taps, p["convw"]) + p["convb"][None]
        Wq = h @ p["Wt"]
        Vv = jnp.einsum("bte,ea->bta", enc, p["Vt"])
        s = jnp.tanh(Wq[:, None, :] + Vv + conv_attn + p["ba"][None])
        score = jnp.einsum("bta,a->bt", s, p["fcw"][0]) + p["fcb"][0, 0]
        aw = jax.nn.softmax(score, axis=-1)
        c = jnp.einsum("bt,bte->be", aw, enc)
        logits = h @ p["fco_h"] + c @ p["fco_c"] + p["fcob"]
        logp = jax.nn.log_softmax(logits, axis=-1)
        outs.append(logp)
        ids = jnp.argmax(logp, axis=-1).astype(jnp.int32)
    return jnp.stack(outs, axis=1)   # (B, max_len, V)


if __name__ == "__main__":
    # hidden_size=32, encoder_size=32 (non-bidirectional), vocab=24, enc_T=16
    B, T, E, H, V = 2, 16, 32, 32, 24
    A = H                      # attn_dim == hidden_size in DecoderRNN.__init__
    MAX_LEN = 5
    SOS_ID = 1
    # TODO(synk): teacher-forcing branch, attention mask/smoothing and the
    # host-side EOS length bookkeeping are Python/host control flow, not kernel
    # work; dropout_p=0 so dropout is the identity.

    key = jax.random.PRNGKey(0)
    kp, ke = jax.random.split(key)
    params = init_params(kp, V, H, E, A)
    encoder_outputs = (0.5 * jax.random.normal(ke, (B, T, E))).astype(jnp.float32)

    packed = pack_params(params, T)            # parameter-only prep, done once
    decode = make_decode_fn(B, T, E, H, A, V, MAX_LEN, SOS_ID)

    # full greedy decode (all MAX_LEN steps) in a single pallas_call / launch
    decoder_outputs = jax.block_until_ready(decode(encoder_outputs, packed))
    reference = reference_decode(encoder_outputs, params, MAX_LEN, SOS_ID)

    assert decoder_outputs.shape == (B, MAX_LEN, V)
    assert jnp.allclose(decoder_outputs, reference, atol=1e-3, rtol=1e-3), \
        "Pallas kernel mismatch vs pure-JAX reference"
    # greedy token sequences must match exactly (reviewer correctness concern)
    assert jnp.array_equal(jnp.argmax(decoder_outputs, axis=-1),
                           jnp.argmax(reference, axis=-1)), \
        "Greedy token sequence mismatch vs pure-JAX reference"
    print("KERNEL_OK")
</pallas_src>

<mosaic_0001>
module attributes {stable_mosaic.version = 11 : i64} {
  func.func @_decoder_decode_kernel(%arg0: i32, %arg1: memref<2x16x32xf32, #tpu.memory_space<vmem>>, %arg2: memref<352x128xf32, #tpu.memory_space<vmem>>, %arg3: memref<2x5x24xf32, #tpu.memory_space<vmem>>) attributes {dimension_semantics = [#tpu.dimension_semantics<arbitrary>], iteration_bounds = array<i64: 1>, scalar_prefetch = 0 : i64, scratch_operands = 0 : i64, tpu.core_type = #tpu.core_type<tc>, window_params = [{pipeline_mode = #tpu.pipeline_mode<synchronous>, transform_indices = @transform_0, window_bounds = array<i64: 2, 16, 32>}, {pipeline_mode = #tpu.pipeline_mode<synchronous>, transform_indices = @transform_1, window_bounds = array<i64: 352, 128>}, {pipeline_mode = #tpu.pipeline_mode<synchronous>, transform_indices = @transform_2, window_bounds = array<i64: 2, 5, 24>}]} {
    %c336 = arith.constant 336 : index
    %c0 = arith.constant 0 : index
    %0 = vector.load %arg2[%c336, %c0] : memref<352x128xf32, #tpu.memory_space<vmem>>, vector<1x96xf32>
    %c337 = arith.constant 337 : index
    %c0_0 = arith.constant 0 : index
    %1 = vector.load %arg2[%c337, %c0_0] : memref<352x128xf32, #tpu.memory_space<vmem>>, vector<1x96xf32>
    %c338 = arith.constant 338 : index
    %c0_1 = arith.constant 0 : index
    %2 = vector.load %arg2[%c338, %c0_1] : memref<352x128xf32, #tpu.memory_space<vmem>>, vector<1x32xf32>
    %c339 = arith.constant 339 : index
    %c0_2 = arith.constant 0 : index
    %3 = vector.load %arg2[%c339, %c0_2] : memref<352x128xf32, #tpu.memory_space<vmem>>, vector<1x32xf32>
    %c340 = arith.constant 340 : index
    %c0_3 = arith.constant 0 : index
    %4 = vector.load %arg2[%c340, %c0_3] : memref<352x128xf32, #tpu.memory_space<vmem>>, vector<1x32xf32>
    %c341 = arith.constant 341 : index
    %c0_4 = arith.constant 0 : index
    %5 = vector.load %arg2[%c341, %c0_4] : memref<352x128xf32, #tpu.memory_space<vmem>>, vector<1x1xf32>
    %c342 = arith.constant 342 : index
    %c0_5 = arith.constant 0 : index
    %6 = vector.load %arg2[%c342, %c0_5] : memref<352x128xf32, #tpu.memory_space<vmem>>, vector<1x24xf32>
    %c343 = arith.constant 343 : index
    %c0_6 = arith.constant 0 : index
    %7 = vector.load %arg2[%c343, %c0_6] : memref<352x128xf32, #tpu.memory_space<vmem>>, vector<1x32xf32>
    %c344 = arith.constant 344 : index
    %c0_7 = arith.constant 0 : index
    %8 = vector.load %arg2[%c344, %c0_7] : memref<352x128xf32, #tpu.memory_space<vmem>>, vector<1x32xf32>
    %c345 = arith.constant 345 : index
    %c0_8 = arith.constant 0 : index
    %9 = vector.load %arg2[%c345, %c0_8] : memref<352x128xf32, #tpu.memory_space<vmem>>, vector<1x32xf32>
    %c0_9 = arith.constant 0 : index
    %c0_10 = arith.constant 0 : index
    %c0_11 = arith.constant 0 : index
    %10 = vector.load %arg1[%c0_9, %c0_10, %c0_11] : memref<2x16x32xf32, #tpu.memory_space<vmem>>, vector<2x16x32xf32>
    %c288 = arith.constant 288 : index
    %c0_12 = arith.constant 0 : index
    %11 = vector.load %arg2[%c288, %c0_12] : memref<352x128xf32, #tpu.memory_space<vmem>>, vector<32x32xf32>
    %12 = vector.extract_strided_slice %10 {offsets = [0, 0, 0], sizes = [1, 16, 32], strides = [1, 1, 1]} : vector<2x16x32xf32> to vector<1x16x32xf32>
    %13 = vector.shape_cast %12 : vector<1x16x32xf32> to vector<16x32xf32>
    %cst = arith.constant dense<0.000000e+00> : vector<16x32xf32>
    %14 = tpu.matmul %13, %11, %cst {dimension_numbers = #tpu.dot_dimension_numbers<[1], [0], [0], [1], [0, 0, 1, 1], [], []>} : vector<16x32xf32>, vector<32x32xf32>, vector<16x32xf32> -> vector<16x32xf32>
    %15 = vector.extract_strided_slice %10 {offsets = [1, 0, 0], sizes = [1, 16, 32], strides = [1, 1, 1]} : vector<2x16x32xf32> to vector<1x16x32xf32>
    %16 = vector.shape_cast %15 : vector<1x16x32xf32> to vector<16x32xf32>
    %cst_13 = arith.constant dense<0.000000e+00> : vector<16x32xf32>
    %17 = tpu.matmul %16, %11, %cst_13 {dimension_numbers = #tpu.dot_dimension_numbers<[1], [0], [0], [1], [0, 0, 1, 1], [], []>} : vector<16x32xf32>, vector<32x32xf32>, vector<16x32xf32> -> vector<16x32xf32>
    %18 = vector.shape_cast %14 : vector<16x32xf32> to vector<1x16x32xf32>
    %19 = vector.shape_cast %17 : vector<16x32xf32> to vector<1x16x32xf32>
    %20 = tpu.concatenate %18, %19 in 0 : vector<1x16x32xf32>, vector<1x16x32xf32> -> vector<2x16x32xf32>
    %21 = tpu.iota {dimensions = array<i32: 1>} : vector<2x128xi32>
    %22 = tpu.iota {dimensions = array<i32: 1>} : vector<2x24xi32>
    %cst_14 = arith.constant 0.000000e+00 : f32
    %23 = vector.broadcast %cst_14 : f32 to vector<2x32xf32>
    %cst_15 = arith.constant 0.000000e+00 : f32
    %24 = vector.broadcast %cst_15 : f32 to vector<2x32xf32>
    %cst_16 = arith.constant 0.000000e+00 : f32
    %25 = vector.broadcast %cst_16 : f32 to vector<2x16xf32>
    %c1_i32 = arith.constant 1 : i32
    %26 = vector.broadcast %c1_i32 : i32 to vector<2x128xi32>
    %27 = arith.cmpi eq, %21, %26 : vector<2x128xi32>
    %28 = arith.extui %27 : vector<2x128xi1> to vector<2x128xi32>
    %29 = arith.sitofp %28 : vector<2x128xi32> to vector<2x128xf32>
    %30 = tpu.concatenate %29, %24 in 1 : vector<2x128xf32>, vector<2x32xf32> -> vector<2x160xf32>
    %c0_17 = arith.constant 0 : index
    %c0_18 = arith.constant 0 : index
    %31 = vector.load %arg2[%c0_17, %c0_18] : memref<352x128xf32, #tpu.memory_space<vmem>>, vector<160x96xf32>
    %cst_19 = arith.constant dense<0.000000e+00> : vector<2x96xf32>
    %32 = tpu.matmul %30, %31, %cst_19 {dimension_numbers = #tpu.dot_dimension_numbers<[1], [0], [0], [1], [0, 0, 1, 1], [], []>} : vector<2x160xf32>, vector<160x96xf32>, vector<2x96xf32> -> vector<2x96xf32>
    %33 = vector.broadcast %0 : vector<1x96xf32> to vector<2x96xf32>
    %34 = arith.addf %32, %33 : vector<2x96xf32>
    %c160 = arith.constant 160 : index
    %c0_20 = arith.constant 0 : index
    %35 = vector.load %arg2[%c160, %c0_20] : memref<352x128xf32, #tpu.memory_space<vmem>>, vector<32x96xf32>
    %cst_21 = arith.constant dense<0.000000e+00> : vector<2x96xf32>
    %36 = tpu.matmul %23, %35, %cst_21 {dimension_numbers = #tpu.dot_dimension_numbers<[1], [0], [0], [1], [0, 0, 1, 1], [], []>} : vector<2x32xf32>, vector<32x96xf32>, vector<2x96xf32> -> vector<2x96xf32>
    %37 = vector.broadcast %1 : vector<1x96xf32> to vector<2x96xf32>
    %38 = arith.addf %36, %37 : vector<2x96xf32>
    %39 = vector.extract_strided_slice %34 {offsets = [0, 0], sizes = [2, 32], strides = [1, 1]} : vector<2x96xf32> to vector<2x32xf32>
    %40 = vector.extract_strided_slice %38 {offsets = [0, 0], sizes = [2, 32], strides = [1, 1]} : vector<2x96xf32> to vector<2x32xf32>
    %41 = arith.addf %39, %40 : vector<2x32xf32>
    %42 = arith.negf %41 : vector<2x32xf32>
    %43 = math.exp %42 : vector<2x32xf32>
    %cst_22 = arith.constant 1.000000e+00 : f32
    %44 = vector.broadcast %cst_22 : f32 to vector<2x32xf32>
    %45 = arith.addf %44, %43 : vector<2x32xf32>
    %46 = arith.divf %44, %45 : vector<2x32xf32>
    %47 = vector.extract_strided_slice %34 {offsets = [0, 32], sizes = [2, 32], strides = [1, 1]} : vector<2x96xf32> to vector<2x32xf32>
    %48 = vector.extract_strided_slice %38 {offsets = [0, 32], sizes = [2, 32], strides = [1, 1]} : vector<2x96xf32> to vector<2x32xf32>
    %49 = arith.addf %47, %48 : vector<2x32xf32>
    %50 = arith.negf %49 : vector<2x32xf32>
    %51 = math.exp %50 : vector<2x32xf32>
    %cst_23 = arith.constant 1.000000e+00 : f32
    %52 = vector.broadcast %cst_23 : f32 to vector<2x32xf32>
    %53 = arith.addf %52, %51 : vector<2x32xf32>
    %54 = arith.divf %52, %53 : vector<2x32xf32>
    %55 = vector.extract_strided_slice %34 {offsets = [0, 64], sizes = [2, 32], strides = [1, 1]} : vector<2x96xf32> to vector<2x32xf32>
    %56 = vector.extract_strided_slice %38 {offsets = [0, 64], sizes = [2, 32], strides = [1, 1]} : vector<2x96xf32> to vector<2x32xf32>
    %57 = arith.mulf %46, %56 : vector<2x32xf32>
    %58 = arith.addf %55, %57 : vector<2x32xf32>
    %59 = math.tanh %58 : vector<2x32xf32>
    %cst_24 = arith.constant 1.000000e+00 : f32
    %60 = vector.broadcast %cst_24 : f32 to vector<2x32xf32>
    %61 = arith.subf %60, %54 : vector<2x32xf32>
    %62 = arith.mulf %61, %59 : vector<2x32xf32>
    %63 = arith.mulf %54, %23 : vector<2x32xf32>
    %64 = arith.addf %62, %63 : vector<2x32xf32>
    %c320 = arith.constant 320 : index
    %c0_25 = arith.constant 0 : index
    %65 = vector.load %arg2[%c320, %c0_25] : memref<352x128xf32, #tpu.memory_space<vmem>>, vector<16x32xf32>
    %cst_26 = arith.constant dense<0.000000e+00> : vector<2x32xf32>
    %66 = tpu.matmul %25, %65, %cst_26 {dimension_numbers = #tpu.dot_dimension_numbers<[1], [0], [0], [1], [0, 0, 1, 1], [], []>} : vector<2x16xf32>, vector<16x32xf32>, vector<2x32xf32> -> vector<2x32xf32>
    %67 = vector.extract_strided_slice %66 {offsets = [0, 0], sizes = [2, 16], strides = [1, 1]} : vector<2x32xf32> to vector<2x16xf32>
    %68 = vector.shape_cast %67 : vector<2x16xf32> to vector<2x16x1xf32>
    %69 = vector.shape_cast %7 : vector<1x32xf32> to vector<1x1x32xf32>
    %70 = vector.broadcast %68 : vector<2x16x1xf32> to vector<2x16x32xf32>
    %71 = vector.broadcast %69 : vector<1x1x32xf32> to vector<2x16x32xf32>
    %72 = arith.mulf %70, %71 : vector<2x16x32xf32>
    %73 = vector.shape_cast %25 : vector<2x16xf32> to vector<2x16x1xf32>
    %74 = vector.shape_cast %8 : vector<1x32xf32> to vector<1x1x32xf32>
    %75 = vector.broadcast %73 : vector<2x16x1xf32> to vector<2x16x32xf32>
    %76 = vector.broadcast %74 : vector<1x1x32xf32> to vector<2x16x32xf32>
    %77 = arith.mulf %75, %76 : vector<2x16x32xf32>
    %78 = arith.addf %72, %77 : vector<2x16x32xf32>
    %79 = vector.extract_strided_slice %66 {offsets = [0, 16], sizes = [2, 16], strides = [1, 1]} : vector<2x32xf32> to vector<2x16xf32>
    %80 = vector.shape_cast %79 : vector<2x16xf32> to vector<2x16x1xf32>
    %81 = vector.shape_cast %9 : vector<1x32xf32> to vector<1x1x32xf32>
    %82 = vector.broadcast %80 : vector<2x16x1xf32> to vector<2x16x32xf32>
    %83 = vector.broadcast %81 : vector<1x1x32xf32> to vector<2x16x32xf32>
    %84 = arith.mulf %82, %83 : vector<2x16x32xf32>
    %85 = arith.addf %78, %84 : vector<2x16x32xf32>
    %86 = vector.shape_cast %2 : vector<1x32xf32> to vector<1x1x32xf32>
    %87 = vector.broadcast %86 : vector<1x1x32xf32> to vector<2x16x32xf32>
    %88 = arith.addf %85, %87 : vector<2x16x32xf32>
    %c256 = arith.constant 256 : index
    %c0_27 = arith.constant 0 : index
    %89 = vector.load %arg2[%c256, %c0_27] : memref<352x128xf32, #tpu.memory_space<vmem>>, vector<32x32xf32>
    %cst_28 = arith.constant dense<0.000000e+00> : vector<2x32xf32>
    %90 = tpu.matmul %64, %89, %cst_28 {dimension_numbers = #tpu.dot_dimension_numbers<[1], [0], [0], [1], [0, 0, 1, 1], [], []>} : vector<2x32xf32>, vector<32x32xf32>, vector<2x32xf32> -> vector<2x32xf32>
    %91 = vector.shape_cast %90 : vector<2x32xf32> to vector<2x1x32xf32>
    %92 = vector.broadcast %91 : vector<2x1x32xf32> to vector<2x16x32xf32>
    %93 = arith.addf %92, %20 : vector<2x16x32xf32>
    %94 = arith.addf %93, %88 : vector<2x16x32xf32>
    %95 = vector.shape_cast %3 : vector<1x32xf32> to vector<1x1x32xf32>
    %96 = vector.broadcast %95 : vector<1x1x32xf32> to vector<2x16x32xf32>
    %97 = arith.addf %94, %96 : vector<2x16x32xf32>
    %98 = math.tanh %97 : vector<2x16x32xf32>
    %99 = vector.shape_cast %4 : vector<1x32xf32> to vector<1x1x32xf32>
    %100 = vector.broadcast %99 : vector<1x1x32xf32> to vector<2x16x32xf32>
    %101 = arith.mulf %98, %100 : vector<2x16x32xf32>
    %cst_29 = arith.constant dense<0.000000e+00> : vector<2x16xf32>
    %102 = vector.multi_reduction <add>, %101, %cst_29 [2] : vector<2x16x32xf32> to vector<2x16xf32>
    %103 = vector.broadcast %5 : vector<1x1xf32> to vector<2x16xf32>
    %104 = arith.addf %102, %103 : vector<2x16xf32>
    %cst_30 = arith.constant dense<0xFF800000> : vector<2xf32>
    %105 = vector.multi_reduction <maximumf>, %104, %cst_30 [1] : vector<2x16xf32> to vector<2xf32>
    %106 = vector.shape_cast %105 : vector<2xf32> to vector<2x1xf32>
    %107 = vector.broadcast %106 : vector<2x1xf32> to vector<2x16xf32>
    %108 = arith.subf %104, %107 : vector<2x16xf32>
    %109 = math.exp %108 : vector<2x16xf32>
    %cst_31 = arith.constant dense<0.000000e+00> : vector<2xf32>
    %110 = vector.multi_reduction <add>, %109, %cst_31 [1] : vector<2x16xf32> to vector<2xf32>
    %111 = vector.shape_cast %110 : vector<2xf32> to vector<2x1xf32>
    %112 = vector.broadcast %111 : vector<2x1xf32> to vector<2x16xf32>
    %113 = arith.divf %109, %112 : vector<2x16xf32>
    %114 = vector.shape_cast %113 : vector<2x16xf32> to vector<2x1x16xf32>
    "tpu.trace_start"() <{level = 10 : i32, message = "bqt,bte->bqe"}> : () -> ()
    %cst_32 = arith.constant dense<0.000000e+00> : vector<2x1x32xf32>
    %115 = tpu.matmul %114, %10, %cst_32 {dimension_numbers = #tpu.dot_dimension_numbers<[2], [1], [1], [2], [0, 0, 0, 1, 1, 2], [0], [0]>} : vector<2x1x16xf32>, vector<2x16x32xf32>, vector<2x1x32xf32> -> vector<2x1x32xf32>
    "tpu.trace_stop"() : () -> ()
    %116 = vector.shape_cast %115 : vector<2x1x32xf32> to vector<2x32xf32>
    %c192 = arith.constant 192 : index
    %c0_33 = arith.constant 0 : index
    %117 = vector.load %arg2[%c192, %c0_33] : memref<352x128xf32, #tpu.memory_space<vmem>>, vector<64x24xf32>
    %118 = vector.extract_strided_slice %117 {offsets = [0, 0], sizes = [32, 24], strides = [1, 1]} : vector<64x24xf32> to vector<32x24xf32>
    %cst_34 = arith.constant dense<0.000000e+00> : vector<2x24xf32>
    %119 = tpu.matmul %64, %118, %cst_34 {dimension_numbers = #tpu.dot_dimension_numbers<[1], [0], [0], [1], [0, 0, 1, 1], [], []>} : vector<2x32xf32>, vector<32x24xf32>, vector<2x24xf32> -> vector<2x24xf32>
    %120 = vector.extract_strided_slice %117 {offsets = [32, 0], sizes = [32, 24], strides = [1, 1]} : vector<64x24xf32> to vector<32x24xf32>
    %cst_35 = arith.constant dense<0.000000e+00> : vector<2x24xf32>
    %121 = tpu.matmul %116, %120, %cst_35 {dimension_numbers = #tpu.dot_dimension_numbers<[1], [0], [0], [1], [0, 0, 1, 1], [], []>} : vector<2x32xf32>, vector<32x24xf32>, vector<2x24xf32> -> vector<2x24xf32>
    %122 = arith.addf %119, %121 : vector<2x24xf32>
    %123 = vector.broadcast %6 : vector<1x24xf32> to vector<2x24xf32>
    %124 = arith.addf %122, %123 : vector<2x24xf32>
    %cst_36 = arith.constant dense<0xFF800000> : vector<2xf32>
    %125 = vector.multi_reduction <maximumf>, %124, %cst_36 [1] : vector<2x24xf32> to vector<2xf32>
    %126 = vector.shape_cast %125 : vector<2xf32> to vector<2x1xf32>
    %127 = vector.broadcast %126 : vector<2x1xf32> to vector<2x24xf32>
    %128 = arith.subf %124, %127 : vector<2x24xf32>
    %129 = math.exp %128 : vector<2x24xf32>
    %cst_37 = arith.constant dense<0.000000e+00> : vector<2xf32>
    %130 = vector.multi_reduction <add>, %129, %cst_37 [1] : vector<2x24xf32> to vector<2xf32>
    %131 = vector.shape_cast %130 : vector<2xf32> to vector<2x1xf32>
    %132 = math.log %131 : vector<2x1xf32>
    %133 = arith.addf %132, %126 : vector<2x1xf32>
    %134 = vector.broadcast %133 : vector<2x1xf32> to vector<2x24xf32>
    %135 = arith.subf %124, %134 : vector<2x24xf32>
    %136 = vector.shape_cast %135 : vector<2x24xf32> to vector<2x1x24xf32>
    %c0_38 = arith.constant 0 : index
    %c0_39 = arith.constant 0 : index
    %c0_40 = arith.constant 0 : index
    %137 = vector.load %arg3[%c0_38, %c0_39, %c0_40] : memref<2x5x24xf32, #tpu.memory_space<vmem>>, vector<2x1x24xf32>
    tpu.vector_store %arg3[%c0_38, %c0_39, %c0_40], %136 {strides = array<i32>} : memref<2x5x24xf32, #tpu.memory_space<vmem>>, vector<2x1x24xf32>,
    %cst_41 = arith.constant dense<0xFF800000> : vector<2xf32>
    %138 = vector.multi_reduction <maximumf>, %135, %cst_41 [1] : vector<2x24xf32> to vector<2xf32>
    %139 = vector.shape_cast %138 : vector<2xf32> to vector<2x1xf32>
    %140 = vector.broadcast %139 : vector<2x1xf32> to vector<2x24xf32>
    %141 = arith.cmpf oeq, %135, %140 : vector<2x24xf32>
    %c24_i32 = arith.constant 24 : i32
    %142 = vector.broadcast %c24_i32 : i32 to vector<2x24xi32>
    %143 = arith.select %141, %22, %142 : vector<2x24xi1>, vector<2x24xi32>
    %cst_42 = arith.constant dense<2147483647> : vector<2xi32>
    %144 = vector.multi_reduction <minsi>, %143, %cst_42 [1] : vector<2x24xi32> to vector<2xi32>
    %145 = vector.shape_cast %144 : vector<2xi32> to vector<2x1xi32>
    %146 = vector.broadcast %145 : vector<2x1xi32> to vector<2x128xi32>
    %147 = arith.cmpi eq, %21, %146 : vector<2x128xi32>
    %148 = arith.extui %147 : vector<2x128xi1> to vector<2x128xi32>
    %149 = arith.sitofp %148 : vector<2x128xi32> to vector<2x128xf32>
    %150 = tpu.concatenate %149, %116 in 1 : vector<2x128xf32>, vector<2x32xf32> -> vector<2x160xf32>
    %c0_43 = arith.constant 0 : index
    %c0_44 = arith.constant 0 : index
    %151 = vector.load %arg2[%c0_43, %c0_44] : memref<352x128xf32, #tpu.memory_space<vmem>>, vector<160x96xf32>
    %cst_45 = arith.constant dense<0.000000e+00> : vector<2x96xf32>
    %152 = tpu.matmul %150, %151, %cst_45 {dimension_numbers = #tpu.dot_dimension_numbers<[1], [0], [0], [1], [0, 0, 1, 1], [], []>} : vector<2x160xf32>, vector<160x96xf32>, vector<2x96xf32> -> vector<2x96xf32>
    %153 = vector.broadcast %0 : vector<1x96xf32> to vector<2x96xf32>
    %154 = arith.addf %152, %153 : vector<2x96xf32>
    %c160_46 = arith.constant 160 : index
    %c0_47 = arith.constant 0 : index
    %155 = vector.load %arg2[%c160_46, %c0_47] : memref<352x128xf32, #tpu.memory_space<vmem>>, vector<32x96xf32>
    %cst_48 = arith.constant dense<0.000000e+00> : vector<2x96xf32>
    %156 = tpu.matmul %64, %155, %cst_48 {dimension_numbers = #tpu.dot_dimension_numbers<[1], [0], [0], [1], [0, 0, 1, 1], [], []>} : vector<2x32xf32>, vector<32x96xf32>, vector<2x96xf32> -> vector<2x96xf32>
    %157 = vector.broadcast %1 : vector<1x96xf32> to vector<2x96xf32>
    %158 = arith.addf %156, %157 : vector<2x96xf32>
    %159 = vector.extract_strided_slice %154 {offsets = [0, 0], sizes = [2, 32], strides = [1, 1]} : vector<2x96xf32> to vector<2x32xf32>
    %160 = vector.extract_strided_slice %158 {offsets = [0, 0], sizes = [2, 32], strides = [1, 1]} : vector<2x96xf32> to vector<2x32xf32>
    %161 = arith.addf %159, %160 : vector<2x32xf32>
    %162 = arith.negf %161 : vector<2x32xf32>
    %163 = math.exp %162 : vector<2x32xf32>
    %cst_49 = arith.constant 1.000000e+00 : f32
    %164 = vector.broadcast %cst_49 : f32 to vector<2x32xf32>
    %165 = arith.addf %164, %163 : vector<2x32xf32>
    %166 = arith.divf %164, %165 : vector<2x32xf32>
    %167 = vector.extract_strided_slice %154 {offsets = [0, 32], sizes = [2, 32], strides = [1, 1]} : vector<2x96xf32> to vector<2x32xf32>
    %168 = vector.extract_strided_slice %158 {offsets = [0, 32], sizes = [2, 32], strides = [1, 1]} : vector<2x96xf32> to vector<2x32xf32>
    %169 = arith.addf %167, %168 : vector<2x32xf32>
    %170 = arith.negf %169 : vector<2x32xf32>
    %171 = math.exp %170 : vector<2x32xf32>
    %cst_50 = arith.constant 1.000000e+00 : f32
    %172 = vector.broadcast %cst_50 : f32 to vector<2x32xf32>
    %173 = arith.addf %172, %171 : vector<2x32xf32>
    %174 = arith.divf %172, %173 : vector<2x32xf32>
    %175 = vector.extract_strided_slice %154 {offsets = [0, 64], sizes = [2, 32], strides = [1, 1]} : vector<2x96xf32> to vector<2x32xf32>
    %176 = vector.extract_strided_slice %158 {offsets = [0, 64], sizes = [2, 32], strides = [1, 1]} : vector<2x96xf32> to vector<2x32xf32>
    %177 = arith.mulf %166, %176 : vector<2x32xf32>
    %178 = arith.addf %175, %177 : vector<2x32xf32>
    %179 = math.tanh %178 : vector<2x32xf32>
    %cst_51 = arith.constant 1.000000e+00 : f32
    %180 = vector.broadcast %cst_51 : f32 to vector<2x32xf32>
    %181 = arith.subf %180, %174 : vector<2x32xf32>
    %182 = arith.mulf %181, %179 : vector<2x32xf32>
    %183 = arith.mulf %174, %64 : vector<2x32xf32>
    %184 = arith.addf %182, %183 : vector<2x32xf32>
    %c320_52 = arith.constant 320 : index
    %c0_53 = arith.constant 0 : index
    %185 = vector.load %arg2[%c320_52, %c0_53] : memref<352x128xf32, #tpu.memory_space<vmem>>, vector<16x32xf32>
    %cst_54 = arith.constant dense<0.000000e+00> : vector<2x32xf32>
    %186 = tpu.matmul %113, %185, %cst_54 {dimension_numbers = #tpu.dot_dimension_numbers<[1], [0], [0], [1], [0, 0, 1, 1], [], []>} : vector<2x16xf32>, vector<16x32xf32>, vector<2x32xf32> -> vector<2x32xf32>
    %187 = vector.extract_strided_slice %186 {offsets = [0, 0], sizes = [2, 16], strides = [1, 1]} : vector<2x32xf32> to vector<2x16xf32>
    %188 = vector.shape_cast %187 : vector<2x16xf32> to vector<2x16x1xf32>
    %189 = vector.shape_cast %7 : vector<1x32xf32> to vector<1x1x32xf32>
    %190 = vector.broadcast %188 : vector<2x16x1xf32> to vector<2x16x32xf32>
    %191 = vector.broadcast %189 : vector<1x1x32xf32> to vector<2x16x32xf32>
    %192 = arith.mulf %190, %191 : vector<2x16x32xf32>
    %193 = vector.shape_cast %113 : vector<2x16xf32> to vector<2x16x1xf32>
    %194 = vector.shape_cast %8 : vector<1x32xf32> to vector<1x1x32xf32>
    %195 = vector.broadcast %193 : vector<2x16x1xf32> to vector<2x16x32xf32>
    %196 = vector.broadcast %194 : vector<1x1x32xf32> to vector<2x16x32xf32>
    %197 = arith.mulf %195, %196 : vector<2x16x32xf32>
    %198 = arith.addf %192, %197 : vector<2x16x32xf32>
    %199 = vector.extract_strided_slice %186 {offsets = [0, 16], sizes = [2, 16], strides = [1, 1]} : vector<2x32xf32> to vector<2x16xf32>
    %200 = vector.shape_cast %199 : vector<2x16xf32> to vector<2x16x1xf32>
    %201 = vector.shape_cast %9 : vector<1x32xf32> to vector<1x1x32xf32>
    %202 = vector.broadcast %200 : vector<2x16x1xf32> to vector<2x16x32xf32>
    %203 = vector.broadcast %201 : vector<1x1x32xf32> to vector<2x16x32xf32>
    %204 = arith.mulf %202, %203 : vector<2x16x32xf32>
    %205 = arith.addf %198, %204 : vector<2x16x32xf32>
    %206 = vector.shape_cast %2 : vector<1x32xf32> to vector<1x1x32xf32>
    %207 = vector.broadcast %206 : vector<1x1x32xf32> to vector<2x16x32xf32>
    %208 = arith.addf %205, %207 : vector<2x16x32xf32>
    %c256_55 = arith.constant 256 : index
    %c0_56 = arith.constant 0 : index
    %209 = vector.load %arg2[%c256_55, %c0_56] : memref<352x128xf32, #tpu.memory_space<vmem>>, vector<32x32xf32>
    %cst_57 = arith.constant dense<0.000000e+00> : vector<2x32xf32>
    %210 = tpu.matmul %184, %209, %cst_57 {dimension_numbers = #tpu.dot_dimension_numbers<[1], [0], [0], [1], [0, 0, 1, 1], [], []>} : vector<2x32xf32>, vector<32x32xf32>, vector<2x32xf32> -> vector<2x32xf32>
    %211 = vector.shape_cast %210 : vector<2x32xf32> to vector<2x1x32xf32>
    %212 = vector.broadcast %211 : vector<2x1x32xf32> to vector<2x16x32xf32>
    %213 = arith.addf %212, %20 : vector<2x16x32xf32>
    %214 = arith.addf %213, %208 : vector<2x16x32xf32>
    %215 = vector.shape_cast %3 : vector<1x32xf32> to vector<1x1x32xf32>
    %216 = vector.broadcast %215 : vector<1x1x32xf32> to vector<2x16x32xf32>
    %217 = arith.addf %214, %216 : vector<2x16x32xf32>
    %218 = math.tanh %217 : vector<2x16x32xf32>
    %219 = vector.shape_cast %4 : vector<1x32xf32> to vector<1x1x32xf32>
    %220 = vector.broadcast %219 : vector<1x1x32xf32> to vector<2x16x32xf32>
    %221 = arith.mulf %218, %220 : vector<2x16x32xf32>
    %cst_58 = arith.constant dense<0.000000e+00> : vector<2x16xf32>
    %222 = vector.multi_reduction <add>, %221, %cst_58 [2] : vector<2x16x32xf32> to vector<2x16xf32>
    %223 = vector.broadcast %5 : vector<1x1xf32> to vector<2x16xf32>
    %224 = arith.addf %222, %223 : vector<2x16xf32>
    %cst_59 = arith.constant dense<0xFF800000> : vector<2xf32>
    %225 = vector.multi_reduction <maximumf>, %224, %cst_59 [1] : vector<2x16xf32> to vector<2xf32>
    %226 = vector.shape_cast %225 : vector<2xf32> to vector<2x1xf32>
    %227 = vector.broadcast %226 : vector<2x1xf32> to vector<2x16xf32>
    %228 = arith.subf %224, %227 : vector<2x16xf32>
    %229 = math.exp %228 : vector<2x16xf32>
    %cst_60 = arith.constant dense<0.000000e+00> : vector<2xf32>
    %230 = vector.multi_reduction <add>, %229, %cst_60 [1] : vector<2x16xf32> to vector<2xf32>
    %231 = vector.shape_cast %230 : vector<2xf32> to vector<2x1xf32>
    %232 = vector.broadcast %231 : vector<2x1xf32> to vector<2x16xf32>
    %233 = arith.divf %229, %232 : vector<2x16xf32>
    %234 = vector.shape_cast %233 : vector<2x16xf32> to vector<2x1x16xf32>
    "tpu.trace_start"() <{level = 10 : i32, message = "bqt,bte->bqe"}> : () -> ()
    %cst_61 = arith.constant dense<0.000000e+00> : vector<2x1x32xf32>
    %235 = tpu.matmul %234, %10, %cst_61 {dimension_numbers = #tpu.dot_dimension_numbers<[2], [1], [1], [2], [0, 0, 0, 1, 1, 2], [0], [0]>} : vector<2x1x16xf32>, vector<2x16x32xf32>, vector<2x1x32xf32> -> vector<2x1x32xf32>
    "tpu.trace_stop"() : () -> ()
    %236 = vector.shape_cast %235 : vector<2x1x32xf32> to vector<2x32xf32>
    %c192_62 = arith.constant 192 : index
    %c0_63 = arith.constant 0 : index
    %237 = vector.load %arg2[%c192_62, %c0_63] : memref<352x128xf32, #tpu.memory_space<vmem>>, vector<64x24xf32>
    %238 = vector.extract_strided_slice %237 {offsets = [0, 0], sizes = [32, 24], strides = [1, 1]} : vector<64x24xf32> to vector<32x24xf32>
    %cst_64 = arith.constant dense<0.000000e+00> : vector<2x24xf32>
    %239 = tpu.matmul %184, %238, %cst_64 {dimension_numbers = #tpu.dot_dimension_numbers<[1], [0], [0], [1], [0, 0, 1, 1], [], []>} : vector<2x32xf32>, vector<32x24xf32>, vector<2x24xf32> -> vector<2x24xf32>
    %240 = vector.extract_strided_slice %237 {offsets = [32, 0], sizes = [32, 24], strides = [1, 1]} : vector<64x24xf32> to vector<32x24xf32>
    %cst_65 = arith.constant dense<0.000000e+00> : vector<2x24xf32>
    %241 = tpu.matmul %236, %240, %cst_65 {dimension_numbers = #tpu.dot_dimension_numbers<[1], [0], [0], [1], [0, 0, 1, 1], [], []>} : vector<2x32xf32>, vector<32x24xf32>, vector<2x24xf32> -> vector<2x24xf32>
    %242 = arith.addf %239, %241 : vector<2x24xf32>
    %243 = vector.broadcast %6 : vector<1x24xf32> to vector<2x24xf32>
    %244 = arith.addf %242, %243 : vector<2x24xf32>
    %cst_66 = arith.constant dense<0xFF800000> : vector<2xf32>
    %245 = vector.multi_reduction <maximumf>, %244, %cst_66 [1] : vector<2x24xf32> to vector<2xf32>
    %246 = vector.shape_cast %245 : vector<2xf32> to vector<2x1xf32>
    %247 = vector.broadcast %246 : vector<2x1xf32> to vector<2x24xf32>
    %248 = arith.subf %244, %247 : vector<2x24xf32>
    %249 = math.exp %248 : vector<2x24xf32>
    %cst_67 = arith.constant dense<0.000000e+00> : vector<2xf32>
    %250 = vector.multi_reduction <add>, %249, %cst_67 [1] : vector<2x24xf32> to vector<2xf32>
    %251 = vector.shape_cast %250 : vector<2xf32> to vector<2x1xf32>
    %252 = math.log %251 : vector<2x1xf32>
    %253 = arith.addf %252, %246 : vector<2x1xf32>
    %254 = vector.broadcast %253 : vector<2x1xf32> to vector<2x24xf32>
    %255 = arith.subf %244, %254 : vector<2x24xf32>
    %256 = vector.shape_cast %255 : vector<2x24xf32> to vector<2x1x24xf32>
    %c0_68 = arith.constant 0 : index
    %c1 = arith.constant 1 : index
    %c0_69 = arith.constant 0 : index
    %257 = vector.load %arg3[%c0_68, %c1, %c0_69] : memref<2x5x24xf32, #tpu.memory_space<vmem>>, vector<2x1x24xf32>
    tpu.vector_store %arg3[%c0_68, %c1, %c0_69], %256 {strides = array<i32>} : memref<2x5x24xf32, #tpu.memory_space<vmem>>, vector<2x1x24xf32>,
    %cst_70 = arith.constant dense<0xFF800000> : vector<2xf32>
    %258 = vector.multi_reduction <maximumf>, %255, %cst_70 [1] : vector<2x24xf32> to vector<2xf32>
    %259 = vector.shape_cast %258 : vector<2xf32> to vector<2x1xf32>
    %260 = vector.broadcast %259 : vector<2x1xf32> to vector<2x24xf32>
    %261 = arith.cmpf oeq, %255, %260 : vector<2x24xf32>
    %c24_i32_71 = arith.constant 24 : i32
    %262 = vector.broadcast %c24_i32_71 : i32 to vector<2x24xi32>
    %263 = arith.select %261, %22, %262 : vector<2x24xi1>, vector<2x24xi32>
    %cst_72 = arith.constant dense<2147483647> : vector<2xi32>
    %264 = vector.multi_reduction <minsi>, %263, %cst_72 [1] : vector<2x24xi32> to vector<2xi32>
    %265 = vector.shape_cast %264 : vector<2xi32> to vector<2x1xi32>
    %266 = vector.broadcast %265 : vector<2x1xi32> to vector<2x128xi32>
    %267 = arith.cmpi eq, %21, %266 : vector<2x128xi32>
    %268 = arith.extui %267 : vector<2x128xi1> to vector<2x128xi32>
    %269 = arith.sitofp %268 : vector<2x128xi32> to vector<2x128xf32>
    %270 = tpu.concatenate %269, %236 in 1 : vector<2x128xf32>, vector<2x32xf32> -> vector<2x160xf32>
    %c0_73 = arith.constant 0 : index
    %c0_74 = arith.constant 0 : index
    %271 = vector.load %arg2[%c0_73, %c0_74] : memref<352x128xf32, #tpu.memory_space<vmem>>, vector<160x96xf32>
    %cst_75 = arith.constant dense<0.000000e+00> : vector<2x96xf32>
    %272 = tpu.matmul %270, %271, %cst_75 {dimension_numbers = #tpu.dot_dimension_numbers<[1], [0], [0], [1], [0, 0, 1, 1], [], []>} : vector<2x160xf32>, vector<160x96xf32>, vector<2x96xf32> -> vector<2x96xf32>
    %273 = vector.broadcast %0 : vector<1x96xf32> to vector<2x96xf32>
    %274 = arith.addf %272, %273 : vector<2x96xf32>
    %c160_76 = arith.constant 160 : index
    %c0_77 = arith.constant 0 : index
    %275 = vector.load %arg2[%c160_76, %c0_77] : memref<352x128xf32, #tpu.memory_space<vmem>>, vector<32x96xf32>
    %cst_78 = arith.constant dense<0.000000e+00> : vector<2x96xf32>
    %276 = tpu.matmul %184, %275, %cst_78 {dimension_numbers = #tpu.dot_dimension_numbers<[1], [0], [0], [1], [0, 0, 1, 1], [], []>} : vector<2x32xf32>, vector<32x96xf32>, vector<2x96xf32> -> vector<2x96xf32>
    %277 = vector.broadcast %1 : vector<1x96xf32> to vector<2x96xf32>
    %278 = arith.addf %276, %277 : vector<2x96xf32>
    %279 = vector.extract_strided_slice %274 {offsets = [0, 0], sizes = [2, 32], strides = [1, 1]} : vector<2x96xf32> to vector<2x32xf32>
    %280 = vector.extract_strided_slice %278 {offsets = [0, 0], sizes = [2, 32], strides = [1, 1]} : vector<2x96xf32> to vector<2x32xf32>
    %281 = arith.addf %279, %280 : vector<2x32xf32>
    %282 = arith.negf %281 : vector<2x32xf32>
    %283 = math.exp %282 : vector<2x32xf32>
    %cst_79 = arith.constant 1.000000e+00 : f32
    %284 = vector.broadcast %cst_79 : f32 to vector<2x32xf32>
    %285 = arith.addf %284, %283 : vector<2x32xf32>
    %286 = arith.divf %284, %285 : vector<2x32xf32>
    %287 = vector.extract_strided_slice %274 {offsets = [0, 32], sizes = [2, 32], strides = [1, 1]} : vector<2x96xf32> to vector<2x32xf32>
    %288 = vector.extract_strided_slice %278 {offsets = [0, 32], sizes = [2, 32], strides = [1, 1]} : vector<2x96xf32> to vector<2x32xf32>
    %289 = arith.addf %287, %288 : vector<2x32xf32>
    %290 = arith.negf %289 : vector<2x32xf32>
    %291 = math.exp %290 : vector<2x32xf32>
    %cst_80 = arith.constant 1.000000e+00 : f32
    %292 = vector.broadcast %cst_80 : f32 to vector<2x32xf32>
    %293 = arith.addf %292, %291 : vector<2x32xf32>
    %294 = arith.divf %292, %293 : vector<2x32xf32>
    %295 = vector.extract_strided_slice %274 {offsets = [0, 64], sizes = [2, 32], strides = [1, 1]} : vector<2x96xf32> to vector<2x32xf32>
    %296 = vector.extract_strided_slice %278 {offsets = [0, 64], sizes = [2, 32], strides = [1, 1]} : vector<2x96xf32> to vector<2x32xf32>
    %297 = arith.mulf %286, %296 : vector<2x32xf32>
    %298 = arith.addf %295, %297 : vector<2x32xf32>
    %299 = math.tanh %298 : vector<2x32xf32>
    %cst_81 = arith.constant 1.000000e+00 : f32
    %300 = vector.broadcast %cst_81 : f32 to vector<2x32xf32>
    %301 = arith.subf %300, %294 : vector<2x32xf32>
    %302 = arith.mulf %301, %299 : vector<2x32xf32>
    %303 = arith.mulf %294, %184 : vector<2x32xf32>
    %304 = arith.addf %302, %303 : vector<2x32xf32>
    %c320_82 = arith.constant 320 : index
    %c0_83 = arith.constant 0 : index
    %305 = vector.load %arg2[%c320_82, %c0_83] : memref<352x128xf32, #tpu.memory_space<vmem>>, vector<16x32xf32>
    %cst_84 = arith.constant dense<0.000000e+00> : vector<2x32xf32>
    %306 = tpu.matmul %233, %305, %cst_84 {dimension_numbers = #tpu.dot_dimension_numbers<[1], [0], [0], [1], [0, 0, 1, 1], [], []>} : vector<2x16xf32>, vector<16x32xf32>, vector<2x32xf32> -> vector<2x32xf32>
    %307 = vector.extract_strided_slice %306 {offsets = [0, 0], sizes = [2, 16], strides = [1, 1]} : vector<2x32xf32> to vector<2x16xf32>
    %308 = vector.shape_cast %307 : vector<2x16xf32> to vector<2x16x1xf32>
    %309 = vector.shape_cast %7 : vector<1x32xf32> to vector<1x1x32xf32>
    %310 = vector.broadcast %308 : vector<2x16x1xf32> to vector<2x16x32xf32>
    %311 = vector.broadcast %309 : vector<1x1x32xf32> to vector<2x16x32xf32>
    %312 = arith.mulf %310, %311 : vector<2x16x32xf32>
    %313 = vector.shape_cast %233 : vector<2x16xf32> to vector<2x16x1xf32>
    %314 = vector.shape_cast %8 : vector<1x32xf32> to vector<1x1x32xf32>
    %315 = vector.broadcast %313 : vector<2x16x1xf32> to vector<2x16x32xf32>
    %316 = vector.broadcast %314 : vector<1x1x32xf32> to vector<2x16x32xf32>
    %317 = arith.mulf %315, %316 : vector<2x16x32xf32>
    %318 = arith.addf %312, %317 : vector<2x16x32xf32>
    %319 = vector.extract_strided_slice %306 {offsets = [0, 16], sizes = [2, 16], strides = [1, 1]} : vector<2x32xf32> to vector<2x16xf32>
    %320 = vector.shape_cast %319 : vector<2x16xf32> to vector<2x16x1xf32>
    %321 = vector.shape_cast %9 : vector<1x32xf32> to vector<1x1x32xf32>
    %322 = vector.broadcast %320 : vector<2x16x1xf32> to vector<2x16x32xf32>
    %323 = vector.broadcast %321 : vector<1x1x32xf32> to vector<2x16x32xf32>
    %324 = arith.mulf %322, %323 : vector<2x16x32xf32>
    %325 = arith.addf %318, %324 : vector<2x16x32xf32>
    %326 = vector.shape_cast %2 : vector<1x32xf32> to vector<1x1x32xf32>
    %327 = vector.broadcast %326 : vector<1x1x32xf32> to vector<2x16x32xf32>
    %328 = arith.addf %325, %327 : vector<2x16x32xf32>
    %c256_85 = arith.constant 256 : index
    %c0_86 = arith.constant 0 : index
    %329 = vector.load %arg2[%c256_85, %c0_86] : memref<352x128xf32, #tpu.memory_space<vmem>>, vector<32x32xf32>
    %cst_87 = arith.constant dense<0.000000e+00> : vector<2x32xf32>
    %330 = tpu.matmul %304, %329, %cst_87 {dimension_numbers = #tpu.dot_dimension_numbers<[1], [0], [0], [1], [0, 0, 1, 1], [], []>} : vector<2x32xf32>, vector<32x32xf32>, vector<2x32xf32> -> vector<2x32xf32>
    %331 = vector.shape_cast %330 : vector<2x32xf32> to vector<2x1x32xf32>
    %332 = vector.broadcast %331 : vector<2x1x32xf32> to vector<2x16x32xf32>
    %333 = arith.addf %332, %20 : vector<2x16x32xf32>
    %334 = arith.addf %333, %328 : vector<2x16x32xf32>
    %335 = vector.shape_cast %3 : vector<1x32xf32> to vector<1x1x32xf32>
    %336 = vector.broadcast %335 : vector<1x1x32xf32> to vector<2x16x32xf32>
    %337 = arith.addf %334, %336 : vector<2x16x32xf32>
    %338 = math.tanh %337 : vector<2x16x32xf32>
    %339 = vector.shape_cast %4 : vector<1x32xf32> to vector<1x1x32xf32>
    %340 = vector.broadcast %339 : vector<1x1x32xf32> to vector<2x16x32xf32>
    %341 = arith.mulf %338, %340 : vector<2x16x32xf32>
    %cst_88 = arith.constant dense<0.000000e+00> : vector<2x16xf32>
    %342 = vector.multi_reduction <add>, %341, %cst_88 [2] : vector<2x16x32xf32> to vector<2x16xf32>
    %343 = vector.broadcast %5 : vector<1x1xf32> to vector<2x16xf32>
    %344 = arith.addf %342, %343 : vector<2x16xf32>
    %cst_89 = arith.constant dense<0xFF800000> : vector<2xf32>
    %345 = vector.multi_reduction <maximumf>, %344, %cst_89 [1] : vector<2x16xf32> to vector<2xf32>
    %346 = vector.shape_cast %345 : vector<2xf32> to vector<2x1xf32>
    %347 = vector.broadcast %346 : vector<2x1xf32> to vector<2x16xf32>
    %348 = arith.subf %344, %347 : vector<2x16xf32>
    %349 = math.exp %348 : vector<2x16xf32>
    %cst_90 = arith.constant dense<0.000000e+00> : vector<2xf32>
    %350 = vector.multi_reduction <add>, %349, %cst_90 [1] : vector<2x16xf32> to vector<2xf32>
    %351 = vector.shape_cast %350 : vector<2xf32> to vector<2x1xf32>
    %352 = vector.broadcast %351 : vector<2x1xf32> to vector<2x16xf32>
    %353 = arith.divf %349, %352 : vector<2x16xf32>
    %354 = vector.shape_cast %353 : vector<2x16xf32> to vector<2x1x16xf32>
    "tpu.trace_start"() <{level = 10 : i32, message = "bqt,bte->bqe"}> : () -> ()
    %cst_91 = arith.constant dense<0.000000e+00> : vector<2x1x32xf32>
    %355 = tpu.matmul %354, %10, %cst_91 {dimension_numbers = #tpu.dot_dimension_numbers<[2], [1], [1], [2], [0, 0, 0, 1, 1, 2], [0], [0]>} : vector<2x1x16xf32>, vector<2x16x32xf32>, vector<2x1x32xf32> -> vector<2x1x32xf32>
    "tpu.trace_stop"() : () -> ()
    %356 = vector.shape_cast %355 : vector<2x1x32xf32> to vector<2x32xf32>
    %c192_92 = arith.constant 192 : index
    %c0_93 = arith.constant 0 : index
    %357 = vector.load %arg2[%c192_92, %c0_93] : memref<352x128xf32, #tpu.memory_space<vmem>>, vector<64x24xf32>
    %358 = vector.extract_strided_slice %357 {offsets = [0, 0], sizes = [32, 24], strides = [1, 1]} : vector<64x24xf32> to vector<32x24xf32>
    %cst_94 = arith.constant dense<0.000000e+00> : vector<2x24xf32>
    %359 = tpu.matmul %304, %358, %cst_94 {dimension_numbers = #tpu.dot_dimension_numbers<[1], [0], [0], [1], [0, 0, 1, 1], [], []>} : vector<2x32xf32>, vector<32x24xf32>, vector<2x24xf32> -> vector<2x24xf32>
    %360 = vector.extract_strided_slice %357 {offsets = [32, 0], sizes = [32, 24], strides = [1, 1]} : vector<64x24xf32> to vector<32x24xf32>
    %cst_95 = arith.constant dense<0.000000e+00> : vector<2x24xf32>
    %361 = tpu.matmul %356, %360, %cst_95 {dimension_numbers = #tpu.dot_dimension_numbers<[1], [0], [0], [1], [0, 0, 1, 1], [], []>} : vector<2x32xf32>, vector<32x24xf32>, vector<2x24xf32> -> vector<2x24xf32>
    %362 = arith.addf %359, %361 : vector<2x24xf32>
    %363 = vector.broadcast %6 : vector<1x24xf32> to vector<2x24xf32>
    %364 = arith.addf %362, %363 : vector<2x24xf32>
    %cst_96 = arith.constant dense<0xFF800000> : vector<2xf32>
    %365 = vector.multi_reduction <maximumf>, %364, %cst_96 [1] : vector<2x24xf32> to vector<2xf32>
    %366 = vector.shape_cast %365 : vector<2xf32> to vector<2x1xf32>
    %367 = vector.broadcast %366 : vector<2x1xf32> to vector<2x24xf32>
    %368 = arith.subf %364, %367 : vector<2x24xf32>
    %369 = math.exp %368 : vector<2x24xf32>
    %cst_97 = arith.constant dense<0.000000e+00> : vector<2xf32>
    %370 = vector.multi_reduction <add>, %369, %cst_97 [1] : vector<2x24xf32> to vector<2xf32>
    %371 = vector.shape_cast %370 : vector<2xf32> to vector<2x1xf32>
    %372 = math.log %371 : vector<2x1xf32>
    %373 = arith.addf %372, %366 : vector<2x1xf32>
    %374 = vector.broadcast %373 : vector<2x1xf32> to vector<2x24xf32>
    %375 = arith.subf %364, %374 : vector<2x24xf32>
    %376 = vector.shape_cast %375 : vector<2x24xf32> to vector<2x1x24xf32>
    %c0_98 = arith.constant 0 : index
    %c2 = arith.constant 2 : index
    %c0_99 = arith.constant 0 : index
    %377 = vector.load %arg3[%c0_98, %c2, %c0_99] : memref<2x5x24xf32, #tpu.memory_space<vmem>>, vector<2x1x24xf32>
    tpu.vector_store %arg3[%c0_98, %c2, %c0_99], %376 {strides = array<i32>} : memref<2x5x24xf32, #tpu.memory_space<vmem>>, vector<2x1x24xf32>,
    %cst_100 = arith.constant dense<0xFF800000> : vector<2xf32>
    %378 = vector.multi_reduction <maximumf>, %375, %cst_100 [1] : vector<2x24xf32> to vector<2xf32>
    %379 = vector.shape_cast %378 : vector<2xf32> to vector<2x1xf32>
    %380 = vector.broadcast %379 : vector<2x1xf32> to vector<2x24xf32>
    %381 = arith.cmpf oeq, %375, %380 : vector<2x24xf32>
    %c24_i32_101 = arith.constant 24 : i32
    %382 = vector.broadcast %c24_i32_101 : i32 to vector<2x24xi32>
    %383 = arith.select %381, %22, %382 : vector<2x24xi1>, vector<2x24xi32>
    %cst_102 = arith.constant dense<2147483647> : vector<2xi32>
    %384 = vector.multi_reduction <minsi>, %383, %cst_102 [1] : vector<2x24xi32> to vector<2xi32>
    %385 = vector.shape_cast %384 : vector<2xi32> to vector<2x1xi32>
    %386 = vector.broadcast %385 : vector<2x1xi32> to vector<2x128xi32>
    %387 = arith.cmpi eq, %21, %386 : vector<2x128xi32>
    %388 = arith.extui %387 : vector<2x128xi1> to vector<2x128xi32>
    %389 = arith.sitofp %388 : vector<2x128xi32> to vector<2x128xf32>
    %390 = tpu.concatenate %389, %356 in 1 : vector<2x128xf32>, vector<2x32xf32> -> vector<2x160xf32>
    %c0_103 = arith.constant 0 : index
    %c0_104 = arith.constant 0 : index
    %391 = vector.load %arg2[%c0_103, %c0_104] : memref<352x128xf32, #tpu.memory_space<vmem>>, vector<160x96xf32>
    %cst_105 = arith.constant dense<0.000000e+00> : vector<2x96xf32>
    %392 = tpu.matmul %390, %391, %cst_105 {dimension_numbers = #tpu.dot_dimension_numbers<[1], [0], [0], [1], [0, 0, 1, 1], [], []>} : vector<2x160xf32>, vector<160x96xf32>, vector<2x96xf32> -> vector<2x96xf32>
    %393 = vector.broadcast %0 : vector<1x96xf32> to vector<2x96xf32>
    %394 = arith.addf %392, %393 : vector<2x96xf32>
    %c160_106 = arith.constant 160 : index
    %c0_107 = arith.constant 0 : index
    %395 = vector.load %arg2[%c160_106, %c0_107] : memref<352x128xf32, #tpu.memory_space<vmem>>, vector<32x96xf32>
    %cst_108 = arith.constant dense<0.000000e+00> : vector<2x96xf32>
    %396 = tpu.matmul %304, %395, %cst_108 {dimension_numbers = #tpu.dot_dimension_numbers<[1], [0], [0], [1], [0, 0, 1, 1], [], []>} : vector<2x32xf32>, vector<32x96xf32>, vector<2x96xf32> -> vector<2x96xf32>
    %397 = vector.broadcast %1 : vector<1x96xf32> to vector<2x96xf32>
    %398 = arith.addf %396, %397 : vector<2x96xf32>
    %399 = vector.extract_strided_slice %394 {offsets = [0, 0], sizes = [2, 32], strides = [1, 1]} : vector<2x96xf32> to vector<2x32xf32>
    %400 = vector.extract_strided_slice %398 {offsets = [0, 0], sizes = [2, 32], strides = [1, 1]} : vector<2x96xf32> to vector<2x32xf32>
    %401 = arith.addf %399, %400 : vector<2x32xf32>
    %402 = arith.negf %401 : vector<2x32xf32>
    %403 = math.exp %402 : vector<2x32xf32>
    %cst_109 = arith.constant 1.000000e+00 : f32
    %404 = vector.broadcast %cst_109 : f32 to vector<2x32xf32>
    %405 = arith.addf %404, %403 : vector<2x32xf32>
    %406 = arith.divf %404, %405 : vector<2x32xf32>
    %407 = vector.extract_strided_slice %394 {offsets = [0, 32], sizes = [2, 32], strides = [1, 1]} : vector<2x96xf32> to vector<2x32xf32>
    %408 = vector.extract_strided_slice %398 {offsets = [0, 32], sizes = [2, 32], strides = [1, 1]} : vector<2x96xf32> to vector<2x32xf32>
    %409 = arith.addf %407, %408 : vector<2x32xf32>
    %410 = arith.negf %409 : vector<2x32xf32>
    %411 = math.exp %410 : vector<2x32xf32>
    %cst_110 = arith.constant 1.000000e+00 : f32
    %412 = vector.broadcast %cst_110 : f32 to vector<2x32xf32>
    %413 = arith.addf %412, %411 : vector<2x32xf32>
    %414 = arith.divf %412, %413 : vector<2x32xf32>
    %415 = vector.extract_strided_slice %394 {offsets = [0, 64], sizes = [2, 32], strides = [1, 1]} : vector<2x96xf32> to vector<2x32xf32>
    %416 = vector.extract_strided_slice %398 {offsets = [0, 64], sizes = [2, 32], strides = [1, 1]} : vector<2x96xf32> to vector<2x32xf32>
    %417 = arith.mulf %406, %416 : vector<2x32xf32>
    %418 = arith.addf %415, %417 : vector<2x32xf32>
    %419 = math.tanh %418 : vector<2x32xf32>
    %cst_111 = arith.constant 1.000000e+00 : f32
    %420 = vector.broadcast %cst_111 : f32 to vector<2x32xf32>
    %421 = arith.subf %420, %414 : vector<2x32xf32>
    %422 = arith.mulf %421, %419 : vector<2x32xf32>
    %423 = arith.mulf %414, %304 : vector<2x32xf32>
    %424 = arith.addf %422, %423 : vector<2x32xf32>
    %c320_112 = arith.constant 320 : index
    %c0_113 = arith.constant 0 : index
    %425 = vector.load %arg2[%c320_112, %c0_113] : memref<352x128xf32, #tpu.memory_space<vmem>>, vector<16x32xf32>
    %cst_114 = arith.constant dense<0.000000e+00> : vector<2x32xf32>
    %426 = tpu.matmul %353, %425, %cst_114 {dimension_numbers = #tpu.dot_dimension_numbers<[1], [0], [0], [1], [0, 0, 1, 1], [], []>} : vector<2x16xf32>, vector<16x32xf32>, vector<2x32xf32> -> vector<2x32xf32>
    %427 = vector.extract_strided_slice %426 {offsets = [0, 0], sizes = [2, 16], strides = [1, 1]} : vector<2x32xf32> to vector<2x16xf32>
    %428 = vector.shape_cast %427 : vector<2x16xf32> to vector<2x16x1xf32>
    %429 = vector.shape_cast %7 : vector<1x32xf32> to vector<1x1x32xf32>
    %430 = vector.broadcast %428 : vector<2x16x1xf32> to vector<2x16x32xf32>
    %431 = vector.broadcast %429 : vector<1x1x32xf32> to vector<2x16x32xf32>
    %432 = arith.mulf %430, %431 : vector<2x16x32xf32>
    %433 = vector.shape_cast %353 : vector<2x16xf32> to vector<2x16x1xf32>
    %434 = vector.shape_cast %8 : vector<1x32xf32> to vector<1x1x32xf32>
    %435 = vector.broadcast %433 : vector<2x16x1xf32> to vector<2x16x32xf32>
    %436 = vector.broadcast %434 : vector<1x1x32xf32> to vector<2x16x32xf32>
    %437 = arith.mulf %435, %436 : vector<2x16x32xf32>
    %438 = arith.addf %432, %437 : vector<2x16x32xf32>
    %439 = vector.extract_strided_slice %426 {offsets = [0, 16], sizes = [2, 16], strides = [1, 1]} : vector<2x32xf32> to vector<2x16xf32>
    %440 = vector.shape_cast %439 : vector<2x16xf32> to vector<2x16x1xf32>
    %441 = vector.shape_cast %9 : vector<1x32xf32> to vector<1x1x32xf32>
    %442 = vector.broadcast %440 : vector<2x16x1xf32> to vector<2x16x32xf32>
    %443 = vector.broadcast %441 : vector<1x1x32xf32> to vector<2x16x32xf32>
    %444 = arith.mulf %442, %443 : vector<2x16x32xf32>
    %445 = arith.addf %438, %444 : vector<2x16x32xf32>
    %446 = vector.shape_cast %2 : vector<1x32xf32> to vector<1x1x32xf32>
    %447 = vector.broadcast %446 : vector<1x1x32xf32> to vector<2x16x32xf32>
    %448 = arith.addf %445, %447 : vector<2x16x32xf32>
    %c256_115 = arith.constant 256 : index
    %c0_116 = arith.constant 0 : index
    %449 = vector.load %arg2[%c256_115, %c0_116] : memref<352x128xf32, #tpu.memory_space<vmem>>, vector<32x32xf32>
    %cst_117 = arith.constant dense<0.000000e+00> : vector<2x32xf32>
    %450 = tpu.matmul %424, %449, %cst_117 {dimension_numbers = #tpu.dot_dimension_numbers<[1], [0], [0], [1], [0, 0, 1, 1], [], []>} : vector<2x32xf32>, vector<32x32xf32>, vector<2x32xf32> -> vector<2x32xf32>
    %451 = vector.shape_cast %450 : vector<2x32xf32> to vector<2x1x32xf32>
    %452 = vector.broadcast %451 : vector<2x1x32xf32> to vector<2x16x32xf32>
    %453 = arith.addf %452, %20 : vector<2x16x32xf32>
    %454 = arith.addf %453, %448 : vector<2x16x32xf32>
    %455 = vector.shape_cast %3 : vector<1x32xf32> to vector<1x1x32xf32>
    %456 = vector.broadcast %455 : vector<1x1x32xf32> to vector<2x16x32xf32>
    %457 = arith.addf %454, %456 : vector<2x16x32xf32>
    %458 = math.tanh %457 : vector<2x16x32xf32>
    %459 = vector.shape_cast %4 : vector<1x32xf32> to vector<1x1x32xf32>
    %460 = vector.broadcast %459 : vector<1x1x32xf32> to vector<2x16x32xf32>
    %461 = arith.mulf %458, %460 : vector<2x16x32xf32>
    %cst_118 = arith.constant dense<0.000000e+00> : vector<2x16xf32>
    %462 = vector.multi_reduction <add>, %461, %cst_118 [2] : vector<2x16x32xf32> to vector<2x16xf32>
    %463 = vector.broadcast %5 : vector<1x1xf32> to vector<2x16xf32>
    %464 = arith.addf %462, %463 : vector<2x16xf32>
    %cst_119 = arith.constant dense<0xFF800000> : vector<2xf32>
    %465 = vector.multi_reduction <maximumf>, %464, %cst_119 [1] : vector<2x16xf32> to vector<2xf32>
    %466 = vector.shape_cast %465 : vector<2xf32> to vector<2x1xf32>
    %467 = vector.broadcast %466 : vector<2x1xf32> to vector<2x16xf32>
    %468 = arith.subf %464, %467 : vector<2x16xf32>
    %469 = math.exp %468 : vector<2x16xf32>
    %cst_120 = arith.constant dense<0.000000e+00> : vector<2xf32>
    %470 = vector.multi_reduction <add>, %469, %cst_120 [1] : vector<2x16xf32> to vector<2xf32>
    %471 = vector.shape_cast %470 : vector<2xf32> to vector<2x1xf32>
    %472 = vector.broadcast %471 : vector<2x1xf32> to vector<2x16xf32>
    %473 = arith.divf %469, %472 : vector<2x16xf32>
    %474 = vector.shape_cast %473 : vector<2x16xf32> to vector<2x1x16xf32>
    "tpu.trace_start"() <{level = 10 : i32, message = "bqt,bte->bqe"}> : () -> ()
    %cst_121 = arith.constant dense<0.000000e+00> : vector<2x1x32xf32>
    %475 = tpu.matmul %474, %10, %cst_121 {dimension_numbers = #tpu.dot_dimension_numbers<[2], [1], [1], [2], [0, 0, 0, 1, 1, 2], [0], [0]>} : vector<2x1x16xf32>, vector<2x16x32xf32>, vector<2x1x32xf32> -> vector<2x1x32xf32>
    "tpu.trace_stop"() : () -> ()
    %476 = vector.shape_cast %475 : vector<2x1x32xf32> to vector<2x32xf32>
    %c192_122 = arith.constant 192 : index
    %c0_123 = arith.constant 0 : index
    %477 = vector.load %arg2[%c192_122, %c0_123] : memref<352x128xf32, #tpu.memory_space<vmem>>, vector<64x24xf32>
    %478 = vector.extract_strided_slice %477 {offsets = [0, 0], sizes = [32, 24], strides = [1, 1]} : vector<64x24xf32> to vector<32x24xf32>
    %cst_124 = arith.constant dense<0.000000e+00> : vector<2x24xf32>
    %479 = tpu.matmul %424, %478, %cst_124 {dimension_numbers = #tpu.dot_dimension_numbers<[1], [0], [0], [1], [0, 0, 1, 1], [], []>} : vector<2x32xf32>, vector<32x24xf32>, vector<2x24xf32> -> vector<2x24xf32>
    %480 = vector.extract_strided_slice %477 {offsets = [32, 0], sizes = [32, 24], strides = [1, 1]} : vector<64x24xf32> to vector<32x24xf32>
    %cst_125 = arith.constant dense<0.000000e+00> : vector<2x24xf32>
    %481 = tpu.matmul %476, %480, %cst_125 {dimension_numbers = #tpu.dot_dimension_numbers<[1], [0], [0], [1], [0, 0, 1, 1], [], []>} : vector<2x32xf32>, vector<32x24xf32>, vector<2x24xf32> -> vector<2x24xf32>
    %482 = arith.addf %479, %481 : vector<2x24xf32>
    %483 = vector.broadcast %6 : vector<1x24xf32> to vector<2x24xf32>
    %484 = arith.addf %482, %483 : vector<2x24xf32>
    %cst_126 = arith.constant dense<0xFF800000> : vector<2xf32>
    %485 = vector.multi_reduction <maximumf>, %484, %cst_126 [1] : vector<2x24xf32> to vector<2xf32>
    %486 = vector.shape_cast %485 : vector<2xf32> to vector<2x1xf32>
    %487 = vector.broadcast %486 : vector<2x1xf32> to vector<2x24xf32>
    %488 = arith.subf %484, %487 : vector<2x24xf32>
    %489 = math.exp %488 : vector<2x24xf32>
    %cst_127 = arith.constant dense<0.000000e+00> : vector<2xf32>
    %490 = vector.multi_reduction <add>, %489, %cst_127 [1] : vector<2x24xf32> to vector<2xf32>
    %491 = vector.shape_cast %490 : vector<2xf32> to vector<2x1xf32>
    %492 = math.log %491 : vector<2x1xf32>
    %493 = arith.addf %492, %486 : vector<2x1xf32>
    %494 = vector.broadcast %493 : vector<2x1xf32> to vector<2x24xf32>
    %495 = arith.subf %484, %494 : vector<2x24xf32>
    %496 = vector.shape_cast %495 : vector<2x24xf32> to vector<2x1x24xf32>
    %c0_128 = arith.constant 0 : index
    %c3 = arith.constant 3 : index
    %c0_129 = arith.constant 0 : index
    %497 = vector.load %arg3[%c0_128, %c3, %c0_129] : memref<2x5x24xf32, #tpu.memory_space<vmem>>, vector<2x1x24xf32>
    tpu.vector_store %arg3[%c0_128, %c3, %c0_129], %496 {strides = array<i32>} : memref<2x5x24xf32, #tpu.memory_space<vmem>>, vector<2x1x24xf32>,
    %cst_130 = arith.constant dense<0xFF800000> : vector<2xf32>
    %498 = vector.multi_reduction <maximumf>, %495, %cst_130 [1] : vector<2x24xf32> to vector<2xf32>
    %499 = vector.shape_cast %498 : vector<2xf32> to vector<2x1xf32>
    %500 = vector.broadcast %499 : vector<2x1xf32> to vector<2x24xf32>
    %501 = arith.cmpf oeq, %495, %500 : vector<2x24xf32>
    %c24_i32_131 = arith.constant 24 : i32
    %502 = vector.broadcast %c24_i32_131 : i32 to vector<2x24xi32>
    %503 = arith.select %501, %22, %502 : vector<2x24xi1>, vector<2x24xi32>
    %cst_132 = arith.constant dense<2147483647> : vector<2xi32>
    %504 = vector.multi_reduction <minsi>, %503, %cst_132 [1] : vector<2x24xi32> to vector<2xi32>
    %505 = vector.shape_cast %504 : vector<2xi32> to vector<2x1xi32>
    %506 = vector.broadcast %505 : vector<2x1xi32> to vector<2x128xi32>
    %507 = arith.cmpi eq, %21, %506 : vector<2x128xi32>
    %508 = arith.extui %507 : vector<2x128xi1> to vector<2x128xi32>
    %509 = arith.sitofp %508 : vector<2x128xi32> to vector<2x128xf32>
    %510 = tpu.concatenate %509, %476 in 1 : vector<2x128xf32>, vector<2x32xf32> -> vector<2x160xf32>
    %c0_133 = arith.constant 0 : index
    %c0_134 = arith.constant 0 : index
    %511 = vector.load %arg2[%c0_133, %c0_134] : memref<352x128xf32, #tpu.memory_space<vmem>>, vector<160x96xf32>
    %cst_135 = arith.constant dense<0.000000e+00> : vector<2x96xf32>
    %512 = tpu.matmul %510, %511, %cst_135 {dimension_numbers = #tpu.dot_dimension_numbers<[1], [0], [0], [1], [0, 0, 1, 1], [], []>} : vector<2x160xf32>, vector<160x96xf32>, vector<2x96xf32> -> vector<2x96xf32>
    %513 = vector.broadcast %0 : vector<1x96xf32> to vector<2x96xf32>
    %514 = arith.addf %512, %513 : vector<2x96xf32>
    %c160_136 = arith.constant 160 : index
    %c0_137 = arith.constant 0 : index
    %515 = vector.load %arg2[%c160_136, %c0_137] : memref<352x128xf32, #tpu.memory_space<vmem>>, vector<32x96xf32>
    %cst_138 = arith.constant dense<0.000000e+00> : vector<2x96xf32>
    %516 = tpu.matmul %424, %515, %cst_138 {dimension_numbers = #tpu.dot_dimension_numbers<[1], [0], [0], [1], [0, 0, 1, 1], [], []>} : vector<2x32xf32>, vector<32x96xf32>, vector<2x96xf32> -> vector<2x96xf32>
    %517 = vector.broadcast %1 : vector<1x96xf32> to vector<2x96xf32>
    %518 = arith.addf %516, %517 : vector<2x96xf32>
    %519 = vector.extract_strided_slice %514 {offsets = [0, 0], sizes = [2, 32], strides = [1, 1]} : vector<2x96xf32> to vector<2x32xf32>
    %520 = vector.extract_strided_slice %518 {offsets = [0, 0], sizes = [2, 32], strides = [1, 1]} : vector<2x96xf32> to vector<2x32xf32>
    %521 = arith.addf %519, %520 : vector<2x32xf32>
    %522 = arith.negf %521 : vector<2x32xf32>
    %523 = math.exp %522 : vector<2x32xf32>
    %cst_139 = arith.constant 1.000000e+00 : f32
    %524 = vector.broadcast %cst_139 : f32 to vector<2x32xf32>
    %525 = arith.addf %524, %523 : vector<2x32xf32>
    %526 = arith.divf %524, %525 : vector<2x32xf32>
    %527 = vector.extract_strided_slice %514 {offsets = [0, 32], sizes = [2, 32], strides = [1, 1]} : vector<2x96xf32> to vector<2x32xf32>
    %528 = vector.extract_strided_slice %518 {offsets = [0, 32], sizes = [2, 32], strides = [1, 1]} : vector<2x96xf32> to vector<2x32xf32>
    %529 = arith.addf %527, %528 : vector<2x32xf32>
    %530 = arith.negf %529 : vector<2x32xf32>
    %531 = math.exp %530 : vector<2x32xf32>
    %cst_140 = arith.constant 1.000000e+00 : f32
    %532 = vector.broadcast %cst_140 : f32 to vector<2x32xf32>
    %533 = arith.addf %532, %531 : vector<2x32xf32>
    %534 = arith.divf %532, %533 : vector<2x32xf32>
    %535 = vector.extract_strided_slice %514 {offsets = [0, 64], sizes = [2, 32], strides = [1, 1]} : vector<2x96xf32> to vector<2x32xf32>
    %536 = vector.extract_strided_slice %518 {offsets = [0, 64], sizes = [2, 32], strides = [1, 1]} : vector<2x96xf32> to vector<2x32xf32>
    %537 = arith.mulf %526, %536 : vector<2x32xf32>
    %538 = arith.addf %535, %537 : vector<2x32xf32>
    %539 = math.tanh %538 : vector<2x32xf32>
    %cst_141 = arith.constant 1.000000e+00 : f32
    %540 = vector.broadcast %cst_141 : f32 to vector<2x32xf32>
    %541 = arith.subf %540, %534 : vector<2x32xf32>
    %542 = arith.mulf %541, %539 : vector<2x32xf32>
    %543 = arith.mulf %534, %424 : vector<2x32xf32>
    %544 = arith.addf %542, %543 : vector<2x32xf32>
    %c320_142 = arith.constant 320 : index
    %c0_143 = arith.constant 0 : index
    %545 = vector.load %arg2[%c320_142, %c0_143] : memref<352x128xf32, #tpu.memory_space<vmem>>, vector<16x32xf32>
    %cst_144 = arith.constant dense<0.000000e+00> : vector<2x32xf32>
    %546 = tpu.matmul %473, %545, %cst_144 {dimension_numbers = #tpu.dot_dimension_numbers<[1], [0], [0], [1], [0, 0, 1, 1], [], []>} : vector<2x16xf32>, vector<16x32xf32>, vector<2x32xf32> -> vector<2x32xf32>
    %547 = vector.extract_strided_slice %546 {offsets = [0, 0], sizes = [2, 16], strides = [1, 1]} : vector<2x32xf32> to vector<2x16xf32>
    %548 = vector.shape_cast %547 : vector<2x16xf32> to vector<2x16x1xf32>
    %549 = vector.shape_cast %7 : vector<1x32xf32> to vector<1x1x32xf32>
    %550 = vector.broadcast %548 : vector<2x16x1xf32> to vector<2x16x32xf32>
    %551 = vector.broadcast %549 : vector<1x1x32xf32> to vector<2x16x32xf32>
    %552 = arith.mulf %550, %551 : vector<2x16x32xf32>
    %553 = vector.shape_cast %473 : vector<2x16xf32> to vector<2x16x1xf32>
    %554 = vector.shape_cast %8 : vector<1x32xf32> to vector<1x1x32xf32>
    %555 = vector.broadcast %553 : vector<2x16x1xf32> to vector<2x16x32xf32>
    %556 = vector.broadcast %554 : vector<1x1x32xf32> to vector<2x16x32xf32>
    %557 = arith.mulf %555, %556 : vector<2x16x32xf32>
    %558 = arith.addf %552, %557 : vector<2x16x32xf32>
    %559 = vector.extract_strided_slice %546 {offsets = [0, 16], sizes = [2, 16], strides = [1, 1]} : vector<2x32xf32> to vector<2x16xf32>
    %560 = vector.shape_cast %559 : vector<2x16xf32> to vector<2x16x1xf32>
    %561 = vector.shape_cast %9 : vector<1x32xf32> to vector<1x1x32xf32>
    %562 = vector.broadcast %560 : vector<2x16x1xf32> to vector<2x16x32xf32>
    %563 = vector.broadcast %561 : vector<1x1x32xf32> to vector<2x16x32xf32>
    %564 = arith.mulf %562, %563 : vector<2x16x32xf32>
    %565 = arith.addf %558, %564 : vector<2x16x32xf32>
    %566 = vector.shape_cast %2 : vector<1x32xf32> to vector<1x1x32xf32>
    %567 = vector.broadcast %566 : vector<1x1x32xf32> to vector<2x16x32xf32>
    %568 = arith.addf %565, %567 : vector<2x16x32xf32>
    %c256_145 = arith.constant 256 : index
    %c0_146 = arith.constant 0 : index
    %569 = vector.load %arg2[%c256_145, %c0_146] : memref<352x128xf32, #tpu.memory_space<vmem>>, vector<32x32xf32>
    %cst_147 = arith.constant dense<0.000000e+00> : vector<2x32xf32>
    %570 = tpu.matmul %544, %569, %cst_147 {dimension_numbers = #tpu.dot_dimension_numbers<[1], [0], [0], [1], [0, 0, 1, 1], [], []>} : vector<2x32xf32>, vector<32x32xf32>, vector<2x32xf32> -> vector<2x32xf32>
    %571 = vector.shape_cast %570 : vector<2x32xf32> to vector<2x1x32xf32>
    %572 = vector.broadcast %571 : vector<2x1x32xf32> to vector<2x16x32xf32>
    %573 = arith.addf %572, %20 : vector<2x16x32xf32>
    %574 = arith.addf %573, %568 : vector<2x16x32xf32>
    %575 = vector.shape_cast %3 : vector<1x32xf32> to vector<1x1x32xf32>
    %576 = vector.broadcast %575 : vector<1x1x32xf32> to vector<2x16x32xf32>
    %577 = arith.addf %574, %576 : vector<2x16x32xf32>
    %578 = math.tanh %577 : vector<2x16x32xf32>
    %579 = vector.shape_cast %4 : vector<1x32xf32> to vector<1x1x32xf32>
    %580 = vector.broadcast %579 : vector<1x1x32xf32> to vector<2x16x32xf32>
    %581 = arith.mulf %578, %580 : vector<2x16x32xf32>
    %cst_148 = arith.constant dense<0.000000e+00> : vector<2x16xf32>
    %582 = vector.multi_reduction <add>, %581, %cst_148 [2] : vector<2x16x32xf32> to vector<2x16xf32>
    %583 = vector.broadcast %5 : vector<1x1xf32> to vector<2x16xf32>
    %584 = arith.addf %582, %583 : vector<2x16xf32>
    %cst_149 = arith.constant dense<0xFF800000> : vector<2xf32>
    %585 = vector.multi_reduction <maximumf>, %584, %cst_149 [1] : vector<2x16xf32> to vector<2xf32>
    %586 = vector.shape_cast %585 : vector<2xf32> to vector<2x1xf32>
    %587 = vector.broadcast %586 : vector<2x1xf32> to vector<2x16xf32>
    %588 = arith.subf %584, %587 : vector<2x16xf32>
    %589 = math.exp %588 : vector<2x16xf32>
    %cst_150 = arith.constant dense<0.000000e+00> : vector<2xf32>
    %590 = vector.multi_reduction <add>, %589, %cst_150 [1] : vector<2x16xf32> to vector<2xf32>
    %591 = vector.shape_cast %590 : vector<2xf32> to vector<2x1xf32>
    %592 = vector.broadcast %591 : vector<2x1xf32> to vector<2x16xf32>
    %593 = arith.divf %589, %592 : vector<2x16xf32>
    %594 = vector.shape_cast %593 : vector<2x16xf32> to vector<2x1x16xf32>
    "tpu.trace_start"() <{level = 10 : i32, message = "bqt,bte->bqe"}> : () -> ()
    %cst_151 = arith.constant dense<0.000000e+00> : vector<2x1x32xf32>
    %595 = tpu.matmul %594, %10, %cst_151 {dimension_numbers = #tpu.dot_dimension_numbers<[2], [1], [1], [2], [0, 0, 0, 1, 1, 2], [0], [0]>} : vector<2x1x16xf32>, vector<2x16x32xf32>, vector<2x1x32xf32> -> vector<2x1x32xf32>
    "tpu.trace_stop"() : () -> ()
    %596 = vector.shape_cast %595 : vector<2x1x32xf32> to vector<2x32xf32>
    %c192_152 = arith.constant 192 : index
    %c0_153 = arith.constant 0 : index
    %597 = vector.load %arg2[%c192_152, %c0_153] : memref<352x128xf32, #tpu.memory_space<vmem>>, vector<64x24xf32>
    %598 = vector.extract_strided_slice %597 {offsets = [0, 0], sizes = [32, 24], strides = [1, 1]} : vector<64x24xf32> to vector<32x24xf32>
    %cst_154 = arith.constant dense<0.000000e+00> : vector<2x24xf32>
    %599 = tpu.matmul %544, %598, %cst_154 {dimension_numbers = #tpu.dot_dimension_numbers<[1], [0], [0], [1], [0, 0, 1, 1], [], []>} : vector<2x32xf32>, vector<32x24xf32>, vector<2x24xf32> -> vector<2x24xf32>
    %600 = vector.extract_strided_slice %597 {offsets = [32, 0], sizes = [32, 24], strides = [1, 1]} : vector<64x24xf32> to vector<32x24xf32>
    %cst_155 = arith.constant dense<0.000000e+00> : vector<2x24xf32>
    %601 = tpu.matmul %596, %600, %cst_155 {dimension_numbers = #tpu.dot_dimension_numbers<[1], [0], [0], [1], [0, 0, 1, 1], [], []>} : vector<2x32xf32>, vector<32x24xf32>, vector<2x24xf32> -> vector<2x24xf32>
    %602 = arith.addf %599, %601 : vector<2x24xf32>
    %603 = vector.broadcast %6 : vector<1x24xf32> to vector<2x24xf32>
    %604 = arith.addf %602, %603 : vector<2x24xf32>
    %cst_156 = arith.constant dense<0xFF800000> : vector<2xf32>
    %605 = vector.multi_reduction <maximumf>, %604, %cst_156 [1] : vector<2x24xf32> to vector<2xf32>
    %606 = vector.shape_cast %605 : vector<2xf32> to vector<2x1xf32>
    %607 = vector.broadcast %606 : vector<2x1xf32> to vector<2x24xf32>
    %608 = arith.subf %604, %607 : vector<2x24xf32>
    %609 = math.exp %608 : vector<2x24xf32>
    %cst_157 = arith.constant dense<0.000000e+00> : vector<2xf32>
    %610 = vector.multi_reduction <add>, %609, %cst_157 [1] : vector<2x24xf32> to vector<2xf32>
    %611 = vector.shape_cast %610 : vector<2xf32> to vector<2x1xf32>
    %612 = math.log %611 : vector<2x1xf32>
    %613 = arith.addf %612, %606 : vector<2x1xf32>
    %614 = vector.broadcast %613 : vector<2x1xf32> to vector<2x24xf32>
    %615 = arith.subf %604, %614 : vector<2x24xf32>
    %616 = vector.shape_cast %615 : vector<2x24xf32> to vector<2x1x24xf32>
    %c0_158 = arith.constant 0 : index
    %c4 = arith.constant 4 : index
    %c0_159 = arith.constant 0 : index
    %617 = vector.load %arg3[%c0_158, %c4, %c0_159] : memref<2x5x24xf32, #tpu.memory_space<vmem>>, vector<2x1x24xf32>
    tpu.vector_store %arg3[%c0_158, %c4, %c0_159], %616 {strides = array<i32>} : memref<2x5x24xf32, #tpu.memory_space<vmem>>, vector<2x1x24xf32>,
    return
  }
  func.func @transform_0(%arg0: i32) -> (i32, i32, i32) {
    %c0_i32 = arith.constant 0 : i32
    %c0_i32_0 = arith.constant 0 : i32
    %c0_i32_1 = arith.constant 0 : i32
    %c0_i32_2 = arith.constant 0 : i32
    return %c0_i32, %c0_i32_0, %c0_i32_1 : i32, i32, i32
  }
  func.func @transform_1(%arg0: i32) -> (i32, i32) {
    %c0_i32 = arith.constant 0 : i32
    %c0_i32_0 = arith.constant 0 : i32
    %c0_i32_1 = arith.constant 0 : i32
    return %c0_i32, %c0_i32_0 : i32, i32
  }
  func.func @transform_2(%arg0: i32) -> (i32, i32, i32) {
    %c0_i32 = arith.constant 0 : i32
    %c0_i32_0 = arith.constant 0 : i32
    %c0_i32_1 = arith.constant 0 : i32
    %c0_i32_2 = arith.constant 0 : i32
    return %c0_i32, %c0_i32_0, %c0_i32_1 : i32, i32, i32
  }
}

</mosaic_0001>

<llo_original>
// kernel: decode.1
$region0: #{decode.1}
  #allocation0 [shape = 'u32[]', space=smem, size = 0x4, offset = 0x4, fixed_abs, tag = 'smem constant byte address 0x4 - core index']
  #allocation1 [shape = 'u32[144,128]{1,0:T(1,128)}', space=vmem, size = 0x12000, scoped, tag = 'internal scratch']
  %s0 = inlined_call_operand.hbm [shape: f32[2,16,32], index: 0, kind: input, shape index: {}]
  %s1 = inlined_call_operand.hbm [shape: f32[352,128], index: 1, kind: input, shape index: {}]
  %s2 = inlined_call_operand.vmem [shape: f32[2,5,24], index: 2, kind: output, shape index: {}]
  %s3 = sld [smem:[#allocation0]]
  $region26: #{decode.1} parent=0
    _
  %s5 = ssub.s32 1, %s3
  %s6 = scalar_select 0, %s5, %s3
  $region1: #{decode.1} parent=0
    #allocation2 [shape = 'u8[16384]{0}', space=vmem, size = 0x4000, scoped, tag = 'input window, operand 0, single buffered']
    #allocation3 [shape = 's32[1]{0}', space=sflag, size = 0x4, scoped, tag = 'scoped memory for decode.1']
    #allocation4 [shape = 'u8[180224]{0}', space=vmem, size = 0x2c000, scoped, tag = 'input window, operand 1, single buffered']
    #allocation5 [shape = 's32[1]{0}', space=sflag, size = 0x4, scoped, tag = 'scoped memory for decode.1']
    %7 = vsyncpa [#allocation3], 0
    %8 = vsyncpa [#allocation5], 0
    // Predicated region
    $region2: #{decode.1} parent=1 // pred_check
      _
    $region3: #{decode.1} parent=1 // pred_check_branch
      %10 = sbr.rel (0) target = $region5
    $region4: #{decode.1} parent=1 // pred_region
      %s12 = ssub.s32 512, 512
      %13 = vsyncadd [#allocation3], %s12
      %s14 = sshll.u32 [#allocation2], 4
      %s15 = int_to_ptr.vmem [resolvable:$true] %s14
      %20 = dma.hbm_to_vmem [thread:$0]  %s0, 512, %s15, [#allocation3], 128, 128, 8
    $region5: #{decode.1} parent=1 // pred_fallthru
      _
    // Predicated region
    $region6: #{decode.1} parent=1 // pred_check
      _
    $region7: #{decode.1} parent=1 // pred_check_branch
      %22 = sbr.rel (0) target = $region9
    $region8: #{decode.1} parent=1 // pred_region
      %s24 = ssub.s32 5632, 5632
      %25 = vsyncadd [#allocation5], %s24
      %s26 = sshll.u32 [#allocation4], 4
      %s27 = int_to_ptr.vmem [resolvable:$true] %s26
      %32 = dma.hbm_to_vmem [thread:$0]  %s1, 5632, %s27, [#allocation5], 128, 128, 8
    $region9: #{decode.1} parent=1 // pred_fallthru
      _
    // Predicated region
    $region10: #{decode.1} parent=1 // pred_check
      _
    $region11: #{decode.1} parent=1 // pred_check_branch
      %34 = sbr.rel (0) target = $region13
    $region12: #{decode.1} parent=1 // pred_region
      %35 = dma.done [#allocation3], 512
    $region13: #{decode.1} parent=1 // pred_fallthru
      _
    // Predicated region
    $region14: #{decode.1} parent=1 // pred_check
      _
    $region15: #{decode.1} parent=1 // pred_check_branch
      %37 = sbr.rel (0) target = $region17
    $region16: #{decode.1} parent=1 // pred_region
      %38 = dma.done [#allocation5], 5632
    $region17: #{decode.1} parent=1 // pred_fallthru
      _
    %v39 = vld [vmem:[#allocation4 + $0x150] sm:$0x1]
    %v40 = vld [vmem:[#allocation4 + $0x151] sm:$0x1]
    %v41 = vld [vmem:[#allocation4 + $0x152] sm:$0x1]
    %v42 = vld [vmem:[#allocation4 + $0x153] sm:$0x1]
    %v43 = vld [vmem:[#allocation4 + $0x154] sm:$0x1]
    %v44 = vld [vmem:[#allocation4 + $0x155] sm:$0x1]
    %v45 = vld [vmem:[#allocation4 + $0x156] sm:$0x1]
    %v46 = vld [vmem:[#allocation4 + $0x157] sm:$0x1]
    %v47 = vld [vmem:[#allocation4 + $0x158] sm:$0x1]
    %v48 = vld [vmem:[#allocation4 + $0x159] sm:$0x1]
    %v49 = vld [vmem:[#allocation2] sm:$0xff]
    %v50 = vld [vmem:[#allocation2 + $0x8] sm:$0xff]
    %v51 = vld [vmem:[#allocation2 + $0x10] sm:$0xff]
    %v52 = vld [vmem:[#allocation2 + $0x18] sm:$0xff]
    %v53 = vld [vmem:[#allocation4 + $0x120] sm:$0xff]
    %v54 = vld [vmem:[#allocation4 + $0x128] sm:$0xff]
    %v55 = vld [vmem:[#allocation4 + $0x130] sm:$0xff]
    %v56 = vld [vmem:[#allocation4 + $0x138] sm:$0xff]
    %vm57 = vcmask 261120
    %v59 = vsel %vm57, %v49, 0
    %v62 = vsel %vm57, %v50, 0
    %64 = vmatprep.subr.mxu0 0.0
    %65 = vmatpush1.msra.mxu0 0.0
    %66 = vmatprep.subr.mxu0 0.0
    %67 = vmatpush1.msra.mxu0 0.0
    %68 = vmatprep.subr.mxu0 0.0
    %69 = vmatpush1.msra.mxu0 0.0
    %70 = vmatprep.subr.mxu0 0.0
    %71 = vmatpush1.msra.mxu0 0.0
    %72 = vmatprep.subr.mxu0 0.0
    %73 = vmatpush1.msra.mxu0 0.0
    %74 = vmatprep.subr.mxu0 0.0
    %75 = vmatpush1.msra.mxu0 0.0
    %76 = vmatprep.subr.mxu0 0.0
    %77 = vmatpush1.msra.mxu0 0.0
    %78 = vmatprep.subr.mxu0 0.0
    %79 = vmatpush1.msra.mxu0 0.0
    %80 = vmatprep.subr.mxu0 0.0
    %81 = vmatpush1.msra.mxu0 0.0
    %82 = vmatprep.subr.mxu0 0.0
    %83 = vmatpush1.msra.mxu0 0.0
    %84 = vmatprep.subr.mxu0 0.0
    %85 = vmatpush1.msra.mxu0 0.0
    %86 = vmatprep.subr.mxu0 0.0
    %87 = vmatpush1.msra.mxu0 0.0
    %88 = vmatprep.subr.mxu0 0.0
    %89 = vmatpush1.msra.mxu0 %v56
    %90 = vmatprep.subr.mxu0 0.0
    %91 = vmatpush1.msra.mxu0 %v55
    %92 = vmatprep.subr.mxu0 0.0
    %93 = vmatpush1.msra.mxu0 %v54
    %94 = vmatprep.subr.mxu0 0.0
    %95 = vmatpush1.msra.mxu0 %v53
    %96 = vmatprep.subr.mxu0 0.0
    %97 = vmatpush2.msra.mxu0 0.0
    %98 = vmatprep.subr.mxu0 0.0
    %99 = vmatpush2.msra.mxu0 0.0
    %100 = vmatprep.subr.mxu0 0.0
    %101 = vmatpush2.msra.mxu0 0.0
    %102 = vmatprep.subr.mxu0 0.0
    %103 = vmatpush2.msra.mxu0 0.0
    %104 = vmatprep.subr.mxu0 0.0
    %105 = vmatpush2.msra.mxu0 0.0
    %106 = vmatprep.subr.mxu0 0.0
    %107 = vmatpush2.msra.mxu0 0.0
    %108 = vmatprep.subr.mxu0 0.0
    %109 = vmatpush2.msra.mxu0 0.0
    %110 = vmatprep.subr.mxu0 0.0
    %111 = vmatpush2.msra.mxu0 0.0
    %112 = vmatprep.subr.mxu0 0.0
    %113 = vmatpush2.msra.mxu0 0.0
    %114 = vmatprep.subr.mxu0 0.0
    %115 = vmatpush2.msra.mxu0 0.0
    %116 = vmatprep.subr.mxu0 0.0
    %117 = vmatpush2.msra.mxu0 0.0
    %118 = vmatprep.subr.mxu0 0.0
    %119 = vmatpush2.msra.mxu0 0.0
    %120 = vmatprep.subr.mxu0 0.0
    %121 = vmatpush2.msra.mxu0 0.0
    %122 = vmatprep.subr.mxu0 0.0
    %123 = vmatpush2.msra.mxu0 0.0
    %124 = vmatprep.subr.mxu0 0.0
    %125 = vmatpush2.msra.mxu0 0.0
    %126 = vmatprep.subr.mxu0 0.0
    %127 = vmatpush2.msra.mxu0 0.0
    %128 = vmatprep.mubr.f32.mxu0 0.0
    %129 = vmatmul.mubr.f32.gmra.mxu0 %v59
    %v130 = vpop.f32.mrf.mxu0
    %v131 = vadd.f32 0.0, %v130
    %v132 = vpop.f32.mrf.mxu0
    %133 = vmatprep.mubr.f32.mxu0 0.0
    %134 = vmatmul.mubr.f32.gmra.mxu0 %v62
    %v135 = vpop.f32.mrf.mxu0
    %v136 = vadd.f32 0.0, %v135
    %v137 = vpop.f32.mrf.mxu0
    %138 = vdwg.mxu0
    %v140 = vsel %vm57, %v51, 0
    %v143 = vsel %vm57, %v52, 0
    %145 = vmatprep.subr.mxu0 0.0
    %146 = vmatpush1.msra.mxu0 0.0
    %147 = vmatprep.subr.mxu0 0.0
    %148 = vmatpush1.msra.mxu0 0.0
    %149 = vmatprep.subr.mxu0 0.0
    %150 = vmatpush1.msra.mxu0 0.0
    %151 = vmatprep.subr.mxu0 0.0
    %152 = vmatpush1.msra.mxu0 0.0
    %153 = vmatprep.subr.mxu0 0.0
    %154 = vmatpush1.msra.mxu0 0.0
    %155 = vmatprep.subr.mxu0 0.0
    %156 = vmatpush1.msra.mxu0 0.0
    %157 = vmatprep.subr.mxu0 0.0
    %158 = vmatpush1.msra.mxu0 0.0
    %159 = vmatprep.subr.mxu0 0.0
    %160 = vmatpush1.msra.mxu0 0.0
    %161 = vmatprep.subr.mxu0 0.0
    %162 = vmatpush1.msra.mxu0 0.0
    %163 = vmatprep.subr.mxu0 0.0
    %164 = vmatpush1.msra.mxu0 0.0
    %165 = vmatprep.subr.mxu0 0.0
    %166 = vmatpush1.msra.mxu0 0.0
    %167 = vmatprep.subr.mxu0 0.0
    %168 = vmatpush1.msra.mxu0 0.0
    %169 = vmatprep.subr.mxu0 0.0
    %170 = vmatpush1.msra.mxu0 %v56
    %171 = vmatprep.subr.mxu0 0.0
    %172 = vmatpush1.msra.mxu0 %v55
    %173 = vmatprep.subr.mxu0 0.0
    %174 = vmatpush1.msra.mxu0 %v54
    %175 = vmatprep.subr.mxu0 0.0
    %176 = vmatpush1.msra.mxu0 %v53
    %177 = vmatprep.subr.mxu0 0.0
    %178 = vmatpush2.msra.mxu0 0.0
    %179 = vmatprep.subr.mxu0 0.0
    %180 = vmatpush2.msra.mxu0 0.0
    %181 = vmatprep.subr.mxu0 0.0
    %182 = vmatpush2.msra.mxu0 0.0
    %183 = vmatprep.subr.mxu0 0.0
    %184 = vmatpush2.msra.mxu0 0.0
    %185 = vmatprep.subr.mxu0 0.0
    %186 = vmatpush2.msra.mxu0 0.0
    %187 = vmatprep.subr.mxu0 0.0
    %188 = vmatpush2.msra.mxu0 0.0
    %189 = vmatprep.subr.mxu0 0.0
    %190 = vmatpush2.msra.mxu0 0.0
    %191 = vmatprep.subr.mxu0 0.0
    %192 = vmatpush2.msra.mxu0 0.0
    %193 = vmatprep.subr.mxu0 0.0
    %194 = vmatpush2.msra.mxu0 0.0
    %195 = vmatprep.subr.mxu0 0.0
    %196 = vmatpush2.msra.mxu0 0.0
    %197 = vmatprep.subr.mxu0 0.0
    %198 = vmatpush2.msra.mxu0 0.0
    %199 = vmatprep.subr.mxu0 0.0
    %200 = vmatpush2.msra.mxu0 0.0
    %201 = vmatprep.subr.mxu0 0.0
    %202 = vmatpush2.msra.mxu0 0.0
    %203 = vmatprep.subr.mxu0 0.0
    %204 = vmatpush2.msra.mxu0 0.0
    %205 = vmatprep.subr.mxu0 0.0
    %206 = vmatpush2.msra.mxu0 0.0
    %207 = vmatprep.subr.mxu0 0.0
    %208 = vmatpush2.msra.mxu0 0.0
    %209 = vmatprep.mubr.f32.mxu0 0.0
    %210 = vmatmul.mubr.f32.gmra.mxu0 %v140
    %v211 = vpop.f32.mrf.mxu0
    %v212 = vadd.f32 0.0, %v211
    %v213 = vpop.f32.mrf.mxu0
    %214 = vmatprep.mubr.f32.mxu0 0.0
    %215 = vmatmul.mubr.f32.gmra.mxu0 %v143
    %v216 = vpop.f32.mrf.mxu0
    %v217 = vadd.f32 0.0, %v216
    %v218 = vpop.f32.mrf.mxu0
    %219 = vdwg.mxu0
    %v220 = vlaneseq
    %v221 = vand.u32 %v220, 127
    %vm222 = vcmp.eq.s32.totalorder %v221, 1
    %v223 = vsel %vm222, 1, 0
    %v224 = vcvt.s32.f32 %v223
    %v225 = vld [vmem:[#allocation4] sm:$0xff]
    %v226 = vld [vmem:[#allocation4 + $0x8] sm:$0xff]
    %v227 = vld [vmem:[#allocation4 + $0x10] sm:$0xff]
    %v228 = vld [vmem:[#allocation4 + $0x18] sm:$0xff]
    %v229 = vld [vmem:[#allocation4 + $0x20] sm:$0xff]
    %v230 = vld [vmem:[#allocation4 + $0x28] sm:$0xff]
    %v231 = vld [vmem:[#allocation4 + $0x30] sm:$0xff]
    %v232 = vld [vmem:[#allocation4 + $0x38] sm:$0xff]
    %v233 = vld [vmem:[#allocation4 + $0x40] sm:$0xff]
    %v234 = vld [vmem:[#allocation4 + $0x48] sm:$0xff]
    %v235 = vld [vmem:[#allocation4 + $0x50] sm:$0xff]
    %v236 = vld [vmem:[#allocation4 + $0x58] sm:$0xff]
    %v237 = vld [vmem:[#allocation4 + $0x60] sm:$0xff]
    %v238 = vld [vmem:[#allocation4 + $0x68] sm:$0xff]
    %v239 = vld [vmem:[#allocation4 + $0x70] sm:$0xff]
    %v240 = vld [vmem:[#allocation4 + $0x78] sm:$0xff]
    %v241 = vld [vmem:[#allocation4 + $0x80] sm:$0xff]
    %v242 = vld [vmem:[#allocation4 + $0x88] sm:$0xff]
    %v243 = vld [vmem:[#allocation4 + $0x90] sm:$0xff]
    %v244 = vld [vmem:[#allocation4 + $0x98] sm:$0xff]
    %v245 = vlaneseq
    %v246 = vshrl.u32 %v245, 7
    %v247 = vsub.s32 0, %v246
    %v248 = vrot.slane %v39, %v247
    %v250 = vsel %vm57, 0.0, 0
    %252 = vmatprep.subr.mxu0 0.0
    %253 = vmatpush1.msra.mxu0 %v240
    %254 = vmatprep.subr.mxu0 0.0
    %255 = vmatpush1.msra.mxu0 %v239
    %256 = vmatprep.subr.mxu0 0.0
    %257 = vmatpush1.msra.mxu0 %v238
    %258 = vmatprep.subr.mxu0 0.0
    %259 = vmatpush1.msra.mxu0 %v237
    %260 = vmatprep.subr.mxu0 0.0
    %261 = vmatpush1.msra.mxu0 %v236
    %262 = vmatprep.subr.mxu0 0.0
    %263 = vmatpush1.msra.mxu0 %v235
    %264 = vmatprep.subr.mxu0 0.0
    %265 = vmatpush1.msra.mxu0 %v234
    %266 = vmatprep.subr.mxu0 0.0
    %267 = vmatpush1.msra.mxu0 %v233
    %268 = vmatprep.subr.mxu0 0.0
    %269 = vmatpush1.msra.mxu0 %v232
    %270 = vmatprep.subr.mxu0 0.0
    %271 = vmatpush1.msra.mxu0 %v231
    %272 = vmatprep.subr.mxu0 0.0
    %273 = vmatpush1.msra.mxu0 %v230
    %274 = vmatprep.subr.mxu0 0.0
    %275 = vmatpush1.msra.mxu0 %v229
    %276 = vmatprep.subr.mxu0 0.0
    %277 = vmatpush1.msra.mxu0 %v228
    %278 = vmatprep.subr.mxu0 0.0
    %279 = vmatpush1.msra.mxu0 %v227
    %280 = vmatprep.subr.mxu0 0.0
    %281 = vmatpush1.msra.mxu0 %v226
    %282 = vmatprep.subr.mxu0 0.0
    %283 = vmatpush1.msra.mxu0 %v225
    %284 = vmatprep.subr.mxu0 0.0
    %285 = vmatpush2.msra.mxu0 0.0
    %286 = vmatprep.subr.mxu0 0.0
    %287 = vmatpush2.msra.mxu0 0.0
    %288 = vmatprep.subr.mxu0 0.0
    %289 = vmatpush2.msra.mxu0 0.0
    %290 = vmatprep.subr.mxu0 0.0
    %291 = vmatpush2.msra.mxu0 0.0
    %292 = vmatprep.subr.mxu0 0.0
    %293 = vmatpush2.msra.mxu0 0.0
    %294 = vmatprep.subr.mxu0 0.0
    %295 = vmatpush2.msra.mxu0 0.0
    %296 = vmatprep.subr.mxu0 0.0
    %297 = vmatpush2.msra.mxu0 0.0
    %298 = vmatprep.subr.mxu0 0.0
    %299 = vmatpush2.msra.mxu0 0.0
    %300 = vmatprep.subr.mxu0 0.0
    %301 = vmatpush2.msra.mxu0 0.0
    %302 = vmatprep.subr.mxu0 0.0
    %303 = vmatpush2.msra.mxu0 0.0
    %304 = vmatprep.subr.mxu0 0.0
    %305 = vmatpush2.msra.mxu0 0.0
    %306 = vmatprep.subr.mxu0 0.0
    %307 = vmatpush2.msra.mxu0 0.0
    %308 = vmatprep.subr.mxu0 0.0
    %309 = vmatpush2.msra.mxu0 %v244
    %310 = vmatprep.subr.mxu0 0.0
    %311 = vmatpush2.msra.mxu0 %v243
    %312 = vmatprep.subr.mxu0 0.0
    %313 = vmatpush2.msra.mxu0 %v242
    %314 = vmatprep.subr.mxu0 0.0
    %315 = vmatpush2.msra.mxu0 %v241
    %316 = vmatprep.mubr.f32.mxu0 %v250
    %317 = vmatmul.mubr.f32.gmra.mxu0 %v224
    %v318 = vpop.f32.mrf.mxu0
    %v319 = vadd.f32 %v248, %v318
    %v320 = vpop.f32.mrf.mxu0
    %321 = vdwg.mxu0
    %v322 = vld [vmem:[#allocation4 + $0xa0] sm:$0xff]
    %v323 = vld [vmem:[#allocation4 + $0xa8] sm:$0xff]
    %v324 = vld [vmem:[#allocation4 + $0xb0] sm:$0xff]
    %v325 = vld [vmem:[#allocation4 + $0xb8] sm:$0xff]
    %v326 = vlaneseq
    %v327 = vshrl.u32 %v326, 7
    %v328 = vsub.s32 0, %v327
    %v329 = vrot.slane %v40, %v328
    %330 = vmatprep.subr.mxu0 0.0
    %331 = vmatpush1.msra.mxu0 0.0
    %332 = vmatprep.subr.mxu0 0.0
    %333 = vmatpush1.msra.mxu0 0.0
    %334 = vmatprep.subr.mxu0 0.0
    %335 = vmatpush1.msra.mxu0 0.0
    %336 = vmatprep.subr.mxu0 0.0
    %337 = vmatpush1.msra.mxu0 0.0
    %338 = vmatprep.subr.mxu0 0.0
    %339 = vmatpush1.msra.mxu0 0.0
    %340 = vmatprep.subr.mxu0 0.0
    %341 = vmatpush1.msra.mxu0 0.0
    %342 = vmatprep.subr.mxu0 0.0
    %343 = vmatpush1.msra.mxu0 0.0
    %344 = vmatprep.subr.mxu0 0.0
    %345 = vmatpush1.msra.mxu0 0.0
    %346 = vmatprep.subr.mxu0 0.0
    %347 = vmatpush1.msra.mxu0 0.0
    %348 = vmatprep.subr.mxu0 0.0
    %349 = vmatpush1.msra.mxu0 0.0
    %350 = vmatprep.subr.mxu0 0.0
    %351 = vmatpush1.msra.mxu0 0.0
    %352 = vmatprep.subr.mxu0 0.0
    %353 = vmatpush1.msra.mxu0 0.0
    %354 = vmatprep.subr.mxu0 0.0
    %355 = vmatpush1.msra.mxu0 %v325
    %356 = vmatprep.subr.mxu0 0.0
    %357 = vmatpush1.msra.mxu0 %v324
    %358 = vmatprep.subr.mxu0 0.0
    %359 = vmatpush1.msra.mxu0 %v323
    %360 = vmatprep.subr.mxu0 0.0
    %361 = vmatpush1.msra.mxu0 %v322
    %362 = vmatprep.subr.mxu0 0.0
    %363 = vmatpush2.msra.mxu0 0.0
    %364 = vmatprep.subr.mxu0 0.0
    %365 = vmatpush2.msra.mxu0 0.0
    %366 = vmatprep.subr.mxu0 0.0
    %367 = vmatpush2.msra.mxu0 0.0
    %368 = vmatprep.subr.mxu0 0.0
    %369 = vmatpush2.msra.mxu0 0.0
    %370 = vmatprep.subr.mxu0 0.0
    %371 = vmatpush2.msra.mxu0 0.0
    %372 = vmatprep.subr.mxu0 0.0
    %373 = vmatpush2.msra.mxu0 0.0
    %374 = vmatprep.subr.mxu0 0.0
    %375 = vmatpush2.msra.mxu0 0.0
    %376 = vmatprep.subr.mxu0 0.0
    %377 = vmatpush2.msra.mxu0 0.0
    %378 = vmatprep.subr.mxu0 0.0
    %379 = vmatpush2.msra.mxu0 0.0
    %380 = vmatprep.subr.mxu0 0.0
    %381 = vmatpush2.msra.mxu0 0.0
    %382 = vmatprep.subr.mxu0 0.0
    %383 = vmatpush2.msra.mxu0 0.0
    %384 = vmatprep.subr.mxu0 0.0
    %385 = vmatpush2.msra.mxu0 0.0
    %386 = vmatprep.subr.mxu0 0.0
    %387 = vmatpush2.msra.mxu0 0.0
    %388 = vmatprep.subr.mxu0 0.0
    %389 = vmatpush2.msra.mxu0 0.0
    %390 = vmatprep.subr.mxu0 0.0
    %391 = vmatpush2.msra.mxu0 0.0
    %392 = vmatprep.subr.mxu0 0.0
    %393 = vmatpush2.msra.mxu0 0.0
    %394 = vmatprep.mubr.f32.mxu0 0.0
    %395 = vmatmul.mubr.f32.gmra.mxu0 %v250
    %v396 = vpop.f32.mrf.mxu0
    %v397 = vadd.f32 %v329, %v396
    %v398 = vpop.f32.mrf.mxu0
    %399 = vdwg.mxu0
    %v400 = vadd.f32 %v319, %v397
    %v401 = vxor.u32 %v400, 2147483648
    %v402 = vmul.f32 %v401, 1.442695
    %v403 = vpow.pop %v402
    %v404 = vadd.f32 %v403, 1.0
    %v405 = vrcp.pop %v404
    %v406 = vmul.f32 1.0, %v405
    %408 = vrot.lane.b32.xlu0 %v397, 64
    %v409 = vpop.permute.xlu0 %408
    %v411 = vmul.f32 %v406, %v409
    %413 = vrot.lane.b32.xlu0 %v411, 64
    %v414 = vpop.permute.xlu0 %413
    %v416 = vadd.f32 %v319, %v414
    %v417 = vtanh.pop %v416
    %v418 = vsub.f32 1.0, %v406
    %420 = vrot.lane.b32.xlu0 %v417, 96
    %v421 = vpop.permute.xlu0 %420
    %v423 = vmul.f32 %v418, %v421
    %v424 = vmul.f32 %v406, 0.0
    %v425 = vadd.f32 %v423, %v424
    %v426 = vld [vmem:[#allocation4 + $0x140] sm:$0xff]
    %v427 = vld [vmem:[#allocation4 + $0x148] sm:$0xff]
    %vm428 = vcmask 130048
    %v429 = vsel %vm428, 0.0, 0
    %431 = vmatprep.subr.mxu0 0.0
    %432 = vmatpush1.msra.mxu0 0.0
    %433 = vmatprep.subr.mxu0 0.0
    %434 = vmatpush1.msra.mxu0 0.0
    %435 = vmatprep.subr.mxu0 0.0
    %436 = vmatpush1.msra.mxu0 0.0
    %437 = vmatprep.subr.mxu0 0.0
    %438 = vmatpush1.msra.mxu0 0.0
    %439 = vmatprep.subr.mxu0 0.0
    %440 = vmatpush1.msra.mxu0 0.0
    %441 = vmatprep.subr.mxu0 0.0
    %442 = vmatpush1.msra.mxu0 0.0
    %443 = vmatprep.subr.mxu0 0.0
    %444 = vmatpush1.msra.mxu0 0.0
    %445 = vmatprep.subr.mxu0 0.0
    %446 = vmatpush1.msra.mxu0 0.0
    %447 = vmatprep.subr.mxu0 0.0
    %448 = vmatpush1.msra.mxu0 0.0
    %449 = vmatprep.subr.mxu0 0.0
    %450 = vmatpush1.msra.mxu0 0.0
    %451 = vmatprep.subr.mxu0 0.0
    %452 = vmatpush1.msra.mxu0 0.0
    %453 = vmatprep.subr.mxu0 0.0
    %454 = vmatpush1.msra.mxu0 0.0
    %455 = vmatprep.subr.mxu0 0.0
    %456 = vmatpush1.msra.mxu0 0.0
    %457 = vmatprep.subr.mxu0 0.0
    %458 = vmatpush1.msra.mxu0 0.0
    %459 = vmatprep.subr.mxu0 0.0
    %460 = vmatpush1.msra.mxu0 %v427
    %461 = vmatprep.subr.mxu0 0.0
    %462 = vmatpush1.msra.mxu0 %v426
    %463 = vmatprep.subr.mxu0 0.0
    %464 = vmatpush2.msra.mxu0 0.0
    %465 = vmatprep.subr.mxu0 0.0
    %466 = vmatpush2.msra.mxu0 0.0
    %467 = vmatprep.subr.mxu0 0.0
    %468 = vmatpush2.msra.mxu0 0.0
    %469 = vmatprep.subr.mxu0 0.0
    %470 = vmatpush2.msra.mxu0 0.0
    %471 = vmatprep.subr.mxu0 0.0
    %472 = vmatpush2.msra.mxu0 0.0
    %473 = vmatprep.subr.mxu0 0.0
    %474 = vmatpush2.msra.mxu0 0.0
    %475 = vmatprep.subr.mxu0 0.0
    %476 = vmatpush2.msra.mxu0 0.0
    %477 = vmatprep.subr.mxu0 0.0
    %478 = vmatpush2.msra.mxu0 0.0
    %479 = vmatprep.subr.mxu0 0.0
    %480 = vmatpush2.msra.mxu0 0.0
    %481 = vmatprep.subr.mxu0 0.0
    %482 = vmatpush2.msra.mxu0 0.0
    %483 = vmatprep.subr.mxu0 0.0
    %484 = vmatpush2.msra.mxu0 0.0
    %485 = vmatprep.subr.mxu0 0.0
    %486 = vmatpush2.msra.mxu0 0.0
    %487 = vmatprep.subr.mxu0 0.0
    %488 = vmatpush2.msra.mxu0 0.0
    %489 = vmatprep.subr.mxu0 0.0
    %490 = vmatpush2.msra.mxu0 0.0
    %491 = vmatprep.subr.mxu0 0.0
    %492 = vmatpush2.msra.mxu0 0.0
    %493 = vmatprep.subr.mxu0 0.0
    %494 = vmatpush2.msra.mxu0 0.0
    %495 = vmatprep.mubr.f32.mxu0 0.0
    %496 = vmatmul.mubr.f32.gmra.mxu0 %v429
    %v497 = vpop.f32.mrf.mxu0
    %v498 = vadd.f32 0.0, %v497
    %v499 = vpop.f32.mrf.mxu0
    %500 = vdwg.mxu0
    %v501 = vlaneseq
    %v502 = vshrl.u32 %v501, 7
    %v503 = vsub.s32 0, %v502
    %v504 = vrot.slane %v498, %v503
    %506 = vbcast.lane.b32.xlu0 %v504, 256
    %v507 = vpop.permute.xlu0 %506
    %s509 = sor.u32 256, 8
    %510 = vbcast.lane.b32.xlu0 %v504, %s509
    %v511 = vpop.permute.xlu0 %510
    %v512 = vlaneseq
    %v513 = vshrl.u32 %v512, 7
    %v514 = vsub.s32 1, %v513
    %v515 = vrot.slane %v498, %v514
    %517 = vbcast.lane.b32.xlu0 %v515, 256
    %v518 = vpop.permute.xlu0 %517
    %s520 = sor.u32 256, 8
    %521 = vbcast.lane.b32.xlu0 %v515, %s520
    %v522 = vpop.permute.xlu0 %521
    %v523 = vlaneseq
    %v524 = vshrl.u32 %v523, 7
    %v525 = vsub.s32 0, %v524
    %v526 = vrot.slane %v46, %v525
    %v527 = vmul.f32 %v507, %v526
    %v528 = vmul.f32 %v511, %v526
    %v529 = vmul.f32 %v518, %v526
    %v530 = vmul.f32 %v522, %v526
    %v531 = vlaneseq
    %v532 = vshrl.u32 %v531, 7
    %v533 = vsub.s32 0, %v532
    %v534 = vrot.slane %v47, %v533
    %v535 = vmul.f32 %v534, 0.0
    %v536 = vadd.f32 %v527, %v535
    %v537 = vadd.f32 %v528, %v535
    %v538 = vadd.f32 %v529, %v535
    %v539 = vadd.f32 %v530, %v535
    %s541 = sor.u32 256, 16
    %542 = vbcast.lane.b32.xlu0 %v504, %s541
    %v543 = vpop.permute.xlu0 %542
    %s545 = sor.u32 256, 24
    %546 = vbcast.lane.b32.xlu0 %v504, %s545
    %v547 = vpop.permute.xlu0 %546
    %s549 = sor.u32 256, 16
    %550 = vbcast.lane.b32.xlu0 %v515, %s549
    %v551 = vpop.permute.xlu0 %550
    %s553 = sor.u32 256, 24
    %554 = vbcast.lane.b32.xlu0 %v515, %s553
    %v555 = vpop.permute.xlu0 %554
    %v556 = vlaneseq
    %v557 = vshrl.u32 %v556, 7
    %v558 = vsub.s32 0, %v557
    %v559 = vrot.slane %v48, %v558
    %v560 = vmul.f32 %v543, %v559
    %v561 = vmul.f32 %v547, %v559
    %v562 = vmul.f32 %v551, %v559
    %v563 = vmul.f32 %v555, %v559
    %v564 = vadd.f32 %v536, %v560
    %v565 = vadd.f32 %v537, %v561
    %v566 = vadd.f32 %v538, %v562
    %v567 = vadd.f32 %v539, %v563
    %v568 = vlaneseq
    %v569 = vshrl.u32 %v568, 7
    %v570 = vsub.s32 0, %v569
    %v571 = vrot.slane %v41, %v570
    %v572 = vadd.f32 %v564, %v571
    %v573 = vadd.f32 %v565, %v571
    %v574 = vadd.f32 %v566, %v571
    %v575 = vadd.f32 %v567, %v571
    %v576 = vld [vmem:[#allocation4 + $0x100] sm:$0xff]
    %v577 = vld [vmem:[#allocation4 + $0x108] sm:$0xff]
    %v578 = vld [vmem:[#allocation4 + $0x110] sm:$0xff]
    %v579 = vld [vmem:[#allocation4 + $0x118] sm:$0xff]
    %581 = vrot.lane.b32.xlu0 %v425, 96
    %v582 = vpop.permute.xlu0 %581
    %v583 = vsel %vm57, %v582, 0
    %585 = vmatprep.subr.mxu0 0.0
    %586 = vmatpush1.msra.mxu0 0.0
    %587 = vmatprep.subr.mxu0 0.0
    %588 = vmatpush1.msra.mxu0 0.0
    %589 = vmatprep.subr.mxu0 0.0
    %590 = vmatpush1.msra.mxu0 0.0
    %591 = vmatprep.subr.mxu0 0.0
    %592 = vmatpush1.msra.mxu0 0.0
    %593 = vmatprep.subr.mxu0 0.0
    %594 = vmatpush1.msra.mxu0 0.0
    %595 = vmatprep.subr.mxu0 0.0
    %596 = vmatpush1.msra.mxu0 0.0
    %597 = vmatprep.subr.mxu0 0.0
    %598 = vmatpush1.msra.mxu0 0.0
    %599 = vmatprep.subr.mxu0 0.0
    %600 = vmatpush1.msra.mxu0 0.0
    %601 = vmatprep.subr.mxu0 0.0
    %602 = vmatpush1.msra.mxu0 0.0
    %603 = vmatprep.subr.mxu0 0.0
    %604 = vmatpush1.msra.mxu0 0.0
    %605 = vmatprep.subr.mxu0 0.0
    %606 = vmatpush1.msra.mxu0 0.0
    %607 = vmatprep.subr.mxu0 0.0
    %608 = vmatpush1.msra.mxu0 0.0
    %609 = vmatprep.subr.mxu0 0.0
    %610 = vmatpush1.msra.mxu0 %v579
    %611 = vmatprep.subr.mxu0 0.0
    %612 = vmatpush1.msra.mxu0 %v578
    %613 = vmatprep.subr.mxu0 0.0
    %614 = vmatpush1.msra.mxu0 %v577
    %615 = vmatprep.subr.mxu0 0.0
    %616 = vmatpush1.msra.mxu0 %v576
    %617 = vmatprep.subr.mxu0 0.0
    %618 = vmatpush2.msra.mxu0 0.0
    %619 = vmatprep.subr.mxu0 0.0
    %620 = vmatpush2.msra.mxu0 0.0
    %621 = vmatprep.subr.mxu0 0.0
    %622 = vmatpush2.msra.mxu0 0.0
    %623 = vmatprep.subr.mxu0 0.0
    %624 = vmatpush2.msra.mxu0 0.0
    %625 = vmatprep.subr.mxu0 0.0
    %626 = vmatpush2.msra.mxu0 0.0
    %627 = vmatprep.subr.mxu0 0.0
    %628 = vmatpush2.msra.mxu0 0.0
    %629 = vmatprep.subr.mxu0 0.0
    %630 = vmatpush2.msra.mxu0 0.0
    %631 = vmatprep.subr.mxu0 0.0
    %632 = vmatpush2.msra.mxu0 0.0
    %633 = vmatprep.subr.mxu0 0.0
    %634 = vmatpush2.msra.mxu0 0.0
    %635 = vmatprep.subr.mxu0 0.0
    %636 = vmatpush2.msra.mxu0 0.0
    %637 = vmatprep.subr.mxu0 0.0
    %638 = vmatpush2.msra.mxu0 0.0
    %639 = vmatprep.subr.mxu0 0.0
    %640 = vmatpush2.msra.mxu0 0.0
    %641 = vmatprep.subr.mxu0 0.0
    %642 = vmatpush2.msra.mxu0 0.0
    %643 = vmatprep.subr.mxu0 0.0
    %644 = vmatpush2.msra.mxu0 0.0
    %645 = vmatprep.subr.mxu0 0.0
    %646 = vmatpush2.msra.mxu0 0.0
    %647 = vmatprep.subr.mxu0 0.0
    %648 = vmatpush2.msra.mxu0 0.0
    %649 = vmatprep.mubr.f32.mxu0 0.0
    %650 = vmatmul.mubr.f32.gmra.mxu0 %v583
    %v651 = vpop.f32.mrf.mxu0
    %v652 = vadd.f32 0.0, %v651
    %v653 = vpop.f32.mrf.mxu0
    %654 = vdwg.mxu0
    %v657 = vunpack.c.l.s4 1966171168
    %v658 = vunpack.c.0.s8 %v657
    %v659 = vlaneseq
    %v660 = vshrl.u32 %v659, 7
    %v661 = vsub.s32 %v658, %v660
    %v662 = vrot.slane %v652, %v661
    %v663 = vcombine.high %v662, %v662
    %v665 = vunpack.c.l.s4 1966171168
    %v666 = vunpack.c.0.s8 %v665
    %v667 = vlaneseq
    %v668 = vshrl.u32 %v667, 7
    %v669 = vsub.s32 %v666, %v668
    %v670 = vrot.slane %v662, %v669
    %v672 = vunpack.c.l.s4 1966171168
    %v673 = vunpack.c.0.s8 %v672
    %v674 = vlaneseq
    %v675 = vshrl.u32 %v674, 7
    %v676 = vsub.s32 %v673, %v675
    %v677 = vrot.slane %v663, %v676
    %v678 = vlaneseq
    %v679 = vshrl.u32 %v678, 7
    %v680 = vsub.s32 0, %v679
    %v681 = vrot.slane %v670, %v680
    %v682 = vlaneseq
    %v683 = vshrl.u32 %v682, 7
    %v684 = vsub.s32 0, %v683
    %v685 = vrot.slane %v677, %v684
    %v688 = vadd.f32 %v681, %v131
    %v689 = vadd.f32 %v681, %v136
    %v690 = vadd.f32 %v685, %v212
    %v691 = vadd.f32 %v685, %v217
    %v692 = vadd.f32 %v688, %v572
    %v693 = vadd.f32 %v689, %v573
    %v694 = vadd.f32 %v690, %v574
    %v695 = vadd.f32 %v691, %v575
    %v696 = vlaneseq
    %v697 = vshrl.u32 %v696, 7
    %v698 = vsub.s32 0, %v697
    %v699 = vrot.slane %v42, %v698
    %v700 = vadd.f32 %v692, %v699
    %v701 = vadd.f32 %v693, %v699
    %v702 = vadd.f32 %v694, %v699
    %v703 = vadd.f32 %v695, %v699
    %v704 = vtanh.pop %v700
    %v705 = vtanh.pop %v701
    %v706 = vtanh.pop %v702
    %v707 = vtanh.pop %v703
    %v708 = vlaneseq
    %v709 = vshrl.u32 %v708, 7
    %v710 = vsub.s32 0, %v709
    %v711 = vrot.slane %v43, %v710
    %v712 = vmul.f32 %v704, %v711
    %v713 = vmul.f32 %v705, %v711
    %v714 = vmul.f32 %v706, %v711
    %v715 = vmul.f32 %v707, %v711
    %v716 = vsel %vm57, %v712, 0.0
    %717 = vadd.xlane.f32.xlu0 %v716
    %v718 = vpop.xlane.xlu0 %717
    %v719 = vsel %vm57, %v713, 0.0
    %720 = vadd.xlane.f32.xlu0 %v719
    %v721 = vpop.xlane.xlu0 %720
    %v722 = vsel %vm57, %v714, 0.0
    %723 = vadd.xlane.f32.xlu0 %v722
    %v724 = vpop.xlane.xlu0 %723
    %v725 = vsel %vm57, %v715, 0.0
    %726 = vadd.xlane.f32.xlu0 %v725
    %v727 = vpop.xlane.xlu0 %726
    %s729 = vtos %v44
    %v730 = vstv %s729
    %v732 = vadd.f32 %v718, %v730
    %v733 = vadd.f32 %v721, %v730
    %v734 = vadd.f32 %v724, %v730
    %v735 = vadd.f32 %v727, %v730
    %v740 = vlaneseq
    %v741 = vshrl.u32 %v740, 7
    %v742 = vsub.s32 %v221, %v741
    %v743 = vrot.slane %v732, %v742
    %v744 = vadd.s32 %v221, 4294967288
    %v745 = vlaneseq
    %v746 = vshrl.u32 %v745, 7
    %v747 = vsub.s32 %v744, %v746
    %v748 = vrot.slane %v733, %v747
    %vm749 = vcmask 130112
    %v750 = vsel %vm749, %v748, %v743
    %v751 = vlaneseq
    %v752 = vshrl.u32 %v751, 7
    %v753 = vsub.s32 %v221, %v752
    %v754 = vrot.slane %v734, %v753
    %v755 = vlaneseq
    %v756 = vshrl.u32 %v755, 7
    %v757 = vsub.s32 %v744, %v756
    %v758 = vrot.slane %v735, %v757
    %v759 = vsel %vm749, %v758, %v754
    %vm760 = vcmask 1041409
    %v761 = vsel %vm760, %v759, %v750
    %vm763 = vcmask 123904
    %v764 = vsel %vm763, %v761, -inf
    %765 = vmax.xlane.f32.xlu0 %v764
    %v766 = vpop.xlane.xlu0 %765
    %v768 = vlaneseq
    %v769 = vshrl.u32 %v768, 7
    %v770 = vsub.s32 0, %v769
    %v771 = vrot.slane %v766, %v770
    %v772 = vlaneseq
    %v773 = vshrl.u32 %v772, 7
    %v774 = vsub.s32 1, %v773
    %v775 = vrot.slane %v766, %v774
    %v778 = vsub.f32 %v732, %v771
    %v779 = vsub.f32 %v733, %v771
    %v780 = vsub.f32 %v734, %v775
    %v781 = vsub.f32 %v735, %v775
    %v782 = vmul.f32 %v778, 1.442695
    %v783 = vpow.pop %v782
    %v784 = vmul.f32 %v779, 1.442695
    %v785 = vpow.pop %v784
    %v786 = vmul.f32 %v780, 1.442695
    %v787 = vpow.pop %v786
    %v788 = vmul.f32 %v781, 1.442695
    %v789 = vpow.pop %v788
    %794 = vset.pattern.permute.xlu0 0
    %795 = vperm.xlu0 %794, %v783
    %v796 = vpop.permute.xlu0 %795
    %797 = vset.pattern.permute.xlu0 0
    %798 = vperm.xlu0 %797, %v785
    %v799 = vpop.permute.xlu0 %798
    %800 = vset.pattern.permute.xlu0 0
    %801 = vperm.xlu0 %800, %v787
    %v802 = vpop.permute.xlu0 %801
    %803 = vset.pattern.permute.xlu0 0
    %804 = vperm.xlu0 %803, %v789
    %v805 = vpop.permute.xlu0 %804
    %v806 = vlaneseq
    %v807 = vshrl.u32 %v806, 7
    %v808 = vsub.s32 %v221, %v807
    %v809 = vrot.slane %v796, %v808
    %v810 = vlaneseq
    %v811 = vshrl.u32 %v810, 7
    %v812 = vsub.s32 %v744, %v811
    %v813 = vrot.slane %v799, %v812
    %v814 = vsel %vm749, %v813, %v809
    %v815 = vlaneseq
    %v816 = vshrl.u32 %v815, 7
    %v817 = vsub.s32 %v221, %v816
    %v818 = vrot.slane %v802, %v817
    %v819 = vlaneseq
    %v820 = vshrl.u32 %v819, 7
    %v821 = vsub.s32 %v744, %v820
    %v822 = vrot.slane %v805, %v821
    %v823 = vsel %vm749, %v822, %v818
    %v824 = vsel %vm760, %v823, %v814
    %v826 = vsel %vm763, %v824, 0.0
    %827 = vadd.xlane.f32.xlu0 %v826
    %v828 = vpop.xlane.xlu0 %827
    %v830 = vlaneseq
    %v831 = vshrl.u32 %v830, 7
    %v832 = vsub.s32 0, %v831
    %v833 = vrot.slane %v828, %v832
    %v834 = vlaneseq
    %v835 = vshrl.u32 %v834, 7
    %v836 = vsub.s32 1, %v835
    %v837 = vrot.slane %v828, %v836
    %v840 = vrcp.pop %v833
    %v841 = vmul.f32 %v783, %v840
    %v842 = vmul.f32 %v785, %v840
    %v843 = vrcp.pop %v837
    %v844 = vmul.f32 %v787, %v843
    %v845 = vmul.f32 %v789, %v843
    %848 = vset.pattern.permute.xlu0 0
    %849 = vperm.xlu0 %848, %v841
    %v850 = vpop.permute.xlu0 %849
    %851 = vset.pattern.permute.xlu0 0
    %852 = vperm.xlu0 %851, %v842
    %v853 = vpop.permute.xlu0 %852
    %v854 = vlaneseq
    %v855 = vshrl.u32 %v854, 7
    %v856 = vsub.s32 %v221, %v855
    %v857 = vrot.slane %v850, %v856
    %v858 = vlaneseq
    %v859 = vshrl.u32 %v858, 7
    %v860 = vsub.s32 %v744, %v859
    %v861 = vrot.slane %v853, %v860
    %v862 = vsel %vm749, %v861, %v857
    %v863 = vsel %vm428, %v862, 0
    %865 = vmatprep.subr.mxu0 0.0
    %866 = vmatpush1.msra.mxu0 0.0
    %867 = vmatprep.subr.mxu0 0.0
    %868 = vmatpush1.msra.mxu0 0.0
    %869 = vmatprep.subr.mxu0 0.0
    %870 = vmatpush1.msra.mxu0 0.0
    %871 = vmatprep.subr.mxu0 0.0
    %872 = vmatpush1.msra.mxu0 0.0
    %873 = vmatprep.subr.mxu0 0.0
    %874 = vmatpush1.msra.mxu0 0.0
    %875 = vmatprep.subr.mxu0 0.0
    %876 = vmatpush1.msra.mxu0 0.0
    %877 = vmatprep.subr.mxu0 0.0
    %878 = vmatpush1.msra.mxu0 0.0
    %879 = vmatprep.subr.mxu0 0.0
    %880 = vmatpush1.msra.mxu0 0.0
    %881 = vmatprep.subr.mxu0 0.0
    %882 = vmatpush1.msra.mxu0 0.0
    %883 = vmatprep.subr.mxu0 0.0
    %884 = vmatpush1.msra.mxu0 0.0
    %885 = vmatprep.subr.mxu0 0.0
    %886 = vmatpush1.msra.mxu0 0.0
    %887 = vmatprep.subr.mxu0 0.0
    %888 = vmatpush1.msra.mxu0 0.0
    %889 = vmatprep.subr.mxu0 0.0
    %890 = vmatpush1.msra.mxu0 0.0
    %891 = vmatprep.subr.mxu0 0.0
    %892 = vmatpush1.msra.mxu0 0.0
    %893 = vmatprep.subr.mxu0 0.0
    %894 = vmatpush1.msra.mxu0 %v50
    %895 = vmatprep.subr.mxu0 0.0
    %896 = vmatpush1.msra.mxu0 %v49
    %897 = vmatprep.subr.mxu0 0.0
    %898 = vmatpush2.msra.mxu0 0.0
    %899 = vmatprep.subr.mxu0 0.0
    %900 = vmatpush2.msra.mxu0 0.0
    %901 = vmatprep.subr.mxu0 0.0
    %902 = vmatpush2.msra.mxu0 0.0
    %903 = vmatprep.subr.mxu0 0.0
    %904 = vmatpush2.msra.mxu0 0.0
    %905 = vmatprep.subr.mxu0 0.0
    %906 = vmatpush2.msra.mxu0 0.0
    %907 = vmatprep.subr.mxu0 0.0
    %908 = vmatpush2.msra.mxu0 0.0
    %909 = vmatprep.subr.mxu0 0.0
    %910 = vmatpush2.msra.mxu0 0.0
    %911 = vmatprep.subr.mxu0 0.0
    %912 = vmatpush2.msra.mxu0 0.0
    %913 = vmatprep.subr.mxu0 0.0
    %914 = vmatpush2.msra.mxu0 0.0
    %915 = vmatprep.subr.mxu0 0.0
    %916 = vmatpush2.msra.mxu0 0.0
    %917 = vmatprep.subr.mxu0 0.0
    %918 = vmatpush2.msra.mxu0 0.0
    %919 = vmatprep.subr.mxu0 0.0
    %920 = vmatpush2.msra.mxu0 0.0
    %921 = vmatprep.subr.mxu0 0.0
    %922 = vmatpush2.msra.mxu0 0.0
    %923 = vmatprep.subr.mxu0 0.0
    %924 = vmatpush2.msra.mxu0 0.0
    %925 = vmatprep.subr.mxu0 0.0
    %926 = vmatpush2.msra.mxu0 0.0
    %927 = vmatprep.subr.mxu0 0.0
    %928 = vmatpush2.msra.mxu0 0.0
    %929 = vmatprep.mubr.f32.mxu0 0.0
    %930 = vmatmul.mubr.f32.gmra.mxu0 %v863
    %v931 = vpop.f32.mrf.mxu0
    %v932 = vadd.f32 0.0, %v931
    %v933 = vpop.f32.mrf.mxu0
    %934 = vdwg.mxu0
    %937 = vset.pattern.permute.xlu0 0
    %938 = vperm.xlu0 %937, %v844
    %v939 = vpop.permute.xlu0 %938
    %940 = vset.pattern.permute.xlu0 0
    %941 = vperm.xlu0 %940, %v845
    %v942 = vpop.permute.xlu0 %941
    %v943 = vlaneseq
    %v944 = vshrl.u32 %v943, 7
    %v945 = vsub.s32 %v221, %v944
    %v946 = vrot.slane %v939, %v945
    %v947 = vlaneseq
    %v948 = vshrl.u32 %v947, 7
    %v949 = vsub.s32 %v744, %v948
    %v950 = vrot.slane %v942, %v949
    %v951 = vsel %vm749, %v950, %v946
    %v952 = vsel %vm428, %v951, 0
    %954 = vmatprep.subr.mxu0 0.0
    %955 = vmatpush1.msra.mxu0 0.0
    %956 = vmatprep.subr.mxu0 0.0
    %957 = vmatpush1.msra.mxu0 0.0
    %958 = vmatprep.subr.mxu0 0.0
    %959 = vmatpush1.msra.mxu0 0.0
    %960 = vmatprep.subr.mxu0 0.0
    %961 = vmatpush1.msra.mxu0 0.0
    %962 = vmatprep.subr.mxu0 0.0
    %963 = vmatpush1.msra.mxu0 0.0
    %964 = vmatprep.subr.mxu0 0.0
    %965 = vmatpush1.msra.mxu0 0.0
    %966 = vmatprep.subr.mxu0 0.0
    %967 = vmatpush1.msra.mxu0 0.0
    %968 = vmatprep.subr.mxu0 0.0
    %969 = vmatpush1.msra.mxu0 0.0
    %970 = vmatprep.subr.mxu0 0.0
    %971 = vmatpush1.msra.mxu0 0.0
    %972 = vmatprep.subr.mxu0 0.0
    %973 = vmatpush1.msra.mxu0 0.0
    %974 = vmatprep.subr.mxu0 0.0
    %975 = vmatpush1.msra.mxu0 0.0
    %976 = vmatprep.subr.mxu0 0.0
    %977 = vmatpush1.msra.mxu0 0.0
    %978 = vmatprep.subr.mxu0 0.0
    %979 = vmatpush1.msra.mxu0 0.0
    %980 = vmatprep.subr.mxu0 0.0
    %981 = vmatpush1.msra.mxu0 0.0
    %982 = vmatprep.subr.mxu0 0.0
    %983 = vmatpush1.msra.mxu0 %v52
    %984 = vmatprep.subr.mxu0 0.0
    %985 = vmatpush1.msra.mxu0 %v51
    %986 = vmatprep.subr.mxu0 0.0
    %987 = vmatpush2.msra.mxu0 0.0
    %988 = vmatprep.subr.mxu0 0.0
    %989 = vmatpush2.msra.mxu0 0.0
    %990 = vmatprep.subr.mxu0 0.0
    %991 = vmatpush2.msra.mxu0 0.0
    %992 = vmatprep.subr.mxu0 0.0
    %993 = vmatpush2.msra.mxu0 0.0
    %994 = vmatprep.subr.mxu0 0.0
    %995 = vmatpush2.msra.mxu0 0.0
    %996 = vmatprep.subr.mxu0 0.0
    %997 = vmatpush2.msra.mxu0 0.0
    %998 = vmatprep.subr.mxu0 0.0
    %999 = vmatpush2.msra.mxu0 0.0
    %1000 = vmatprep.subr.mxu0 0.0
    %1001 = vmatpush2.msra.mxu0 0.0
    %1002 = vmatprep.subr.mxu0 0.0
    %1003 = vmatpush2.msra.mxu0 0.0
    %1004 = vmatprep.subr.mxu0 0.0
    %1005 = vmatpush2.msra.mxu0 0.0
    %1006 = vmatprep.subr.mxu0 0.0
    %1007 = vmatpush2.msra.mxu0 0.0
    %1008 = vmatprep.subr.mxu0 0.0
    %1009 = vmatpush2.msra.mxu0 0.0
    %1010 = vmatprep.subr.mxu0 0.0
    %1011 = vmatpush2.msra.mxu0 0.0
    %1012 = vmatprep.subr.mxu0 0.0
    %1013 = vmatpush2.msra.mxu0 0.0
    %1014 = vmatprep.subr.mxu0 0.0
    %1015 = vmatpush2.msra.mxu0 0.0
    %1016 = vmatprep.subr.mxu0 0.0
    %1017 = vmatpush2.msra.mxu0 0.0
    %1018 = vmatprep.mubr.f32.mxu0 0.0
    %1019 = vmatmul.mubr.f32.gmra.mxu0 %v952
    %v1020 = vpop.f32.mrf.mxu0
    %v1021 = vadd.f32 0.0, %v1020
    %v1022 = vpop.f32.mrf.mxu0
    %1023 = vdwg.mxu0
    %v1024 = vld [vmem:[#allocation4 + $0xc0] sm:$0xff]
    %v1025 = vld [vmem:[#allocation4 + $0xc8] sm:$0xff]
    %v1026 = vld [vmem:[#allocation4 + $0xd0] sm:$0xff]
    %v1027 = vld [vmem:[#allocation4 + $0xd8] sm:$0xff]
    %v1028 = vld [vmem:[#allocation4 + $0xe0] sm:$0xff]
    %v1029 = vld [vmem:[#allocation4 + $0xe8] sm:$0xff]
    %v1030 = vld [vmem:[#allocation4 + $0xf0] sm:$0xff]
    %v1031 = vld [vmem:[#allocation4 + $0xf8] sm:$0xff]
    %v1034 = vrot.slane %v1021, 7
    %v1035 = vsel %vm760, %v1034, %v932
    %v1036 = vsel %vm57, %v1035, 0
    %1038 = vmatprep.subr.mxu0 0.0
    %1039 = vmatpush1.msra.mxu0 0.0
    %1040 = vmatprep.subr.mxu0 0.0
    %1041 = vmatpush1.msra.mxu0 0.0
    %1042 = vmatprep.subr.mxu0 0.0
    %1043 = vmatpush1.msra.mxu0 0.0
    %1044 = vmatprep.subr.mxu0 0.0
    %1045 = vmatpush1.msra.mxu0 0.0
    %1046 = vmatprep.subr.mxu0 0.0
    %1047 = vmatpush1.msra.mxu0 0.0
    %1048 = vmatprep.subr.mxu0 0.0
    %1049 = vmatpush1.msra.mxu0 0.0
    %1050 = vmatprep.subr.mxu0 0.0
    %1051 = vmatpush1.msra.mxu0 0.0
    %1052 = vmatprep.subr.mxu0 0.0
    %1053 = vmatpush1.msra.mxu0 0.0
    %1054 = vmatprep.subr.mxu0 0.0
    %1055 = vmatpush1.msra.mxu0 0.0
    %1056 = vmatprep.subr.mxu0 0.0
    %1057 = vmatpush1.msra.mxu0 0.0
    %1058 = vmatprep.subr.mxu0 0.0
    %1059 = vmatpush1.msra.mxu0 0.0
    %1060 = vmatprep.subr.mxu0 0.0
    %1061 = vmatpush1.msra.mxu0 0.0
    %1062 = vmatprep.subr.mxu0 0.0
    %1063 = vmatpush1.msra.mxu0 %v1031
    %1064 = vmatprep.subr.mxu0 0.0
    %1065 = vmatpush1.msra.mxu0 %v1030
    %1066 = vmatprep.subr.mxu0 0.0
    %1067 = vmatpush1.msra.mxu0 %v1029
    %1068 = vmatprep.subr.mxu0 0.0
    %1069 = vmatpush1.msra.mxu0 %v1028
    %1070 = vmatprep.subr.mxu0 0.0
    %1071 = vmatpush2.msra.mxu0 0.0
    %1072 = vmatprep.subr.mxu0 0.0
    %1073 = vmatpush2.msra.mxu0 0.0
    %1074 = vmatprep.subr.mxu0 0.0
    %1075 = vmatpush2.msra.mxu0 0.0
    %1076 = vmatprep.subr.mxu0 0.0
    %1077 = vmatpush2.msra.mxu0 0.0
    %1078 = vmatprep.subr.mxu0 0.0
    %1079 = vmatpush2.msra.mxu0 0.0
    %1080 = vmatprep.subr.mxu0 0.0
    %1081 = vmatpush2.msra.mxu0 0.0
    %1082 = vmatprep.subr.mxu0 0.0
    %1083 = vmatpush2.msra.mxu0 0.0
    %1084 = vmatprep.subr.mxu0 0.0
    %1085 = vmatpush2.msra.mxu0 0.0
    %1086 = vmatprep.subr.mxu0 0.0
    %1087 = vmatpush2.msra.mxu0 0.0
    %1088 = vmatprep.subr.mxu0 0.0
    %1089 = vmatpush2.msra.mxu0 0.0
    %1090 = vmatprep.subr.mxu0 0.0
    %1091 = vmatpush2.msra.mxu0 0.0
    %1092 = vmatprep.subr.mxu0 0.0
    %1093 = vmatpush2.msra.mxu0 0.0
    %1094 = vmatprep.subr.mxu0 0.0
    %1095 = vmatpush2.msra.mxu0 0.0
    %1096 = vmatprep.subr.mxu0 0.0
    %1097 = vmatpush2.msra.mxu0 0.0
    %1098 = vmatprep.subr.mxu0 0.0
    %1099 = vmatpush2.msra.mxu0 0.0
    %1100 = vmatprep.subr.mxu0 0.0
    %1101 = vmatpush2.msra.mxu0 0.0
    %1102 = vmatprep.mubr.f32.mxu0 0.0
    %1103 = vmatmul.mubr.f32.gmra.mxu0 %v1036
    %v1104 = vpop.f32.mrf.mxu0
    %v1105 = vadd.f32 0.0, %v1104
    %v1106 = vpop.f32.mrf.mxu0
    %1107 = vdwg.mxu0
    %1108 = vmatprep.subr.mxu0 0.0
    %1109 = vmatpush1.msra.mxu0 0.0
    %1110 = vmatprep.subr.mxu0 0.0
    %1111 = vmatpush1.msra.mxu0 0.0
    %1112 = vmatprep.subr.mxu0 0.0
    %1113 = vmatpush1.msra.mxu0 0.0
    %1114 = vmatprep.subr.mxu0 0.0
    %1115 = vmatpush1.msra.mxu0 0.0
    %1116 = vmatprep.subr.mxu0 0.0
    %1117 = vmatpush1.msra.mxu0 0.0
    %1118 = vmatprep.subr.mxu0 0.0
    %1119 = vmatpush1.msra.mxu0 0.0
    %1120 = vmatprep.subr.mxu0 0.0
    %1121 = vmatpush1.msra.mxu0 0.0
    %1122 = vmatprep.subr.mxu0 0.0
    %1123 = vmatpush1.msra.mxu0 0.0
    %1124 = vmatprep.subr.mxu0 0.0
    %1125 = vmatpush1.msra.mxu0 0.0
    %1126 = vmatprep.subr.mxu0 0.0
    %1127 = vmatpush1.msra.mxu0 0.0
    %1128 = vmatprep.subr.mxu0 0.0
    %1129 = vmatpush1.msra.mxu0 0.0
    %1130 = vmatprep.subr.mxu0 0.0
    %1131 = vmatpush1.msra.mxu0 0.0
    %1132 = vmatprep.subr.mxu0 0.0
    %1133 = vmatpush1.msra.mxu0 %v1027
    %1134 = vmatprep.subr.mxu0 0.0
    %1135 = vmatpush1.msra.mxu0 %v1026
    %1136 = vmatprep.subr.mxu0 0.0
    %1137 = vmatpush1.msra.mxu0 %v1025
    %1138 = vmatprep.subr.mxu0 0.0
    %1139 = vmatpush1.msra.mxu0 %v1024
    %1140 = vmatprep.subr.mxu0 0.0
    %1141 = vmatpush2.msra.mxu0 0.0
    %1142 = vmatprep.subr.mxu0 0.0
    %1143 = vmatpush2.msra.mxu0 0.0
    %1144 = vmatprep.subr.mxu0 0.0
    %1145 = vmatpush2.msra.mxu0 0.0
    %1146 = vmatprep.subr.mxu0 0.0
    %1147 = vmatpush2.msra.mxu0 0.0
    %1148 = vmatprep.subr.mxu0 0.0
    %1149 = vmatpush2.msra.mxu0 0.0
    %1150 = vmatprep.subr.mxu0 0.0
    %1151 = vmatpush2.msra.mxu0 0.0
    %1152 = vmatprep.subr.mxu0 0.0
    %1153 = vmatpush2.msra.mxu0 0.0
    %1154 = vmatprep.subr.mxu0 0.0
    %1155 = vmatpush2.msra.mxu0 0.0
    %1156 = vmatprep.subr.mxu0 0.0
    %1157 = vmatpush2.msra.mxu0 0.0
    %1158 = vmatprep.subr.mxu0 0.0
    %1159 = vmatpush2.msra.mxu0 0.0
    %1160 = vmatprep.subr.mxu0 0.0
    %1161 = vmatpush2.msra.mxu0 0.0
    %1162 = vmatprep.subr.mxu0 0.0
    %1163 = vmatpush2.msra.mxu0 0.0
    %1164 = vmatprep.subr.mxu0 0.0
    %1165 = vmatpush2.msra.mxu0 0.0
    %1166 = vmatprep.subr.mxu0 0.0
    %1167 = vmatpush2.msra.mxu0 0.0
    %1168 = vmatprep.subr.mxu0 0.0
    %1169 = vmatpush2.msra.mxu0 0.0
    %1170 = vmatprep.subr.mxu0 0.0
    %1171 = vmatpush2.msra.mxu0 0.0
    %1172 = vmatprep.mubr.f32.mxu0 0.0
    %1173 = vmatmul.mubr.f32.gmra.mxu0 %v583
    %v1174 = vpop.f32.mrf.mxu0
    %v1175 = vadd.f32 %v1105, %v1174
    %v1176 = vpop.f32.mrf.mxu0
    %1177 = vdwg.mxu0
    %v1178 = vlaneseq
    %v1179 = vshrl.u32 %v1178, 7
    %v1180 = vsub.s32 0, %v1179
    %v1181 = vrot.slane %v45, %v1180
    %v1182 = vadd.f32 %v1175, %v1181
    %vm1183 = vcmask 189440
    %v1184 = vsel %vm1183, %v1182, -inf
    %1185 = vmax.xlane.f32.xlu0 %v1184
    %v1186 = vpop.xlane.xlu0 %1185
    %v1187 = vsub.f32 %v1182, %v1186
    %v1188 = vmul.f32 %v1187, 1.442695
    %v1189 = vpow.pop %v1188
    %v1190 = vsel %vm1183, %v1189, 0.0
    %1191 = vadd.xlane.f32.xlu0 %v1190
    %v1192 = vpop.xlane.xlu0 %1191
    %v1193 = vlog2.pop %v1192
    %v1194 = vmul.f32 %v1193, 0.6931472
    %v1195 = vadd.f32 %v1194, %v1186
    %v1196 = vsub.f32 %v1182, %v1195
    %v1199 = vunpack.c.l.s4 1966171168
    %v1200 = vunpack.c.0.s8 %v1199
    %v1201 = vlaneseq
    %v1202 = vshrl.u32 %v1201, 7
    %v1203 = vsub.s32 %v1200, %v1202
    %v1204 = vrot.slane %v1196, %v1203
    %v1205 = vcombine.high %v1204, %v1204
    %v1207 = vunpack.c.l.s4 1966171168
    %v1208 = vunpack.c.0.s8 %v1207
    %v1209 = vlaneseq
    %v1210 = vshrl.u32 %v1209, 7
    %v1211 = vsub.s32 %v1208, %v1210
    %v1212 = vrot.slane %v1204, %v1211
    %v1214 = vunpack.c.l.s4 1966171168
    %v1215 = vunpack.c.0.s8 %v1214
    %v1216 = vlaneseq
    %v1217 = vshrl.u32 %v1216, 7
    %v1218 = vsub.s32 %v1215, %v1217
    %v1219 = vrot.slane %v1205, %v1218
    %vm1222 = vcmask 188416
    %1223 = vst.msk [vmem:[%s2] sm:$0x1] %vm1222, %v1212
    %1224 = vst.msk [vmem:[%s2 + $0x8] sm:$0x1] %vm1222, %v1219
    %v1225 = vsel %vm1183, %v1196, -inf
    %1226 = vmax.xlane.f32.xlu0 %v1225
    %v1227 = vpop.xlane.xlu0 %1226
    %vm1228 = vcmp.eq.f32.partialorder %v1196, %v1227
    %v1229 = vsel %vm1228, %v221, 24
    %v1230 = vsel %vm1183, %v1229, 2147483647
    %v1231 = vand.u32 %v1230, 65535
    %v1232 = vshra.s32 %v1230, 16
    %v1233 = vcvt.s32.f32 %v1231
    %v1234 = vcvt.s32.f32 %v1232
    %1235 = vmin.xlane.f32.xlu0 %v1234
    %v1236 = vpop.xlane.xlu0 %1235
    %vm1237 = vcmp.eq.f32.partialorder %v1234, %v1236
    %v1238 = vsel %vm1237, %v1233, inf
    %1239 = vmin.xlane.f32.xlu0 %v1238
    %v1240 = vpop.xlane.xlu0 %1239
    %v1241 = vcvt.f32.s32 %v1240
    %v1242 = vcvt.f32.s32 %v1236
    %v1243 = vshll.u32 %v1242, 16
    %v1244 = vadd.s32 %v1243, %v1241
    %vm1245 = vcmp.eq.s32.totalorder %v221, %v1244
    %v1246 = vsel %vm1245, 1, 0
    %v1247 = vcvt.s32.f32 %v1246
    %v1248 = vld [vmem:[#allocation4] sm:$0xff]
    %v1249 = vld [vmem:[#allocation4 + $0x8] sm:$0xff]
    %v1250 = vld [vmem:[#allocation4 + $0x10] sm:$0xff]
    %v1251 = vld [vmem:[#allocation4 + $0x18] sm:$0xff]
    %v1252 = vld [vmem:[#allocation4 + $0x20] sm:$0xff]
    %v1253 = vld [vmem:[#allocation4 + $0x28] sm:$0xff]
    %v1254 = vld [vmem:[#allocation4 + $0x30] sm:$0xff]
    %v1255 = vld [vmem:[#allocation4 + $0x38] sm:$0xff]
    %v1256 = vld [vmem:[#allocation4 + $0x40] sm:$0xff]
    %v1257 = vld [vmem:[#allocation4 + $0x48] sm:$0xff]
    %v1258 = vld [vmem:[#allocation4 + $0x50] sm:$0xff]
    %v1259 = vld [vmem:[#allocation4 + $0x58] sm:$0xff]
    %v1260 = vld [vmem:[#allocation4 + $0x60] sm:$0xff]
    %v1261 = vld [vmem:[#allocation4 + $0x68] sm:$0xff]
    %v1262 = vld [vmem:[#allocation4 + $0x70] sm:$0xff]
    %v1263 = vld [vmem:[#allocation4 + $0x78] sm:$0xff]
    %v1264 = vld [vmem:[#allocation4 + $0x80] sm:$0xff]
    %v1265 = vld [vmem:[#allocation4 + $0x88] sm:$0xff]
    %v1266 = vld [vmem:[#allocation4 + $0x90] sm:$0xff]
    %v1267 = vld [vmem:[#allocation4 + $0x98] sm:$0xff]
    %1268 = vmatprep.subr.mxu0 0.0
    %1269 = vmatpush1.msra.mxu0 %v1263
    %1270 = vmatprep.subr.mxu0 0.0
    %1271 = vmatpush1.msra.mxu0 %v1262
    %1272 = vmatprep.subr.mxu0 0.0
    %1273 = vmatpush1.msra.mxu0 %v1261
    %1274 = vmatprep.subr.mxu0 0.0
    %1275 = vmatpush1.msra.mxu0 %v1260
    %1276 = vmatprep.subr.mxu0 0.0
    %1277 = vmatpush1.msra.mxu0 %v1259
    %1278 = vmatprep.subr.mxu0 0.0
    %1279 = vmatpush1.msra.mxu0 %v1258
    %1280 = vmatprep.subr.mxu0 0.0
    %1281 = vmatpush1.msra.mxu0 %v1257
    %1282 = vmatprep.subr.mxu0 0.0
    %1283 = vmatpush1.msra.mxu0 %v1256
    %1284 = vmatprep.subr.mxu0 0.0
    %1285 = vmatpush1.msra.mxu0 %v1255
    %1286 = vmatprep.subr.mxu0 0.0
    %1287 = vmatpush1.msra.mxu0 %v1254
    %1288 = vmatprep.subr.mxu0 0.0
    %1289 = vmatpush1.msra.mxu0 %v1253
    %1290 = vmatprep.subr.mxu0 0.0
    %1291 = vmatpush1.msra.mxu0 %v1252
    %1292 = vmatprep.subr.mxu0 0.0
    %1293 = vmatpush1.msra.mxu0 %v1251
    %1294 = vmatprep.subr.mxu0 0.0
    %1295 = vmatpush1.msra.mxu0 %v1250
    %1296 = vmatprep.subr.mxu0 0.0
    %1297 = vmatpush1.msra.mxu0 %v1249
    %1298 = vmatprep.subr.mxu0 0.0
    %1299 = vmatpush1.msra.mxu0 %v1248
    %1300 = vmatprep.subr.mxu0 0.0
    %1301 = vmatpush2.msra.mxu0 0.0
    %1302 = vmatprep.subr.mxu0 0.0
    %1303 = vmatpush2.msra.mxu0 0.0
    %1304 = vmatprep.subr.mxu0 0.0
    %1305 = vmatpush2.msra.mxu0 0.0
    %1306 = vmatprep.subr.mxu0 0.0
    %1307 = vmatpush2.msra.mxu0 0.0
    %1308 = vmatprep.subr.mxu0 0.0
    %1309 = vmatpush2.msra.mxu0 0.0
    %1310 = vmatprep.subr.mxu0 0.0
    %1311 = vmatpush2.msra.mxu0 0.0
    %1312 = vmatprep.subr.mxu0 0.0
    %1313 = vmatpush2.msra.mxu0 0.0
    %1314 = vmatprep.subr.mxu0 0.0
    %1315 = vmatpush2.msra.mxu0 0.0
    %1316 = vmatprep.subr.mxu0 0.0
    %1317 = vmatpush2.msra.mxu0 0.0
    %1318 = vmatprep.subr.mxu0 0.0
    %1319 = vmatpush2.msra.mxu0 0.0
    %1320 = vmatprep.subr.mxu0 0.0
    %1321 = vmatpush2.msra.mxu0 0.0
    %1322 = vmatprep.subr.mxu0 0.0
    %1323 = vmatpush2.msra.mxu0 0.0
    %1324 = vmatprep.subr.mxu0 0.0
    %1325 = vmatpush2.msra.mxu0 %v1267
    %1326 = vmatprep.subr.mxu0 0.0
    %1327 = vmatpush2.msra.mxu0 %v1266
    %1328 = vmatprep.subr.mxu0 0.0
    %1329 = vmatpush2.msra.mxu0 %v1265
    %1330 = vmatprep.subr.mxu0 0.0
    %1331 = vmatpush2.msra.mxu0 %v1264
    %1332 = vmatprep.mubr.f32.mxu0 %v1036
    %1333 = vmatmul.mubr.f32.gmra.mxu0 %v1247
    %v1334 = vpop.f32.mrf.mxu0
    %v1335 = vadd.f32 %v248, %v1334
    %v1336 = vpop.f32.mrf.mxu0
    %1337 = vdwg.mxu0
    %v1338 = vld [vmem:[#allocation4 + $0xa0] sm:$0xff]
    %v1339 = vld [vmem:[#allocation4 + $0xa8] sm:$0xff]
    %v1340 = vld [vmem:[#allocation4 + $0xb0] sm:$0xff]
    %v1341 = vld [vmem:[#allocation4 + $0xb8] sm:$0xff]
    %1342 = vmatprep.subr.mxu0 0.0
    %1343 = vmatpush1.msra.mxu0 0.0
    %1344 = vmatprep.subr.mxu0 0.0
    %1345 = vmatpush1.msra.mxu0 0.0
    %1346 = vmatprep.subr.mxu0 0.0
    %1347 = vmatpush1.msra.mxu0 0.0
    %1348 = vmatprep.subr.mxu0 0.0
    %1349 = vmatpush1.msra.mxu0 0.0
    %1350 = vmatprep.subr.mxu0 0.0
    %1351 = vmatpush1.msra.mxu0 0.0
    %1352 = vmatprep.subr.mxu0 0.0
    %1353 = vmatpush1.msra.mxu0 0.0
    %1354 = vmatprep.subr.mxu0 0.0
    %1355 = vmatpush1.msra.mxu0 0.0
    %1356 = vmatprep.subr.mxu0 0.0
    %1357 = vmatpush1.msra.mxu0 0.0
    %1358 = vmatprep.subr.mxu0 0.0
    %1359 = vmatpush1.msra.mxu0 0.0
    %1360 = vmatprep.subr.mxu0 0.0
    %1361 = vmatpush1.msra.mxu0 0.0
    %1362 = vmatprep.subr.mxu0 0.0
    %1363 = vmatpush1.msra.mxu0 0.0
    %1364 = vmatprep.subr.mxu0 0.0
    %1365 = vmatpush1.msra.mxu0 0.0
    %1366 = vmatprep.subr.mxu0 0.0
    %1367 = vmatpush1.msra.mxu0 %v1341
    %1368 = vmatprep.subr.mxu0 0.0
    %1369 = vmatpush1.msra.mxu0 %v1340
    %1370 = vmatprep.subr.mxu0 0.0
    %1371 = vmatpush1.msra.mxu0 %v1339
    %1372 = vmatprep.subr.mxu0 0.0
    %1373 = vmatpush1.msra.mxu0 %v1338
    %1374 = vmatprep.subr.mxu0 0.0
    %1375 = vmatpush2.msra.mxu0 0.0
    %1376 = vmatprep.subr.mxu0 0.0
    %1377 = vmatpush2.msra.mxu0 0.0
    %1378 = vmatprep.subr.mxu0 0.0
    %1379 = vmatpush2.msra.mxu0 0.0
    %1380 = vmatprep.subr.mxu0 0.0
    %1381 = vmatpush2.msra.mxu0 0.0
    %1382 = vmatprep.subr.mxu0 0.0
    %1383 = vmatpush2.msra.mxu0 0.0
    %1384 = vmatprep.subr.mxu0 0.0
    %1385 = vmatpush2.msra.mxu0 0.0
    %1386 = vmatprep.subr.mxu0 0.0
    %1387 = vmatpush2.msra.mxu0 0.0
    %1388 = vmatprep.subr.mxu0 0.0
    %1389 = vmatpush2.msra.mxu0 0.0
    %1390 = vmatprep.subr.mxu0 0.0
    %1391 = vmatpush2.msra.mxu0 0.0
    %1392 = vmatprep.subr.mxu0 0.0
    %1393 = vmatpush2.msra.mxu0 0.0
    %1394 = vmatprep.subr.mxu0 0.0
    %1395 = vmatpush2.msra.mxu0 0.0
    %1396 = vmatprep.subr.mxu0 0.0
    %1397 = vmatpush2.msra.mxu0 0.0
    %1398 = vmatprep.subr.mxu0 0.0
    %1399 = vmatpush2.msra.mxu0 0.0
    %1400 = vmatprep.subr.mxu0 0.0
    %1401 = vmatpush2.msra.mxu0 0.0
    %1402 = vmatprep.subr.mxu0 0.0
    %1403 = vmatpush2.msra.mxu0 0.0
    %1404 = vmatprep.subr.mxu0 0.0
    %1405 = vmatpush2.msra.mxu0 0.0
    %1406 = vmatprep.mubr.f32.mxu0 0.0
    %1407 = vmatmul.mubr.f32.gmra.mxu0 %v583
    %v1408 = vpop.f32.mrf.mxu0
    %v1409 = vadd.f32 %v329, %v1408
    %v1410 = vpop.f32.mrf.mxu0
    %1411 = vdwg.mxu0
    %v1412 = vadd.f32 %v1335, %v1409
    %v1413 = vxor.u32 %v1412, 2147483648
    %v1414 = vmul.f32 %v1413, 1.442695
    %v1415 = vpow.pop %v1414
    %v1416 = vadd.f32 %v1415, 1.0
    %v1417 = vrcp.pop %v1416
    %v1418 = vmul.f32 1.0, %v1417
    %1420 = vrot.lane.b32.xlu0 %v1409, 64
    %v1421 = vpop.permute.xlu0 %1420
    %v1423 = vmul.f32 %v1418, %v1421
    %1425 = vrot.lane.b32.xlu0 %v1423, 64
    %v1426 = vpop.permute.xlu0 %1425
    %v1428 = vadd.f32 %v1335, %v1426
    %v1429 = vtanh.pop %v1428
    %v1430 = vsub.f32 1.0, %v1418
    %1432 = vrot.lane.b32.xlu0 %v1429, 96
    %v1433 = vpop.permute.xlu0 %1432
    %v1435 = vmul.f32 %v1430, %v1433
    %v1436 = vmul.f32 %v1418, %v425
    %v1437 = vadd.f32 %v1435, %v1436
    %v1438 = vld [vmem:[#allocation4 + $0x140] sm:$0xff]
    %v1439 = vld [vmem:[#allocation4 + $0x148] sm:$0xff]
    %v1440 = vsel %vm760, %v951, %v862
    %v1441 = vsel %vm428, %v1440, 0
    %1443 = vmatprep.subr.mxu0 0.0
    %1444 = vmatpush1.msra.mxu0 0.0
    %1445 = vmatprep.subr.mxu0 0.0
    %1446 = vmatpush1.msra.mxu0 0.0
    %1447 = vmatprep.subr.mxu0 0.0
    %1448 = vmatpush1.msra.mxu0 0.0
    %1449 = vmatprep.subr.mxu0 0.0
    %1450 = vmatpush1.msra.mxu0 0.0
    %1451 = vmatprep.subr.mxu0 0.0
    %1452 = vmatpush1.msra.mxu0 0.0
    %1453 = vmatprep.subr.mxu0 0.0
    %1454 = vmatpush1.msra.mxu0 0.0
    %1455 = vmatprep.subr.mxu0 0.0
    %1456 = vmatpush1.msra.mxu0 0.0
    %1457 = vmatprep.subr.mxu0 0.0
    %1458 = vmatpush1.msra.mxu0 0.0
    %1459 = vmatprep.subr.mxu0 0.0
    %1460 = vmatpush1.msra.mxu0 0.0
    %1461 = vmatprep.subr.mxu0 0.0
    %1462 = vmatpush1.msra.mxu0 0.0
    %1463 = vmatprep.subr.mxu0 0.0
    %1464 = vmatpush1.msra.mxu0 0.0
    %1465 = vmatprep.subr.mxu0 0.0
    %1466 = vmatpush1.msra.mxu0 0.0
    %1467 = vmatprep.subr.mxu0 0.0
    %1468 = vmatpush1.msra.mxu0 0.0
    %1469 = vmatprep.subr.mxu0 0.0
    %1470 = vmatpush1.msra.mxu0 0.0
    %1471 = vmatprep.subr.mxu0 0.0
    %1472 = vmatpush1.msra.mxu0 %v1439
    %1473 = vmatprep.subr.mxu0 0.0
    %1474 = vmatpush1.msra.mxu0 %v1438
    %1475 = vmatprep.subr.mxu0 0.0
    %1476 = vmatpush2.msra.mxu0 0.0
    %1477 = vmatprep.subr.mxu0 0.0
    %1478 = vmatpush2.msra.mxu0 0.0
    %1479 = vmatprep.subr.mxu0 0.0
    %1480 = vmatpush2.msra.mxu0 0.0
    %1481 = vmatprep.subr.mxu0 0.0
    %1482 = vmatpush2.msra.mxu0 0.0
    %1483 = vmatprep.subr.mxu0 0.0
    %1484 = vmatpush2.msra.mxu0 0.0
    %1485 = vmatprep.subr.mxu0 0.0
    %1486 = vmatpush2.msra.mxu0 0.0
    %1487 = vmatprep.subr.mxu0 0.0
    %1488 = vmatpush2.msra.mxu0 0.0
    %1489 = vmatprep.subr.mxu0 0.0
    %1490 = vmatpush2.msra.mxu0 0.0
    %1491 = vmatprep.subr.mxu0 0.0
    %1492 = vmatpush2.msra.mxu0 0.0
    %1493 = vmatprep.subr.mxu0 0.0
    %1494 = vmatpush2.msra.mxu0 0.0
    %1495 = vmatprep.subr.mxu0 0.0
    %1496 = vmatpush2.msra.mxu0 0.0
    %1497 = vmatprep.subr.mxu0 0.0
    %1498 = vmatpush2.msra.mxu0 0.0
    %1499 = vmatprep.subr.mxu0 0.0
    %1500 = vmatpush2.msra.mxu0 0.0
    %1501 = vmatprep.subr.mxu0 0.0
    %1502 = vmatpush2.msra.mxu0 0.0
    %1503 = vmatprep.subr.mxu0 0.0
    %1504 = vmatpush2.msra.mxu0 0.0
    %1505 = vmatprep.subr.mxu0 0.0
    %1506 = vmatpush2.msra.mxu0 0.0
    %1507 = vmatprep.mubr.f32.mxu0 0.0
    %1508 = vmatmul.mubr.f32.gmra.mxu0 %v1441
    %v1509 = vpop.f32.mrf.mxu0
    %v1510 = vadd.f32 0.0, %v1509
    %v1511 = vpop.f32.mrf.mxu0
    %1512 = vdwg.mxu0
    %v1513 = vlaneseq
    %v1514 = vshrl.u32 %v1513, 7
    %v1515 = vsub.s32 0, %v1514
    %v1516 = vrot.slane %v1510, %v1515
    %1518 = vbcast.lane.b32.xlu0 %v1516, 256
    %v1519 = vpop.permute.xlu0 %1518
    %s1521 = sor.u32 256, 8
    %1522 = vbcast.lane.b32.xlu0 %v1516, %s1521
    %v1523 = vpop.permute.xlu0 %1522
    %v1524 = vlaneseq
    %v1525 = vshrl.u32 %v1524, 7
    %v1526 = vsub.s32 1, %v1525
    %v1527 = vrot.slane %v1510, %v1526
    %1529 = vbcast.lane.b32.xlu0 %v1527, 256
    %v1530 = vpop.permute.xlu0 %1529
    %s1532 = sor.u32 256, 8
    %1533 = vbcast.lane.b32.xlu0 %v1527, %s1532
    %v1534 = vpop.permute.xlu0 %1533
    %v1535 = vmul.f32 %v1519, %v526
    %v1536 = vmul.f32 %v1523, %v526
    %v1537 = vmul.f32 %v1530, %v526
    %v1538 = vmul.f32 %v1534, %v526
    %v1543 = vmul.f32 %v850, %v534
    %v1544 = vmul.f32 %v853, %v534
    %v1545 = vmul.f32 %v939, %v534
    %v1546 = vmul.f32 %v942, %v534
    %v1547 = vadd.f32 %v1535, %v1543
    %v1548 = vadd.f32 %v1536, %v1544
    %v1549 = vadd.f32 %v1537, %v1545
    %v1550 = vadd.f32 %v1538, %v1546
    %s1552 = sor.u32 256, 16
    %1553 = vbcast.lane.b32.xlu0 %v1516, %s1552
    %v1554 = vpop.permute.xlu0 %1553
    %s1556 = sor.u32 256, 24
    %1557 = vbcast.lane.b32.xlu0 %v1516, %s1556
    %v1558 = vpop.permute.xlu0 %1557
    %s1560 = sor.u32 256, 16
    %1561 = vbcast.lane.b32.xlu0 %v1527, %s1560
    %v1562 = vpop.permute.xlu0 %1561
    %s1564 = sor.u32 256, 24
    %1565 = vbcast.lane.b32.xlu0 %v1527, %s1564
    %v1566 = vpop.permute.xlu0 %1565
    %v1567 = vmul.f32 %v1554, %v559
    %v1568 = vmul.f32 %v1558, %v559
    %v1569 = vmul.f32 %v1562, %v559
    %v1570 = vmul.f32 %v1566, %v559
    %v1571 = vadd.f32 %v1547, %v1567
    %v1572 = vadd.f32 %v1548, %v1568
    %v1573 = vadd.f32 %v1549, %v1569
    %v1574 = vadd.f32 %v1550, %v1570
    %v1575 = vadd.f32 %v1571, %v571
    %v1576 = vadd.f32 %v1572, %v571
    %v1577 = vadd.f32 %v1573, %v571
    %v1578 = vadd.f32 %v1574, %v571
    %v1579 = vld [vmem:[#allocation4 + $0x100] sm:$0xff]
    %v1580 = vld [vmem:[#allocation4 + $0x108] sm:$0xff]
    %v1581 = vld [vmem:[#allocation4 + $0x110] sm:$0xff]
    %v1582 = vld [vmem:[#allocation4 + $0x118] sm:$0xff]
    %1584 = vrot.lane.b32.xlu0 %v1437, 96
    %v1585 = vpop.permute.xlu0 %1584
    %v1586 = vsel %vm57, %v1585, 0
    %1588 = vmatprep.subr.mxu0 0.0
    %1589 = vmatpush1.msra.mxu0 0.0
    %1590 = vmatprep.subr.mxu0 0.0
    %1591 = vmatpush1.msra.mxu0 0.0
    %1592 = vmatprep.subr.mxu0 0.0
    %1593 = vmatpush1.msra.mxu0 0.0
    %1594 = vmatprep.subr.mxu0 0.0
    %1595 = vmatpush1.msra.mxu0 0.0
    %1596 = vmatprep.subr.mxu0 0.0
    %1597 = vmatpush1.msra.mxu0 0.0
    %1598 = vmatprep.subr.mxu0 0.0
    %1599 = vmatpush1.msra.mxu0 0.0
    %1600 = vmatprep.subr.mxu0 0.0
    %1601 = vmatpush1.msra.mxu0 0.0
    %1602 = vmatprep.subr.mxu0 0.0
    %1603 = vmatpush1.msra.mxu0 0.0
    %1604 = vmatprep.subr.mxu0 0.0
    %1605 = vmatpush1.msra.mxu0 0.0
    %1606 = vmatprep.subr.mxu0 0.0
    %1607 = vmatpush1.msra.mxu0 0.0
    %1608 = vmatprep.subr.mxu0 0.0
    %1609 = vmatpush1.msra.mxu0 0.0
    %1610 = vmatprep.subr.mxu0 0.0
    %1611 = vmatpush1.msra.mxu0 0.0
    %1612 = vmatprep.subr.mxu0 0.0
    %1613 = vmatpush1.msra.mxu0 %v1582
    %1614 = vmatprep.subr.mxu0 0.0
    %1615 = vmatpush1.msra.mxu0 %v1581
    %1616 = vmatprep.subr.mxu0 0.0
    %1617 = vmatpush1.msra.mxu0 %v1580
    %1618 = vmatprep.subr.mxu0 0.0
    %1619 = vmatpush1.msra.mxu0 %v1579
    %1620 = vmatprep.subr.mxu0 0.0
    %1621 = vmatpush2.msra.mxu0 0.0
    %1622 = vmatprep.subr.mxu0 0.0
    %1623 = vmatpush2.msra.mxu0 0.0
    %1624 = vmatprep.subr.mxu0 0.0
    %1625 = vmatpush2.msra.mxu0 0.0
    %1626 = vmatprep.subr.mxu0 0.0
    %1627 = vmatpush2.msra.mxu0 0.0
    %1628 = vmatprep.subr.mxu0 0.0
    %1629 = vmatpush2.msra.mxu0 0.0
    %1630 = vmatprep.subr.mxu0 0.0
    %1631 = vmatpush2.msra.mxu0 0.0
    %1632 = vmatprep.subr.mxu0 0.0
    %1633 = vmatpush2.msra.mxu0 0.0
    %1634 = vmatprep.subr.mxu0 0.0
    %1635 = vmatpush2.msra.mxu0 0.0
    %1636 = vmatprep.subr.mxu0 0.0
    %1637 = vmatpush2.msra.mxu0 0.0
    %1638 = vmatprep.subr.mxu0 0.0
    %1639 = vmatpush2.msra.mxu0 0.0
    %1640 = vmatprep.subr.mxu0 0.0
    %1641 = vmatpush2.msra.mxu0 0.0
    %1642 = vmatprep.subr.mxu0 0.0
    %1643 = vmatpush2.msra.mxu0 0.0
    %1644 = vmatprep.subr.mxu0 0.0
    %1645 = vmatpush2.msra.mxu0 0.0
    %1646 = vmatprep.subr.mxu0 0.0
    %1647 = vmatpush2.msra.mxu0 0.0
    %1648 = vmatprep.subr.mxu0 0.0
    %1649 = vmatpush2.msra.mxu0 0.0
    %1650 = vmatprep.subr.mxu0 0.0
    %1651 = vmatpush2.msra.mxu0 0.0
    %1652 = vmatprep.mubr.f32.mxu0 0.0
    %1653 = vmatmul.mubr.f32.gmra.mxu0 %v1586
    %v1654 = vpop.f32.mrf.mxu0
    %v1655 = vadd.f32 0.0, %v1654
    %v1656 = vpop.f32.mrf.mxu0
    %1657 = vdwg.mxu0
    %v1660 = vunpack.c.l.s4 1966171168
    %v1661 = vunpack.c.0.s8 %v1660
    %v1662 = vlaneseq
    %v1663 = vshrl.u32 %v1662, 7
    %v1664 = vsub.s32 %v1661, %v1663
    %v1665 = vrot.slane %v1655, %v1664
    %v1666 = vcombine.high %v1665, %v1665
    %v1668 = vunpack.c.l.s4 1966171168
    %v1669 = vunpack.c.0.s8 %v1668
    %v1670 = vlaneseq
    %v1671 = vshrl.u32 %v1670, 7
    %v1672 = vsub.s32 %v1669, %v1671
    %v1673 = vrot.slane %v1665, %v1672
    %v1675 = vunpack.c.l.s4 1966171168
    %v1676 = vunpack.c.0.s8 %v1675
    %v1677 = vlaneseq
    %v1678 = vshrl.u32 %v1677, 7
    %v1679 = vsub.s32 %v1676, %v1678
    %v1680 = vrot.slane %v1666, %v1679
    %v1681 = vlaneseq
    %v1682 = vshrl.u32 %v1681, 7
    %v1683 = vsub.s32 0, %v1682
    %v1684 = vrot.slane %v1673, %v1683
    %v1685 = vlaneseq
    %v1686 = vshrl.u32 %v1685, 7
    %v1687 = vsub.s32 0, %v1686
    %v1688 = vrot.slane %v1680, %v1687
    %v1691 = vadd.f32 %v1684, %v131
    %v1692 = vadd.f32 %v1684, %v136
    %v1693 = vadd.f32 %v1688, %v212
    %v1694 = vadd.f32 %v1688, %v217
    %v1695 = vadd.f32 %v1691, %v1575
    %v1696 = vadd.f32 %v1692, %v1576
    %v1697 = vadd.f32 %v1693, %v1577
    %v1698 = vadd.f32 %v1694, %v1578
    %v1699 = vadd.f32 %v1695, %v699
    %v1700 = vadd.f32 %v1696, %v699
    %v1701 = vadd.f32 %v1697, %v699
    %v1702 = vadd.f32 %v1698, %v699
    %v1703 = vtanh.pop %v1699
    %v1704 = vtanh.pop %v1700
    %v1705 = vtanh.pop %v1701
    %v1706 = vtanh.pop %v1702
    %v1707 = vmul.f32 %v1703, %v711
    %v1708 = vmul.f32 %v1704, %v711
    %v1709 = vmul.f32 %v1705, %v711
    %v1710 = vmul.f32 %v1706, %v711
    %v1711 = vsel %vm57, %v1707, 0.0
    %1712 = vadd.xlane.f32.xlu0 %v1711
    %v1713 = vpop.xlane.xlu0 %1712
    %v1714 = vsel %vm57, %v1708, 0.0
    %1715 = vadd.xlane.f32.xlu0 %v1714
    %v1716 = vpop.xlane.xlu0 %1715
    %v1717 = vsel %vm57, %v1709, 0.0
    %1718 = vadd.xlane.f32.xlu0 %v1717
    %v1719 = vpop.xlane.xlu0 %1718
    %v1720 = vsel %vm57, %v1710, 0.0
    %1721 = vadd.xlane.f32.xlu0 %v1720
    %v1722 = vpop.xlane.xlu0 %1721
    %v1723 = vadd.f32 %v1713, %v730
    %v1724 = vadd.f32 %v1716, %v730
    %v1725 = vadd.f32 %v1719, %v730
    %v1726 = vadd.f32 %v1722, %v730
    %v1731 = vlaneseq
    %v1732 = vshrl.u32 %v1731, 7
    %v1733 = vsub.s32 %v221, %v1732
    %v1734 = vrot.slane %v1723, %v1733
    %v1735 = vlaneseq
    %v1736 = vshrl.u32 %v1735, 7
    %v1737 = vsub.s32 %v744, %v1736
    %v1738 = vrot.slane %v1724, %v1737
    %v1739 = vsel %vm749, %v1738, %v1734
    %v1740 = vlaneseq
    %v1741 = vshrl.u32 %v1740, 7
    %v1742 = vsub.s32 %v221, %v1741
    %v1743 = vrot.slane %v1725, %v1742
    %v1744 = vlaneseq
    %v1745 = vshrl.u32 %v1744, 7
    %v1746 = vsub.s32 %v744, %v1745
    %v1747 = vrot.slane %v1726, %v1746
    %v1748 = vsel %vm749, %v1747, %v1743
    %v1749 = vsel %vm760, %v1748, %v1739
    %v1751 = vsel %vm763, %v1749, -inf
    %1752 = vmax.xlane.f32.xlu0 %v1751
    %v1753 = vpop.xlane.xlu0 %1752
    %v1755 = vlaneseq
    %v1756 = vshrl.u32 %v1755, 7
    %v1757 = vsub.s32 0, %v1756
    %v1758 = vrot.slane %v1753, %v1757
    %v1759 = vlaneseq
    %v1760 = vshrl.u32 %v1759, 7
    %v1761 = vsub.s32 1, %v1760
    %v1762 = vrot.slane %v1753, %v1761
    %v1765 = vsub.f32 %v1723, %v1758
    %v1766 = vsub.f32 %v1724, %v1758
    %v1767 = vsub.f32 %v1725, %v1762
    %v1768 = vsub.f32 %v1726, %v1762
    %v1769 = vmul.f32 %v1765, 1.442695
    %v1770 = vpow.pop %v1769
    %v1771 = vmul.f32 %v1766, 1.442695
    %v1772 = vpow.pop %v1771
    %v1773 = vmul.f32 %v1767, 1.442695
    %v1774 = vpow.pop %v1773
    %v1775 = vmul.f32 %v1768, 1.442695
    %v1776 = vpow.pop %v1775
    %1781 = vset.pattern.permute.xlu0 0
    %1782 = vperm.xlu0 %1781, %v1770
    %v1783 = vpop.permute.xlu0 %1782
    %1784 = vset.pattern.permute.xlu0 0
    %1785 = vperm.xlu0 %1784, %v1772
    %v1786 = vpop.permute.xlu0 %1785
    %1787 = vset.pattern.permute.xlu0 0
    %1788 = vperm.xlu0 %1787, %v1774
    %v1789 = vpop.permute.xlu0 %1788
    %1790 = vset.pattern.permute.xlu0 0
    %1791 = vperm.xlu0 %1790, %v1776
    %v1792 = vpop.permute.xlu0 %1791
    %v1793 = vlaneseq
    %v1794 = vshrl.u32 %v1793, 7
    %v1795 = vsub.s32 %v221, %v1794
    %v1796 = vrot.slane %v1783, %v1795
    %v1797 = vlaneseq
    %v1798 = vshrl.u32 %v1797, 7
    %v1799 = vsub.s32 %v744, %v1798
    %v1800 = vrot.slane %v1786, %v1799
    %v1801 = vsel %vm749, %v1800, %v1796
    %v1802 = vlaneseq
    %v1803 = vshrl.u32 %v1802, 7
    %v1804 = vsub.s32 %v221, %v1803
    %v1805 = vrot.slane %v1789, %v1804
    %v1806 = vlaneseq
    %v1807 = vshrl.u32 %v1806, 7
    %v1808 = vsub.s32 %v744, %v1807
    %v1809 = vrot.slane %v1792, %v1808
    %v1810 = vsel %vm749, %v1809, %v1805
    %v1811 = vsel %vm760, %v1810, %v1801
    %v1813 = vsel %vm763, %v1811, 0.0
    %1814 = vadd.xlane.f32.xlu0 %v1813
    %v1815 = vpop.xlane.xlu0 %1814
    %v1817 = vlaneseq
    %v1818 = vshrl.u32 %v1817, 7
    %v1819 = vsub.s32 0, %v1818
    %v1820 = vrot.slane %v1815, %v1819
    %v1821 = vlaneseq
    %v1822 = vshrl.u32 %v1821, 7
    %v1823 = vsub.s32 1, %v1822
    %v1824 = vrot.slane %v1815, %v1823
    %v1827 = vrcp.pop %v1820
    %v1828 = vmul.f32 %v1770, %v1827
    %v1829 = vmul.f32 %v1772, %v1827
    %v1830 = vrcp.pop %v1824
    %v1831 = vmul.f32 %v1774, %v1830
    %v1832 = vmul.f32 %v1776, %v1830
    %1835 = vset.pattern.permute.xlu0 0
    %1836 = vperm.xlu0 %1835, %v1828
    %v1837 = vpop.permute.xlu0 %1836
    %1838 = vset.pattern.permute.xlu0 0
    %1839 = vperm.xlu0 %1838, %v1829
    %v1840 = vpop.permute.xlu0 %1839
    %v1841 = vlaneseq
    %v1842 = vshrl.u32 %v1841, 7
    %v1843 = vsub.s32 %v221, %v1842
    %v1844 = vrot.slane %v1837, %v1843
    %v1845 = vlaneseq
    %v1846 = vshrl.u32 %v1845, 7
    %v1847 = vsub.s32 %v744, %v1846
    %v1848 = vrot.slane %v1840, %v1847
    %v1849 = vsel %vm749, %v1848, %v1844
    %v1850 = vsel %vm428, %v1849, 0
    %1852 = vmatprep.subr.mxu0 0.0
    %1853 = vmatpush1.msra.mxu0 0.0
    %1854 = vmatprep.subr.mxu0 0.0
    %1855 = vmatpush1.msra.mxu0 0.0
    %1856 = vmatprep.subr.mxu0 0.0
    %1857 = vmatpush1.msra.mxu0 0.0
    %1858 = vmatprep.subr.mxu0 0.0
    %1859 = vmatpush1.msra.mxu0 0.0
    %1860 = vmatprep.subr.mxu0 0.0
    %1861 = vmatpush1.msra.mxu0 0.0
    %1862 = vmatprep.subr.mxu0 0.0
    %1863 = vmatpush1.msra.mxu0 0.0
    %1864 = vmatprep.subr.mxu0 0.0
    %1865 = vmatpush1.msra.mxu0 0.0
    %1866 = vmatprep.subr.mxu0 0.0
    %1867 = vmatpush1.msra.mxu0 0.0
    %1868 = vmatprep.subr.mxu0 0.0
    %1869 = vmatpush1.msra.mxu0 0.0
    %1870 = vmatprep.subr.mxu0 0.0
    %1871 = vmatpush1.msra.mxu0 0.0
    %1872 = vmatprep.subr.mxu0 0.0
    %1873 = vmatpush1.msra.mxu0 0.0
    %1874 = vmatprep.subr.mxu0 0.0
    %1875 = vmatpush1.msra.mxu0 0.0
    %1876 = vmatprep.subr.mxu0 0.0
    %1877 = vmatpush1.msra.mxu0 0.0
    %1878 = vmatprep.subr.mxu0 0.0
    %1879 = vmatpush1.msra.mxu0 0.0
    %1880 = vmatprep.subr.mxu0 0.0
    %1881 = vmatpush1.msra.mxu0 %v50
    %1882 = vmatprep.subr.mxu0 0.0
    %1883 = vmatpush1.msra.mxu0 %v49
    %1884 = vmatprep.subr.mxu0 0.0
    %1885 = vmatpush2.msra.mxu0 0.0
    %1886 = vmatprep.subr.mxu0 0.0
    %1887 = vmatpush2.msra.mxu0 0.0
    %1888 = vmatprep.subr.mxu0 0.0
    %1889 = vmatpush2.msra.mxu0 0.0
    %1890 = vmatprep.subr.mxu0 0.0
    %1891 = vmatpush2.msra.mxu0 0.0
    %1892 = vmatprep.subr.mxu0 0.0
    %1893 = vmatpush2.msra.mxu0 0.0
    %1894 = vmatprep.subr.mxu0 0.0
    %1895 = vmatpush2.msra.mxu0 0.0
    %1896 = vmatprep.subr.mxu0 0.0
    %1897 = vmatpush2.msra.mxu0 0.0
    %1898 = vmatprep.subr.mxu0 0.0
    %1899 = vmatpush2.msra.mxu0 0.0
    %1900 = vmatprep.subr.mxu0 0.0
    %1901 = vmatpush2.msra.mxu0 0.0
    %1902 = vmatprep.subr.mxu0 0.0
    %1903 = vmatpush2.msra.mxu0 0.0
    %1904 = vmatprep.subr.mxu0 0.0
    %1905 = vmatpush2.msra.mxu0 0.0
    %1906 = vmatprep.subr.mxu0 0.0
    %1907 = vmatpush2.msra.mxu0 0.0
    %1908 = vmatprep.subr.mxu0 0.0
    %1909 = vmatpush2.msra.mxu0 0.0
    %1910 = vmatprep.subr.mxu0 0.0
    %1911 = vmatpush2.msra.mxu0 0.0
    %1912 = vmatprep.subr.mxu0 0.0
    %1913 = vmatpush2.msra.mxu0 0.0
    %1914 = vmatprep.subr.mxu0 0.0
    %1915 = vmatpush2.msra.mxu0 0.0
    %1916 = vmatprep.mubr.f32.mxu0 0.0
    %1917 = vmatmul.mubr.f32.gmra.mxu0 %v1850
    %v1918 = vpop.f32.mrf.mxu0
    %v1919 = vadd.f32 0.0, %v1918
    %v1920 = vpop.f32.mrf.mxu0
    %1921 = vdwg.mxu0
    %1924 = vset.pattern.permute.xlu0 0
    %1925 = vperm.xlu0 %1924, %v1831
    %v1926 = vpop.permute.xlu0 %1925
    %1927 = vset.pattern.permute.xlu0 0
    %1928 = vperm.xlu0 %1927, %v1832
    %v1929 = vpop.permute.xlu0 %1928
    %v1930 = vlaneseq
    %v1931 = vshrl.u32 %v1930, 7
    %v1932 = vsub.s32 %v221, %v1931
    %v1933 = vrot.slane %v1926, %v1932
    %v1934 = vlaneseq
    %v1935 = vshrl.u32 %v1934, 7
    %v1936 = vsub.s32 %v744, %v1935
    %v1937 = vrot.slane %v1929, %v1936
    %v1938 = vsel %vm749, %v1937, %v1933
    %v1939 = vsel %vm428, %v1938, 0
    %1941 = vmatprep.subr.mxu0 0.0
    %1942 = vmatpush1.msra.mxu0 0.0
    %1943 = vmatprep.subr.mxu0 0.0
    %1944 = vmatpush1.msra.mxu0 0.0
    %1945 = vmatprep.subr.mxu0 0.0
    %1946 = vmatpush1.msra.mxu0 0.0
    %1947 = vmatprep.subr.mxu0 0.0
    %1948 = vmatpush1.msra.mxu0 0.0
    %1949 = vmatprep.subr.mxu0 0.0
    %1950 = vmatpush1.msra.mxu0 0.0
    %1951 = vmatprep.subr.mxu0 0.0
    %1952 = vmatpush1.msra.mxu0 0.0
    %1953 = vmatprep.subr.mxu0 0.0
    %1954 = vmatpush1.msra.mxu0 0.0
    %1955 = vmatprep.subr.mxu0 0.0
    %1956 = vmatpush1.msra.mxu0 0.0
    %1957 = vmatprep.subr.mxu0 0.0
    %1958 = vmatpush1.msra.mxu0 0.0
    %1959 = vmatprep.subr.mxu0 0.0
    %1960 = vmatpush1.msra.mxu0 0.0
    %1961 = vmatprep.subr.mxu0 0.0
    %1962 = vmatpush1.msra.mxu0 0.0
    %1963 = vmatprep.subr.mxu0 0.0
    %1964 = vmatpush1.msra.mxu0 0.0
    %1965 = vmatprep.subr.mxu0 0.0
    %1966 = vmatpush1.msra.mxu0 0.0
    %1967 = vmatprep.subr.mxu0 0.0
    %1968 = vmatpush1.msra.mxu0 0.0
    %1969 = vmatprep.subr.mxu0 0.0
    %1970 = vmatpush1.msra.mxu0 %v52
    %1971 = vmatprep.subr.mxu0 0.0
    %1972 = vmatpush1.msra.mxu0 %v51
    %1973 = vmatprep.subr.mxu0 0.0
    %1974 = vmatpush2.msra.mxu0 0.0
    %1975 = vmatprep.subr.mxu0 0.0
    %1976 = vmatpush2.msra.mxu0 0.0
    %1977 = vmatprep.subr.mxu0 0.0
    %1978 = vmatpush2.msra.mxu0 0.0
    %1979 = vmatprep.subr.mxu0 0.0
    %1980 = vmatpush2.msra.mxu0 0.0
    %1981 = vmatprep.subr.mxu0 0.0
    %1982 = vmatpush2.msra.mxu0 0.0
    %1983 = vmatprep.subr.mxu0 0.0
    %1984 = vmatpush2.msra.mxu0 0.0
    %1985 = vmatprep.subr.mxu0 0.0
    %1986 = vmatpush2.msra.mxu0 0.0
    %1987 = vmatprep.subr.mxu0 0.0
    %1988 = vmatpush2.msra.mxu0 0.0
    %1989 = vmatprep.subr.mxu0 0.0
    %1990 = vmatpush2.msra.mxu0 0.0
    %1991 = vmatprep.subr.mxu0 0.0
    %1992 = vmatpush2.msra.mxu0 0.0
    %1993 = vmatprep.subr.mxu0 0.0
    %1994 = vmatpush2.msra.mxu0 0.0
    %1995 = vmatprep.subr.mxu0 0.0
    %1996 = vmatpush2.msra.mxu0 0.0
    %1997 = vmatprep.subr.mxu0 0.0
    %1998 = vmatpush2.msra.mxu0 0.0
    %1999 = vmatprep.subr.mxu0 0.0
    %2000 = vmatpush2.msra.mxu0 0.0
    %2001 = vmatprep.subr.mxu0 0.0
    %2002 = vmatpush2.msra.mxu0 0.0
    %2003 = vmatprep.subr.mxu0 0.0
    %2004 = vmatpush2.msra.mxu0 0.0
    %2005 = vmatprep.mubr.f32.mxu0 0.0
    %2006 = vmatmul.mubr.f32.gmra.mxu0 %v1939
    %v2007 = vpop.f32.mrf.mxu0
    %v2008 = vadd.f32 0.0, %v2007
    %v2009 = vpop.f32.mrf.mxu0
    %2010 = vdwg.mxu0
    %v2011 = vld [vmem:[#allocation4 + $0xc0] sm:$0xff]
    %v2012 = vld [vmem:[#allocation4 + $0xc8] sm:$0xff]
    %v2013 = vld [vmem:[#allocation4 + $0xd0] sm:$0xff]
    %v2014 = vld [vmem:[#allocation4 + $0xd8] sm:$0xff]
    %v2015 = vld [vmem:[#allocation4 + $0xe0] sm:$0xff]
    %v2016 = vld [vmem:[#allocation4 + $0xe8] sm:$0xff]
    %v2017 = vld [vmem:[#allocation4 + $0xf0] sm:$0xff]
    %v2018 = vld [vmem:[#allocation4 + $0xf8] sm:$0xff]
    %v2021 = vrot.slane %v2008, 7
    %v2022 = vsel %vm760, %v2021, %v1919
    %v2023 = vsel %vm57, %v2022, 0
    %2025 = vmatprep.subr.mxu0 0.0
    %2026 = vmatpush1.msra.mxu0 0.0
    %2027 = vmatprep.subr.mxu0 0.0
    %2028 = vmatpush1.msra.mxu0 0.0
    %2029 = vmatprep.subr.mxu0 0.0
    %2030 = vmatpush1.msra.mxu0 0.0
    %2031 = vmatprep.subr.mxu0 0.0
    %2032 = vmatpush1.msra.mxu0 0.0
    %2033 = vmatprep.subr.mxu0 0.0
    %2034 = vmatpush1.msra.mxu0 0.0
    %2035 = vmatprep.subr.mxu0 0.0
    %2036 = vmatpush1.msra.mxu0 0.0
    %2037 = vmatprep.subr.mxu0 0.0
    %2038 = vmatpush1.msra.mxu0 0.0
    %2039 = vmatprep.subr.mxu0 0.0
    %2040 = vmatpush1.msra.mxu0 0.0
    %2041 = vmatprep.subr.mxu0 0.0
    %2042 = vmatpush1.msra.mxu0 0.0
    %2043 = vmatprep.subr.mxu0 0.0
    %2044 = vmatpush1.msra.mxu0 0.0
    %2045 = vmatprep.subr.mxu0 0.0
    %2046 = vmatpush1.msra.mxu0 0.0
    %2047 = vmatprep.subr.mxu0 0.0
    %2048 = vmatpush1.msra.mxu0 0.0
    %2049 = vmatprep.subr.mxu0 0.0
    %2050 = vmatpush1.msra.mxu0 %v2018
    %2051 = vmatprep.subr.mxu0 0.0
    %2052 = vmatpush1.msra.mxu0 %v2017
    %2053 = vmatprep.subr.mxu0 0.0
    %2054 = vmatpush1.msra.mxu0 %v2016
    %2055 = vmatprep.subr.mxu0 0.0
    %2056 = vmatpush1.msra.mxu0 %v2015
    %2057 = vmatprep.subr.mxu0 0.0
    %2058 = vmatpush2.msra.mxu0 0.0
    %2059 = vmatprep.subr.mxu0 0.0
    %2060 = vmatpush2.msra.mxu0 0.0
    %2061 = vmatprep.subr.mxu0 0.0
    %2062 = vmatpush2.msra.mxu0 0.0
    %2063 = vmatprep.subr.mxu0 0.0
    %2064 = vmatpush2.msra.mxu0 0.0
    %2065 = vmatprep.subr.mxu0 0.0
    %2066 = vmatpush2.msra.mxu0 0.0
    %2067 = vmatprep.subr.mxu0 0.0
    %2068 = vmatpush2.msra.mxu0 0.0
    %2069 = vmatprep.subr.mxu0 0.0
    %2070 = vmatpush2.msra.mxu0 0.0
    %2071 = vmatprep.subr.mxu0 0.0
    %2072 = vmatpush2.msra.mxu0 0.0
    %2073 = vmatprep.subr.mxu0 0.0
    %2074 = vmatpush2.msra.mxu0 0.0
    %2075 = vmatprep.subr.mxu0 0.0
    %2076 = vmatpush2.msra.mxu0 0.0
    %2077 = vmatprep.subr.mxu0 0.0
    %2078 = vmatpush2.msra.mxu0 0.0
    %2079 = vmatprep.subr.mxu0 0.0
    %2080 = vmatpush2.msra.mxu0 0.0
    %2081 = vmatprep.subr.mxu0 0.0
    %2082 = vmatpush2.msra.mxu0 0.0
    %2083 = vmatprep.subr.mxu0 0.0
    %2084 = vmatpush2.msra.mxu0 0.0
    %2085 = vmatprep.subr.mxu0 0.0
    %2086 = vmatpush2.msra.mxu0 0.0
    %2087 = vmatprep.subr.mxu0 0.0
    %2088 = vmatpush2.msra.mxu0 0.0
    %2089 = vmatprep.mubr.f32.mxu0 0.0
    %2090 = vmatmul.mubr.f32.gmra.mxu0 %v2023
    %v2091 = vpop.f32.mrf.mxu0
    %v2092 = vadd.f32 0.0, %v2091
    %v2093 = vpop.f32.mrf.mxu0
    %2094 = vdwg.mxu0
    %2095 = vmatprep.subr.mxu0 0.0
    %2096 = vmatpush1.msra.mxu0 0.0
    %2097 = vmatprep.subr.mxu0 0.0
    %2098 = vmatpush1.msra.mxu0 0.0
    %2099 = vmatprep.subr.mxu0 0.0
    %2100 = vmatpush1.msra.mxu0 0.0
    %2101 = vmatprep.subr.mxu0 0.0
    %2102 = vmatpush1.msra.mxu0 0.0
    %2103 = vmatprep.subr.mxu0 0.0
    %2104 = vmatpush1.msra.mxu0 0.0
    %2105 = vmatprep.subr.mxu0 0.0
    %2106 = vmatpush1.msra.mxu0 0.0
    %2107 = vmatprep.subr.mxu0 0.0
    %2108 = vmatpush1.msra.mxu0 0.0
    %2109 = vmatprep.subr.mxu0 0.0
    %2110 = vmatpush1.msra.mxu0 0.0
    %2111 = vmatprep.subr.mxu0 0.0
    %2112 = vmatpush1.msra.mxu0 0.0
    %2113 = vmatprep.subr.mxu0 0.0
    %2114 = vmatpush1.msra.mxu0 0.0
    %2115 = vmatprep.subr.mxu0 0.0
    %2116 = vmatpush1.msra.mxu0 0.0
    %2117 = vmatprep.subr.mxu0 0.0
    %2118 = vmatpush1.msra.mxu0 0.0
    %2119 = vmatprep.subr.mxu0 0.0
    %2120 = vmatpush1.msra.mxu0 %v2014
    %2121 = vmatprep.subr.mxu0 0.0
    %2122 = vmatpush1.msra.mxu0 %v2013
    %2123 = vmatprep.subr.mxu0 0.0
    %2124 = vmatpush1.msra.mxu0 %v2012
    %2125 = vmatprep.subr.mxu0 0.0
    %2126 = vmatpush1.msra.mxu0 %v2011
    %2127 = vmatprep.subr.mxu0 0.0
    %2128 = vmatpush2.msra.mxu0 0.0
    %2129 = vmatprep.subr.mxu0 0.0
    %2130 = vmatpush2.msra.mxu0 0.0
    %2131 = vmatprep.subr.mxu0 0.0
    %2132 = vmatpush2.msra.mxu0 0.0
    %2133 = vmatprep.subr.mxu0 0.0
    %2134 = vmatpush2.msra.mxu0 0.0
    %2135 = vmatprep.subr.mxu0 0.0
    %2136 = vmatpush2.msra.mxu0 0.0
    %2137 = vmatprep.subr.mxu0 0.0
    %2138 = vmatpush2.msra.mxu0 0.0
    %2139 = vmatprep.subr.mxu0 0.0
    %2140 = vmatpush2.msra.mxu0 0.0
    %2141 = vmatprep.subr.mxu0 0.0
    %2142 = vmatpush2.msra.mxu0 0.0
    %2143 = vmatprep.subr.mxu0 0.0
    %2144 = vmatpush2.msra.mxu0 0.0
    %2145 = vmatprep.subr.mxu0 0.0
    %2146 = vmatpush2.msra.mxu0 0.0
    %2147 = vmatprep.subr.mxu0 0.0
    %2148 = vmatpush2.msra.mxu0 0.0
    %2149 = vmatprep.subr.mxu0 0.0
    %2150 = vmatpush2.msra.mxu0 0.0
    %2151 = vmatprep.subr.mxu0 0.0
    %2152 = vmatpush2.msra.mxu0 0.0
    %2153 = vmatprep.subr.mxu0 0.0
    %2154 = vmatpush2.msra.mxu0 0.0
    %2155 = vmatprep.subr.mxu0 0.0
    %2156 = vmatpush2.msra.mxu0 0.0
    %2157 = vmatprep.subr.mxu0 0.0
    %2158 = vmatpush2.msra.mxu0 0.0
    %2159 = vmatprep.mubr.f32.mxu0 0.0
    %2160 = vmatmul.mubr.f32.gmra.mxu0 %v1586
    %v2161 = vpop.f32.mrf.mxu0
    %v2162 = vadd.f32 %v2092, %v2161
    %v2163 = vpop.f32.mrf.mxu0
    %2164 = vdwg.mxu0
    %v2165 = vadd.f32 %v2162, %v1181
    %v2166 = vsel %vm1183, %v2165, -inf
    %2167 = vmax.xlane.f32.xlu0 %v2166
    %v2168 = vpop.xlane.xlu0 %2167
    %v2169 = vsub.f32 %v2165, %v2168
    %v2170 = vmul.f32 %v2169, 1.442695
    %v2171 = vpow.pop %v2170
    %v2172 = vsel %vm1183, %v2171, 0.0
    %2173 = vadd.xlane.f32.xlu0 %v2172
    %v2174 = vpop.xlane.xlu0 %2173
    %v2175 = vlog2.pop %v2174
    %v2176 = vmul.f32 %v2175, 0.6931472
    %v2177 = vadd.f32 %v2176, %v2168
    %v2178 = vsub.f32 %v2165, %v2177
    %v2181 = vunpack.c.l.s4 1966171168
    %v2182 = vunpack.c.0.s8 %v2181
    %v2183 = vlaneseq
    %v2184 = vshrl.u32 %v2183, 7
    %v2185 = vsub.s32 %v2182, %v2184
    %v2186 = vrot.slane %v2178, %v2185
    %v2187 = vcombine.high %v2186, %v2186
    %v2189 = vunpack.c.l.s4 1966171168
    %v2190 = vunpack.c.0.s8 %v2189
    %v2191 = vlaneseq
    %v2192 = vshrl.u32 %v2191, 7
    %v2193 = vsub.s32 %v2190, %v2192
    %v2194 = vrot.slane %v2186, %v2193
    %v2196 = vunpack.c.l.s4 1966171168
    %v2197 = vunpack.c.0.s8 %v2196
    %v2198 = vlaneseq
    %v2199 = vshrl.u32 %v2198, 7
    %v2200 = vsub.s32 %v2197, %v2199
    %v2201 = vrot.slane %v2187, %v2200
    %2204 = vst.msk [vmem:[%s2 + $0x1] sm:$0x1] %vm1222, %v2194
    %2205 = vst.msk [vmem:[%s2 + $0x9] sm:$0x1] %vm1222, %v2201
    %v2206 = vsel %vm1183, %v2178, -inf
    %2207 = vmax.xlane.f32.xlu0 %v2206
    %v2208 = vpop.xlane.xlu0 %2207
    %vm2209 = vcmp.eq.f32.partialorder %v2178, %v2208
    %v2210 = vsel %vm2209, %v221, 24
    %v2211 = vsel %vm1183, %v2210, 2147483647
    %v2212 = vand.u32 %v2211, 65535
    %v2213 = vshra.s32 %v2211, 16
    %v2214 = vcvt.s32.f32 %v2212
    %v2215 = vcvt.s32.f32 %v2213
    %2216 = vmin.xlane.f32.xlu0 %v2215
    %v2217 = vpop.xlane.xlu0 %2216
    %vm2218 = vcmp.eq.f32.partialorder %v2215, %v2217
    %v2219 = vsel %vm2218, %v2214, inf
    %2220 = vmin.xlane.f32.xlu0 %v2219
    %v2221 = vpop.xlane.xlu0 %2220
    %v2222 = vcvt.f32.s32 %v2221
    %v2223 = vcvt.f32.s32 %v2217
    %v2224 = vshll.u32 %v2223, 16
    %v2225 = vadd.s32 %v2224, %v2222
    %vm2226 = vcmp.eq.s32.totalorder %v221, %v2225
    %v2227 = vsel %vm2226, 1, 0
    %v2228 = vcvt.s32.f32 %v2227
    %v2229 = vld [vmem:[#allocation4] sm:$0xff]
    %v2230 = vld [vmem:[#allocation4 + $0x8] sm:$0xff]
    %v2231 = vld [vmem:[#allocation4 + $0x10] sm:$0xff]
    %v2232 = vld [vmem:[#allocation4 + $0x18] sm:$0xff]
    %v2233 = vld [vmem:[#allocation4 + $0x20] sm:$0xff]
    %v2234 = vld [vmem:[#allocation4 + $0x28] sm:$0xff]
    %v2235 = vld [vmem:[#allocation4 + $0x30] sm:$0xff]
    %v2236 = vld [vmem:[#allocation4 + $0x38] sm:$0xff]
    %v2237 = vld [vmem:[#allocation4 + $0x40] sm:$0xff]
    %v2238 = vld [vmem:[#allocation4 + $0x48] sm:$0xff]
    %v2239 = vld [vmem:[#allocation4 + $0x50] sm:$0xff]
    %v2240 = vld [vmem:[#allocation4 + $0x58] sm:$0xff]
    %v2241 = vld [vmem:[#allocation4 + $0x60] sm:$0xff]
    %v2242 = vld [vmem:[#allocation4 + $0x68] sm:$0xff]
    %v2243 = vld [vmem:[#allocation4 + $0x70] sm:$0xff]
    %v2244 = vld [vmem:[#allocation4 + $0x78] sm:$0xff]
    %v2245 = vld [vmem:[#allocation4 + $0x80] sm:$0xff]
    %v2246 = vld [vmem:[#allocation4 + $0x88] sm:$0xff]
    %v2247 = vld [vmem:[#allocation4 + $0x90] sm:$0xff]
    %v2248 = vld [vmem:[#allocation4 + $0x98] sm:$0xff]
    %2249 = vmatprep.subr.mxu0 0.0
    %2250 = vmatpush1.msra.mxu0 %v2244
    %2251 = vmatprep.subr.mxu0 0.0
    %2252 = vmatpush1.msra.mxu0 %v2243
    %2253 = vmatprep.subr.mxu0 0.0
    %2254 = vmatpush1.msra.mxu0 %v2242
    %2255 = vmatprep.subr.mxu0 0.0
    %2256 = vmatpush1.msra.mxu0 %v2241
    %2257 = vmatprep.subr.mxu0 0.0
    %2258 = vmatpush1.msra.mxu0 %v2240
    %2259 = vmatprep.subr.mxu0 0.0
    %2260 = vmatpush1.msra.mxu0 %v2239
    %2261 = vmatprep.subr.mxu0 0.0
    %2262 = vmatpush1.msra.mxu0 %v2238
    %2263 = vmatprep.subr.mxu0 0.0
    %2264 = vmatpush1.msra.mxu0 %v2237
    %2265 = vmatprep.subr.mxu0 0.0
    %2266 = vmatpush1.msra.mxu0 %v2236
    %2267 = vmatprep.subr.mxu0 0.0
    %2268 = vmatpush1.msra.mxu0 %v2235
    %2269 = vmatprep.subr.mxu0 0.0
    %2270 = vmatpush1.msra.mxu0 %v2234
    %2271 = vmatprep.subr.mxu0 0.0
    %2272 = vmatpush1.msra.mxu0 %v2233
    %2273 = vmatprep.subr.mxu0 0.0
    %2274 = vmatpush1.msra.mxu0 %v2232
    %2275 = vmatprep.subr.mxu0 0.0
    %2276 = vmatpush1.msra.mxu0 %v2231
    %2277 = vmatprep.subr.mxu0 0.0
    %2278 = vmatpush1.msra.mxu0 %v2230
    %2279 = vmatprep.subr.mxu0 0.0
    %2280 = vmatpush1.msra.mxu0 %v2229
    %2281 = vmatprep.subr.mxu0 0.0
    %2282 = vmatpush2.msra.mxu0 0.0
    %2283 = vmatprep.subr.mxu0 0.0
    %2284 = vmatpush2.msra.mxu0 0.0
    %2285 = vmatprep.subr.mxu0 0.0
    %2286 = vmatpush2.msra.mxu0 0.0
    %2287 = vmatprep.subr.mxu0 0.0
    %2288 = vmatpush2.msra.mxu0 0.0
    %2289 = vmatprep.subr.mxu0 0.0
    %2290 = vmatpush2.msra.mxu0 0.0
    %2291 = vmatprep.subr.mxu0 0.0
    %2292 = vmatpush2.msra.mxu0 0.0
    %2293 = vmatprep.subr.mxu0 0.0
    %2294 = vmatpush2.msra.mxu0 0.0
    %2295 = vmatprep.subr.mxu0 0.0
    %2296 = vmatpush2.msra.mxu0 0.0
    %2297 = vmatprep.subr.mxu0 0.0
    %2298 = vmatpush2.msra.mxu0 0.0
    %2299 = vmatprep.subr.mxu0 0.0
    %2300 = vmatpush2.msra.mxu0 0.0
    %2301 = vmatprep.subr.mxu0 0.0
    %2302 = vmatpush2.msra.mxu0 0.0
    %2303 = vmatprep.subr.mxu0 0.0
    %2304 = vmatpush2.msra.mxu0 0.0
    %2305 = vmatprep.subr.mxu0 0.0
    %2306 = vmatpush2.msra.mxu0 %v2248
    %2307 = vmatprep.subr.mxu0 0.0
    %2308 = vmatpush2.msra.mxu0 %v2247
    %2309 = vmatprep.subr.mxu0 0.0
    %2310 = vmatpush2.msra.mxu0 %v2246
    %2311 = vmatprep.subr.mxu0 0.0
    %2312 = vmatpush2.msra.mxu0 %v2245
    %2313 = vmatprep.mubr.f32.mxu0 %v2023
    %2314 = vmatmul.mubr.f32.gmra.mxu0 %v2228
    %v2315 = vpop.f32.mrf.mxu0
    %v2316 = vadd.f32 %v248, %v2315
    %v2317 = vpop.f32.mrf.mxu0
    %2318 = vdwg.mxu0
    %v2319 = vld [vmem:[#allocation4 + $0xa0] sm:$0xff]
    %v2320 = vld [vmem:[#allocation4 + $0xa8] sm:$0xff]
    %v2321 = vld [vmem:[#allocation4 + $0xb0] sm:$0xff]
    %v2322 = vld [vmem:[#allocation4 + $0xb8] sm:$0xff]
    %2323 = vmatprep.subr.mxu0 0.0
    %2324 = vmatpush1.msra.mxu0 0.0
    %2325 = vmatprep.subr.mxu0 0.0
    %2326 = vmatpush1.msra.mxu0 0.0
    %2327 = vmatprep.subr.mxu0 0.0
    %2328 = vmatpush1.msra.mxu0 0.0
    %2329 = vmatprep.subr.mxu0 0.0
    %2330 = vmatpush1.msra.mxu0 0.0
    %2331 = vmatprep.subr.mxu0 0.0
    %2332 = vmatpush1.msra.mxu0 0.0
    %2333 = vmatprep.subr.mxu0 0.0
    %2334 = vmatpush1.msra.mxu0 0.0
    %2335 = vmatprep.subr.mxu0 0.0
    %2336 = vmatpush1.msra.mxu0 0.0
    %2337 = vmatprep.subr.mxu0 0.0
    %2338 = vmatpush1.msra.mxu0 0.0
    %2339 = vmatprep.subr.mxu0 0.0
    %2340 = vmatpush1.msra.mxu0 0.0
    %2341 = vmatprep.subr.mxu0 0.0
    %2342 = vmatpush1.msra.mxu0 0.0
    %2343 = vmatprep.subr.mxu0 0.0
    %2344 = vmatpush1.msra.mxu0 0.0
    %2345 = vmatprep.subr.mxu0 0.0
    %2346 = vmatpush1.msra.mxu0 0.0
    %2347 = vmatprep.subr.mxu0 0.0
    %2348 = vmatpush1.msra.mxu0 %v2322
    %2349 = vmatprep.subr.mxu0 0.0
    %2350 = vmatpush1.msra.mxu0 %v2321
    %2351 = vmatprep.subr.mxu0 0.0
    %2352 = vmatpush1.msra.mxu0 %v2320
    %2353 = vmatprep.subr.mxu0 0.0
    %2354 = vmatpush1.msra.mxu0 %v2319
    %2355 = vmatprep.subr.mxu0 0.0
    %2356 = vmatpush2.msra.mxu0 0.0
    %2357 = vmatprep.subr.mxu0 0.0
    %2358 = vmatpush2.msra.mxu0 0.0
    %2359 = vmatprep.subr.mxu0 0.0
    %2360 = vmatpush2.msra.mxu0 0.0
    %2361 = vmatprep.subr.mxu0 0.0
    %2362 = vmatpush2.msra.mxu0 0.0
    %2363 = vmatprep.subr.mxu0 0.0
    %2364 = vmatpush2.msra.mxu0 0.0
    %2365 = vmatprep.subr.mxu0 0.0
    %2366 = vmatpush2.msra.mxu0 0.0
    %2367 = vmatprep.subr.mxu0 0.0
    %2368 = vmatpush2.msra.mxu0 0.0
    %2369 = vmatprep.subr.mxu0 0.0
    %2370 = vmatpush2.msra.mxu0 0.0
    %2371 = vmatprep.subr.mxu0 0.0
    %2372 = vmatpush2.msra.mxu0 0.0
    %2373 = vmatprep.subr.mxu0 0.0
    %2374 = vmatpush2.msra.mxu0 0.0
    %2375 = vmatprep.subr.mxu0 0.0
    %2376 = vmatpush2.msra.mxu0 0.0
    %2377 = vmatprep.subr.mxu0 0.0
    %2378 = vmatpush2.msra.mxu0 0.0
    %2379 = vmatprep.subr.mxu0 0.0
    %2380 = vmatpush2.msra.mxu0 0.0
    %2381 = vmatprep.subr.mxu0 0.0
    %2382 = vmatpush2.msra.mxu0 0.0
    %2383 = vmatprep.subr.mxu0 0.0
    %2384 = vmatpush2.msra.mxu0 0.0
    %2385 = vmatprep.subr.mxu0 0.0
    %2386 = vmatpush2.msra.mxu0 0.0
    %2387 = vmatprep.mubr.f32.mxu0 0.0
    %2388 = vmatmul.mubr.f32.gmra.mxu0 %v1586
    %v2389 = vpop.f32.mrf.mxu0
    %v2390 = vadd.f32 %v329, %v2389
    %v2391 = vpop.f32.mrf.mxu0
    %2392 = vdwg.mxu0
    %v2393 = vadd.f32 %v2316, %v2390
    %v2394 = vxor.u32 %v2393, 2147483648
    %v2395 = vmul.f32 %v2394, 1.442695
    %v2396 = vpow.pop %v2395
    %v2397 = vadd.f32 %v2396, 1.0
    %v2398 = vrcp.pop %v2397
    %v2399 = vmul.f32 1.0, %v2398
    %2401 = vrot.lane.b32.xlu0 %v2390, 64
    %v2402 = vpop.permute.xlu0 %2401
    %v2404 = vmul.f32 %v2399, %v2402
    %2406 = vrot.lane.b32.xlu0 %v2404, 64
    %v2407 = vpop.permute.xlu0 %2406
    %v2409 = vadd.f32 %v2316, %v2407
    %v2410 = vtanh.pop %v2409
    %v2411 = vsub.f32 1.0, %v2399
    %2413 = vrot.lane.b32.xlu0 %v2410, 96
    %v2414 = vpop.permute.xlu0 %2413
    %v2416 = vmul.f32 %v2411, %v2414
    %v2417 = vmul.f32 %v2399, %v1437
    %v2418 = vadd.f32 %v2416, %v2417
    %v2419 = vld [vmem:[#allocation4 + $0x140] sm:$0xff]
    %v2420 = vld [vmem:[#allocation4 + $0x148] sm:$0xff]
    %v2421 = vsel %vm760, %v1938, %v1849
    %v2422 = vsel %vm428, %v2421, 0
    %2424 = vmatprep.subr.mxu0 0.0
    %2425 = vmatpush1.msra.mxu0 0.0
    %2426 = vmatprep.subr.mxu0 0.0
    %2427 = vmatpush1.msra.mxu0 0.0
    %2428 = vmatprep.subr.mxu0 0.0
    %2429 = vmatpush1.msra.mxu0 0.0
    %2430 = vmatprep.subr.mxu0 0.0
    %2431 = vmatpush1.msra.mxu0 0.0
    %2432 = vmatprep.subr.mxu0 0.0
    %2433 = vmatpush1.msra.mxu0 0.0
    %2434 = vmatprep.subr.mxu0 0.0
    %2435 = vmatpush1.msra.mxu0 0.0
    %2436 = vmatprep.subr.mxu0 0.0
    %2437 = vmatpush1.msra.mxu0 0.0
    %2438 = vmatprep.subr.mxu0 0.0
    %2439 = vmatpush1.msra.mxu0 0.0
    %2440 = vmatprep.subr.mxu0 0.0
    %2441 = vmatpush1.msra.mxu0 0.0
    %2442 = vmatprep.subr.mxu0 0.0
    %2443 = vmatpush1.msra.mxu0 0.0
    %2444 = vmatprep.subr.mxu0 0.0
    %2445 = vmatpush1.msra.mxu0 0.0
    %2446 = vmatprep.subr.mxu0 0.0
    %2447 = vmatpush1.msra.mxu0 0.0
    %2448 = vmatprep.subr.mxu0 0.0
    %2449 = vmatpush1.msra.mxu0 0.0
    %2450 = vmatprep.subr.mxu0 0.0
    %2451 = vmatpush1.msra.mxu0 0.0
    %2452 = vmatprep.subr.mxu0 0.0
    %2453 = vmatpush1.msra.mxu0 %v2420
    %2454 = vmatprep.subr.mxu0 0.0
    %2455 = vmatpush1.msra.mxu0 %v2419
    %2456 = vmatprep.subr.mxu0 0.0
    %2457 = vmatpush2.msra.mxu0 0.0
    %2458 = vmatprep.subr.mxu0 0.0
    %2459 = vmatpush2.msra.mxu0 0.0
    %2460 = vmatprep.subr.mxu0 0.0
    %2461 = vmatpush2.msra.mxu0 0.0
    %2462 = vmatprep.subr.mxu0 0.0
    %2463 = vmatpush2.msra.mxu0 0.0
    %2464 = vmatprep.subr.mxu0 0.0
    %2465 = vmatpush2.msra.mxu0 0.0
    %2466 = vmatprep.subr.mxu0 0.0
    %2467 = vmatpush2.msra.mxu0 0.0
    %2468 = vmatprep.subr.mxu0 0.0
    %2469 = vmatpush2.msra.mxu0 0.0
    %2470 = vmatprep.subr.mxu0 0.0
    %2471 = vmatpush2.msra.mxu0 0.0
    %2472 = vmatprep.subr.mxu0 0.0
    %2473 = vmatpush2.msra.mxu0 0.0
    %2474 = vmatprep.subr.mxu0 0.0
    %2475 = vmatpush2.msra.mxu0 0.0
    %2476 = vmatprep.subr.mxu0 0.0
    %2477 = vmatpush2.msra.mxu0 0.0
    %2478 = vmatprep.subr.mxu0 0.0
    %2479 = vmatpush2.msra.mxu0 0.0
    %2480 = vmatprep.subr.mxu0 0.0
    %2481 = vmatpush2.msra.mxu0 0.0
    %2482 = vmatprep.subr.mxu0 0.0
    %2483 = vmatpush2.msra.mxu0 0.0
    %2484 = vmatprep.subr.mxu0 0.0
    %2485 = vmatpush2.msra.mxu0 0.0
    %2486 = vmatprep.subr.mxu0 0.0
    %2487 = vmatpush2.msra.mxu0 0.0
    %2488 = vmatprep.mubr.f32.mxu0 0.0
    %2489 = vmatmul.mubr.f32.gmra.mxu0 %v2422
    %v2490 = vpop.f32.mrf.mxu0
    %v2491 = vadd.f32 0.0, %v2490
    %v2492 = vpop.f32.mrf.mxu0
    %2493 = vdwg.mxu0
    %v2494 = vlaneseq
    %v2495 = vshrl.u32 %v2494, 7
    %v2496 = vsub.s32 0, %v2495
    %v2497 = vrot.slane %v2491, %v2496
    %2499 = vbcast.lane.b32.xlu0 %v2497, 256
    %v2500 = vpop.permute.xlu0 %2499
    %s2502 = sor.u32 256, 8
    %2503 = vbcast.lane.b32.xlu0 %v2497, %s2502
    %v2504 = vpop.permute.xlu0 %2503
    %v2505 = vlaneseq
    %v2506 = vshrl.u32 %v2505, 7
    %v2507 = vsub.s32 1, %v2506
    %v2508 = vrot.slane %v2491, %v2507
    %2510 = vbcast.lane.b32.xlu0 %v2508, 256
    %v2511 = vpop.permute.xlu0 %2510
    %s2513 = sor.u32 256, 8
    %2514 = vbcast.lane.b32.xlu0 %v2508, %s2513
    %v2515 = vpop.permute.xlu0 %2514
    %v2516 = vmul.f32 %v2500, %v526
    %v2517 = vmul.f32 %v2504, %v526
    %v2518 = vmul.f32 %v2511, %v526
    %v2519 = vmul.f32 %v2515, %v526
    %v2524 = vmul.f32 %v1837, %v534
    %v2525 = vmul.f32 %v1840, %v534
    %v2526 = vmul.f32 %v1926, %v534
    %v2527 = vmul.f32 %v1929, %v534
    %v2528 = vadd.f32 %v2516, %v2524
    %v2529 = vadd.f32 %v2517, %v2525
    %v2530 = vadd.f32 %v2518, %v2526
    %v2531 = vadd.f32 %v2519, %v2527
    %s2533 = sor.u32 256, 16
    %2534 = vbcast.lane.b32.xlu0 %v2497, %s2533
    %v2535 = vpop.permute.xlu0 %2534
    %s2537 = sor.u32 256, 24
    %2538 = vbcast.lane.b32.xlu0 %v2497, %s2537
    %v2539 = vpop.permute.xlu0 %2538
    %s2541 = sor.u32 256, 16
    %2542 = vbcast.lane.b32.xlu0 %v2508, %s2541
    %v2543 = vpop.permute.xlu0 %2542
    %s2545 = sor.u32 256, 24
    %2546 = vbcast.lane.b32.xlu0 %v2508, %s2545
    %v2547 = vpop.permute.xlu0 %2546
    %v2548 = vmul.f32 %v2535, %v559
    %v2549 = vmul.f32 %v2539, %v559
    %v2550 = vmul.f32 %v2543, %v559
    %v2551 = vmul.f32 %v2547, %v559
    %v2552 = vadd.f32 %v2528, %v2548
    %v2553 = vadd.f32 %v2529, %v2549
    %v2554 = vadd.f32 %v2530, %v2550
    %v2555 = vadd.f32 %v2531, %v2551
    %v2556 = vadd.f32 %v2552, %v571
    %v2557 = vadd.f32 %v2553, %v571
    %v2558 = vadd.f32 %v2554, %v571
    %v2559 = vadd.f32 %v2555, %v571
    %v2560 = vld [vmem:[#allocation4 + $0x100] sm:$0xff]
    %v2561 = vld [vmem:[#allocation4 + $0x108] sm:$0xff]
    %v2562 = vld [vmem:[#allocation4 + $0x110] sm:$0xff]
    %v2563 = vld [vmem:[#allocation4 + $0x118] sm:$0xff]
    %2565 = vrot.lane.b32.xlu0 %v2418, 96
    %v2566 = vpop.permute.xlu0 %2565
    %v2567 = vsel %vm57, %v2566, 0
    %2569 = vmatprep.subr.mxu0 0.0
    %2570 = vmatpush1.msra.mxu0 0.0
    %2571 = vmatprep.subr.mxu0 0.0
    %2572 = vmatpush1.msra.mxu0 0.0
    %2573 = vmatprep.subr.mxu0 0.0
    %2574 = vmatpush1.msra.mxu0 0.0
    %2575 = vmatprep.subr.mxu0 0.0
    %2576 = vmatpush1.msra.mxu0 0.0
    %2577 = vmatprep.subr.mxu0 0.0
    %2578 = vmatpush1.msra.mxu0 0.0
    %2579 = vmatprep.subr.mxu0 0.0
    %2580 = vmatpush1.msra.mxu0 0.0
    %2581 = vmatprep.subr.mxu0 0.0
    %2582 = vmatpush1.msra.mxu0 0.0
    %2583 = vmatprep.subr.mxu0 0.0
    %2584 = vmatpush1.msra.mxu0 0.0
    %2585 = vmatprep.subr.mxu0 0.0
    %2586 = vmatpush1.msra.mxu0 0.0
    %2587 = vmatprep.subr.mxu0 0.0
    %2588 = vmatpush1.msra.mxu0 0.0
    %2589 = vmatprep.subr.mxu0 0.0
    %2590 = vmatpush1.msra.mxu0 0.0
    %2591 = vmatprep.subr.mxu0 0.0
    %2592 = vmatpush1.msra.mxu0 0.0
    %2593 = vmatprep.subr.mxu0 0.0
    %2594 = vmatpush1.msra.mxu0 %v2563
    %2595 = vmatprep.subr.mxu0 0.0
    %2596 = vmatpush1.msra.mxu0 %v2562
    %2597 = vmatprep.subr.mxu0 0.0
    %2598 = vmatpush1.msra.mxu0 %v2561
    %2599 = vmatprep.subr.mxu0 0.0
    %2600 = vmatpush1.msra.mxu0 %v2560
    %2601 = vmatprep.subr.mxu0 0.0
    %2602 = vmatpush2.msra.mxu0 0.0
    %2603 = vmatprep.subr.mxu0 0.0
    %2604 = vmatpush2.msra.mxu0 0.0
    %2605 = vmatprep.subr.mxu0 0.0
    %2606 = vmatpush2.msra.mxu0 0.0
    %2607 = vmatprep.subr.mxu0 0.0
    %2608 = vmatpush2.msra.mxu0 0.0
    %2609 = vmatprep.subr.mxu0 0.0
    %2610 = vmatpush2.msra.mxu0 0.0
    %2611 = vmatprep.subr.mxu0 0.0
    %2612 = vmatpush2.msra.mxu0 0.0
    %2613 = vmatprep.subr.mxu0 0.0
    %2614 = vmatpush2.msra.mxu0 0.0
    %2615 = vmatprep.subr.mxu0 0.0
    %2616 = vmatpush2.msra.mxu0 0.0
    %2617 = vmatprep.subr.mxu0 0.0
    %2618 = vmatpush2.msra.mxu0 0.0
    %2619 = vmatprep.subr.mxu0 0.0
    %2620 = vmatpush2.msra.mxu0 0.0
    %2621 = vmatprep.subr.mxu0 0.0
    %2622 = vmatpush2.msra.mxu0 0.0
    %2623 = vmatprep.subr.mxu0 0.0
    %2624 = vmatpush2.msra.mxu0 0.0
    %2625 = vmatprep.subr.mxu0 0.0
    %2626 = vmatpush2.msra.mxu0 0.0
    %2627 = vmatprep.subr.mxu0 0.0
    %2628 = vmatpush2.msra.mxu0 0.0
    %2629 = vmatprep.subr.mxu0 0.0
    %2630 = vmatpush2.msra.mxu0 0.0
    %2631 = vmatprep.subr.mxu0 0.0
    %2632 = vmatpush2.msra.mxu0 0.0
    %2633 = vmatprep.mubr.f32.mxu0 0.0
    %2634 = vmatmul.mubr.f32.gmra.mxu0 %v2567
    %v2635 = vpop.f32.mrf.mxu0
    %v2636 = vadd.f32 0.0, %v2635
    %v2637 = vpop.f32.mrf.mxu0
    %2638 = vdwg.mxu0
    %v2641 = vunpack.c.l.s4 1966171168
    %v2642 = vunpack.c.0.s8 %v2641
    %v2643 = vlaneseq
    %v2644 = vshrl.u32 %v2643, 7
    %v2645 = vsub.s32 %v2642, %v2644
    %v2646 = vrot.slane %v2636, %v2645
    %v2647 = vcombine.high %v2646, %v2646
    %v2649 = vunpack.c.l.s4 1966171168
    %v2650 = vunpack.c.0.s8 %v2649
    %v2651 = vlaneseq
    %v2652 = vshrl.u32 %v2651, 7
    %v2653 = vsub.s32 %v2650, %v2652
    %v2654 = vrot.slane %v2646, %v2653
    %v2656 = vunpack.c.l.s4 1966171168
    %v2657 = vunpack.c.0.s8 %v2656
    %v2658 = vlaneseq
    %v2659 = vshrl.u32 %v2658, 7
    %v2660 = vsub.s32 %v2657, %v2659
    %v2661 = vrot.slane %v2647, %v2660
    %v2662 = vlaneseq
    %v2663 = vshrl.u32 %v2662, 7
    %v2664 = vsub.s32 0, %v2663
    %v2665 = vrot.slane %v2654, %v2664
    %v2666 = vlaneseq
    %v2667 = vshrl.u32 %v2666, 7
    %v2668 = vsub.s32 0, %v2667
    %v2669 = vrot.slane %v2661, %v2668
    %v2672 = vadd.f32 %v2665, %v131
    %v2673 = vadd.f32 %v2665, %v136
    %v2674 = vadd.f32 %v2669, %v212
    %v2675 = vadd.f32 %v2669, %v217
    %v2676 = vadd.f32 %v2672, %v2556
    %v2677 = vadd.f32 %v2673, %v2557
    %v2678 = vadd.f32 %v2674, %v2558
    %v2679 = vadd.f32 %v2675, %v2559
    %v2680 = vadd.f32 %v2676, %v699
    %v2681 = vadd.f32 %v2677, %v699
    %v2682 = vadd.f32 %v2678, %v699
    %v2683 = vadd.f32 %v2679, %v699
    %v2684 = vtanh.pop %v2680
    %v2685 = vtanh.pop %v2681
    %v2686 = vtanh.pop %v2682
    %v2687 = vtanh.pop %v2683
    %v2688 = vmul.f32 %v2684, %v711
    %v2689 = vmul.f32 %v2685, %v711
    %v2690 = vmul.f32 %v2686, %v711
    %v2691 = vmul.f32 %v2687, %v711
    %v2692 = vsel %vm57, %v2688, 0.0
    %2693 = vadd.xlane.f32.xlu0 %v2692
    %v2694 = vpop.xlane.xlu0 %2693
    %v2695 = vsel %vm57, %v2689, 0.0
    %2696 = vadd.xlane.f32.xlu0 %v2695
    %v2697 = vpop.xlane.xlu0 %2696
    %v2698 = vsel %vm57, %v2690, 0.0
    %2699 = vadd.xlane.f32.xlu0 %v2698
    %v2700 = vpop.xlane.xlu0 %2699
    %v2701 = vsel %vm57, %v2691, 0.0
    %2702 = vadd.xlane.f32.xlu0 %v2701
    %v2703 = vpop.xlane.xlu0 %2702
    %v2704 = vadd.f32 %v2694, %v730
    %v2705 = vadd.f32 %v2697, %v730
    %v2706 = vadd.f32 %v2700, %v730
    %v2707 = vadd.f32 %v2703, %v730
    %v2712 = vlaneseq
    %v2713 = vshrl.u32 %v2712, 7
    %v2714 = vsub.s32 %v221, %v2713
    %v2715 = vrot.slane %v2704, %v2714
    %v2716 = vlaneseq
    %v2717 = vshrl.u32 %v2716, 7
    %v2718 = vsub.s32 %v744, %v2717
    %v2719 = vrot.slane %v2705, %v2718
    %v2720 = vsel %vm749, %v2719, %v2715
    %v2721 = vlaneseq
    %v2722 = vshrl.u32 %v2721, 7
    %v2723 = vsub.s32 %v221, %v2722
    %v2724 = vrot.slane %v2706, %v2723
    %v2725 = vlaneseq
    %v2726 = vshrl.u32 %v2725, 7
    %v2727 = vsub.s32 %v744, %v2726
    %v2728 = vrot.slane %v2707, %v2727
    %v2729 = vsel %vm749, %v2728, %v2724
    %v2730 = vsel %vm760, %v2729, %v2720
    %v2732 = vsel %vm763, %v2730, -inf
    %2733 = vmax.xlane.f32.xlu0 %v2732
    %v2734 = vpop.xlane.xlu0 %2733
    %v2736 = vlaneseq
    %v2737 = vshrl.u32 %v2736, 7
    %v2738 = vsub.s32 0, %v2737
    %v2739 = vrot.slane %v2734, %v2738
    %v2740 = vlaneseq
    %v2741 = vshrl.u32 %v2740, 7
    %v2742 = vsub.s32 1, %v2741
    %v2743 = vrot.slane %v2734, %v2742
    %v2746 = vsub.f32 %v2704, %v2739
    %v2747 = vsub.f32 %v2705, %v2739
    %v2748 = vsub.f32 %v2706, %v2743
    %v2749 = vsub.f32 %v2707, %v2743
    %v2750 = vmul.f32 %v2746, 1.442695
    %v2751 = vpow.pop %v2750
    %v2752 = vmul.f32 %v2747, 1.442695
    %v2753 = vpow.pop %v2752
    %v2754 = vmul.f32 %v2748, 1.442695
    %v2755 = vpow.pop %v2754
    %v2756 = vmul.f32 %v2749, 1.442695
    %v2757 = vpow.pop %v2756
    %2762 = vset.pattern.permute.xlu0 0
    %2763 = vperm.xlu0 %2762, %v2751
    %v2764 = vpop.permute.xlu0 %2763
    %2765 = vset.pattern.permute.xlu0 0
    %2766 = vperm.xlu0 %2765, %v2753
    %v2767 = vpop.permute.xlu0 %2766
    %2768 = vset.pattern.permute.xlu0 0
    %2769 = vperm.xlu0 %2768, %v2755
    %v2770 = vpop.permute.xlu0 %2769
    %2771 = vset.pattern.permute.xlu0 0
    %2772 = vperm.xlu0 %2771, %v2757
    %v2773 = vpop.permute.xlu0 %2772
    %v2774 = vlaneseq
    %v2775 = vshrl.u32 %v2774, 7
    %v2776 = vsub.s32 %v221, %v2775
    %v2777 = vrot.slane %v2764, %v2776
    %v2778 = vlaneseq
    %v2779 = vshrl.u32 %v2778, 7
    %v2780 = vsub.s32 %v744, %v2779
    %v2781 = vrot.slane %v2767, %v2780
    %v2782 = vsel %vm749, %v2781, %v2777
    %v2783 = vlaneseq
    %v2784 = vshrl.u32 %v2783, 7
    %v2785 = vsub.s32 %v221, %v2784
    %v2786 = vrot.slane %v2770, %v2785
    %v2787 = vlaneseq
    %v2788 = vshrl.u32 %v2787, 7
    %v2789 = vsub.s32 %v744, %v2788
    %v2790 = vrot.slane %v2773, %v2789
    %v2791 = vsel %vm749, %v2790, %v2786
    %v2792 = vsel %vm760, %v2791, %v2782
    %v2794 = vsel %vm763, %v2792, 0.0
    %2795 = vadd.xlane.f32.xlu0 %v2794
    %v2796 = vpop.xlane.xlu0 %2795
    %v2798 = vlaneseq
    %v2799 = vshrl.u32 %v2798, 7
    %v2800 = vsub.s32 0, %v2799
    %v2801 = vrot.slane %v2796, %v2800
    %v2802 = vlaneseq
    %v2803 = vshrl.u32 %v2802, 7
    %v2804 = vsub.s32 1, %v2803
    %v2805 = vrot.slane %v2796, %v2804
    %v2808 = vrcp.pop %v2801
    %v2809 = vmul.f32 %v2751, %v2808
    %v2810 = vmul.f32 %v2753, %v2808
    %v2811 = vrcp.pop %v2805
    %v2812 = vmul.f32 %v2755, %v2811
    %v2813 = vmul.f32 %v2757, %v2811
    %2816 = vset.pattern.permute.xlu0 0
    %2817 = vperm.xlu0 %2816, %v2809
    %v2818 = vpop.permute.xlu0 %2817
    %2819 = vset.pattern.permute.xlu0 0
    %2820 = vperm.xlu0 %2819, %v2810
    %v2821 = vpop.permute.xlu0 %2820
    %v2822 = vlaneseq
    %v2823 = vshrl.u32 %v2822, 7
    %v2824 = vsub.s32 %v221, %v2823
    %v2825 = vrot.slane %v2818, %v2824
    %v2826 = vlaneseq
    %v2827 = vshrl.u32 %v2826, 7
    %v2828 = vsub.s32 %v744, %v2827
    %v2829 = vrot.slane %v2821, %v2828
    %v2830 = vsel %vm749, %v2829, %v2825
    %v2831 = vsel %vm428, %v2830, 0
    %2833 = vmatprep.subr.mxu0 0.0
    %2834 = vmatpush1.msra.mxu0 0.0
    %2835 = vmatprep.subr.mxu0 0.0
    %2836 = vmatpush1.msra.mxu0 0.0
    %2837 = vmatprep.subr.mxu0 0.0
    %2838 = vmatpush1.msra.mxu0 0.0
    %2839 = vmatprep.subr.mxu0 0.0
    %2840 = vmatpush1.msra.mxu0 0.0
    %2841 = vmatprep.subr.mxu0 0.0
    %2842 = vmatpush1.msra.mxu0 0.0
    %2843 = vmatprep.subr.mxu0 0.0
    %2844 = vmatpush1.msra.mxu0 0.0
    %2845 = vmatprep.subr.mxu0 0.0
    %2846 = vmatpush1.msra.mxu0 0.0
    %2847 = vmatprep.subr.mxu0 0.0
    %2848 = vmatpush1.msra.mxu0 0.0
    %2849 = vmatprep.subr.mxu0 0.0
    %2850 = vmatpush1.msra.mxu0 0.0
    %2851 = vmatprep.subr.mxu0 0.0
    %2852 = vmatpush1.msra.mxu0 0.0
    %2853 = vmatprep.subr.mxu0 0.0
    %2854 = vmatpush1.msra.mxu0 0.0
    %2855 = vmatprep.subr.mxu0 0.0
    %2856 = vmatpush1.msra.mxu0 0.0
    %2857 = vmatprep.subr.mxu0 0.0
    %2858 = vmatpush1.msra.mxu0 0.0
    %2859 = vmatprep.subr.mxu0 0.0
    %2860 = vmatpush1.msra.mxu0 0.0
    %2861 = vmatprep.subr.mxu0 0.0
    %2862 = vmatpush1.msra.mxu0 %v50
    %2863 = vmatprep.subr.mxu0 0.0
    %2864 = vmatpush1.msra.mxu0 %v49
    %2865 = vmatprep.subr.mxu0 0.0
    %2866 = vmatpush2.msra.mxu0 0.0
    %2867 = vmatprep.subr.mxu0 0.0
    %2868 = vmatpush2.msra.mxu0 0.0
    %2869 = vmatprep.subr.mxu0 0.0
    %2870 = vmatpush2.msra.mxu0 0.0
    %2871 = vmatprep.subr.mxu0 0.0
    %2872 = vmatpush2.msra.mxu0 0.0
    %2873 = vmatprep.subr.mxu0 0.0
    %2874 = vmatpush2.msra.mxu0 0.0
    %2875 = vmatprep.subr.mxu0 0.0
    %2876 = vmatpush2.msra.mxu0 0.0
    %2877 = vmatprep.subr.mxu0 0.0
    %2878 = vmatpush2.msra.mxu0 0.0
    %2879 = vmatprep.subr.mxu0 0.0
    %2880 = vmatpush2.msra.mxu0 0.0
    %2881 = vmatprep.subr.mxu0 0.0
    %2882 = vmatpush2.msra.mxu0 0.0
    %2883 = vmatprep.subr.mxu0 0.0
    %2884 = vmatpush2.msra.mxu0 0.0
    %2885 = vmatprep.subr.mxu0 0.0
    %2886 = vmatpush2.msra.mxu0 0.0
    %2887 = vmatprep.subr.mxu0 0.0
    %2888 = vmatpush2.msra.mxu0 0.0
    %2889 = vmatprep.subr.mxu0 0.0
    %2890 = vmatpush2.msra.mxu0 0.0
    %2891 = vmatprep.subr.mxu0 0.0
    %2892 = vmatpush2.msra.mxu0 0.0
    %2893 = vmatprep.subr.mxu0 0.0
    %2894 = vmatpush2.msra.mxu0 0.0
    %2895 = vmatprep.subr.mxu0 0.0
    %2896 = vmatpush2.msra.mxu0 0.0
    %2897 = vmatprep.mubr.f32.mxu0 0.0
    %2898 = vmatmul.mubr.f32.gmra.mxu0 %v2831
    %v2899 = vpop.f32.mrf.mxu0
    %v2900 = vadd.f32 0.0, %v2899
    %v2901 = vpop.f32.mrf.mxu0
    %2902 = vdwg.mxu0
    %2905 = vset.pattern.permute.xlu0 0
    %2906 = vperm.xlu0 %2905, %v2812
    %v2907 = vpop.permute.xlu0 %2906
    %2908 = vset.pattern.permute.xlu0 0
    %2909 = vperm.xlu0 %2908, %v2813
    %v2910 = vpop.permute.xlu0 %2909
    %v2911 = vlaneseq
    %v2912 = vshrl.u32 %v2911, 7
    %v2913 = vsub.s32 %v221, %v2912
    %v2914 = vrot.slane %v2907, %v2913
    %v2915 = vlaneseq
    %v2916 = vshrl.u32 %v2915, 7
    %v2917 = vsub.s32 %v744, %v2916
    %v2918 = vrot.slane %v2910, %v2917
    %v2919 = vsel %vm749, %v2918, %v2914
    %v2920 = vsel %vm428, %v2919, 0
    %2922 = vmatprep.subr.mxu0 0.0
    %2923 = vmatpush1.msra.mxu0 0.0
    %2924 = vmatprep.subr.mxu0 0.0
    %2925 = vmatpush1.msra.mxu0 0.0
    %2926 = vmatprep.subr.mxu0 0.0
    %2927 = vmatpush1.msra.mxu0 0.0
    %2928 = vmatprep.subr.mxu0 0.0
    %2929 = vmatpush1.msra.mxu0 0.0
    %2930 = vmatprep.subr.mxu0 0.0
    %2931 = vmatpush1.msra.mxu0 0.0
    %2932 = vmatprep.subr.mxu0 0.0
    %2933 = vmatpush1.msra.mxu0 0.0
    %2934 = vmatprep.subr.mxu0 0.0
    %2935 = vmatpush1.msra.mxu0 0.0
    %2936 = vmatprep.subr.mxu0 0.0
    %2937 = vmatpush1.msra.mxu0 0.0
    %2938 = vmatprep.subr.mxu0 0.0
    %2939 = vmatpush1.msra.mxu0 0.0
    %2940 = vmatprep.subr.mxu0 0.0
    %2941 = vmatpush1.msra.mxu0 0.0
    %2942 = vmatprep.subr.mxu0 0.0
    %2943 = vmatpush1.msra.mxu0 0.0
    %2944 = vmatprep.subr.mxu0 0.0
    %2945 = vmatpush1.msra.mxu0 0.0
    %2946 = vmatprep.subr.mxu0 0.0
    %2947 = vmatpush1.msra.mxu0 0.0
    %2948 = vmatprep.subr.mxu0 0.0
    %2949 = vmatpush1.msra.mxu0 0.0
    %2950 = vmatprep.subr.mxu0 0.0
    %2951 = vmatpush1.msra.mxu0 %v52
    %2952 = vmatprep.subr.mxu0 0.0
    %2953 = vmatpush1.msra.mxu0 %v51
    %2954 = vmatprep.subr.mxu0 0.0
    %2955 = vmatpush2.msra.mxu0 0.0
    %2956 = vmatprep.subr.mxu0 0.0
    %2957 = vmatpush2.msra.mxu0 0.0
    %2958 = vmatprep.subr.mxu0 0.0
    %2959 = vmatpush2.msra.mxu0 0.0
    %2960 = vmatprep.subr.mxu0 0.0
    %2961 = vmatpush2.msra.mxu0 0.0
    %2962 = vmatprep.subr.mxu0 0.0
    %2963 = vmatpush2.msra.mxu0 0.0
    %2964 = vmatprep.subr.mxu0 0.0
    %2965 = vmatpush2.msra.mxu0 0.0
    %2966 = vmatprep.subr.mxu0 0.0
    %2967 = vmatpush2.msra.mxu0 0.0
    %2968 = vmatprep.subr.mxu0 0.0
    %2969 = vmatpush2.msra.mxu0 0.0
    %2970 = vmatprep.subr.mxu0 0.0
    %2971 = vmatpush2.msra.mxu0 0.0
    %2972 = vmatprep.subr.mxu0 0.0
    %2973 = vmatpush2.msra.mxu0 0.0
    %2974 = vmatprep.subr.mxu0 0.0
    %2975 = vmatpush2.msra.mxu0 0.0
    %2976 = vmatprep.subr.mxu0 0.0
    %2977 = vmatpush2.msra.mxu0 0.0
    %2978 = vmatprep.subr.mxu0 0.0
    %2979 = vmatpush2.msra.mxu0 0.0
    %2980 = vmatprep.subr.mxu0 0.0
    %2981 = vmatpush2.msra.mxu0 0.0
    %2982 = vmatprep.subr.mxu0 0.0
    %2983 = vmatpush2.msra.mxu0 0.0
    %2984 = vmatprep.subr.mxu0 0.0
    %2985 = vmatpush2.msra.mxu0 0.0
    %2986 = vmatprep.mubr.f32.mxu0 0.0
    %2987 = vmatmul.mubr.f32.gmra.mxu0 %v2920
    %v2988 = vpop.f32.mrf.mxu0
    %v2989 = vadd.f32 0.0, %v2988
    %v2990 = vpop.f32.mrf.mxu0
    %2991 = vdwg.mxu0
    %v2992 = vld [vmem:[#allocation4 + $0xc0] sm:$0xff]
    %v2993 = vld [vmem:[#allocation4 + $0xc8] sm:$0xff]
    %v2994 = vld [vmem:[#allocation4 + $0xd0] sm:$0xff]
    %v2995 = vld [vmem:[#allocation4 + $0xd8] sm:$0xff]
    %v2996 = vld [vmem:[#allocation4 + $0xe0] sm:$0xff]
    %v2997 = vld [vmem:[#allocation4 + $0xe8] sm:$0xff]
    %v2998 = vld [vmem:[#allocation4 + $0xf0] sm:$0xff]
    %v2999 = vld [vmem:[#allocation4 + $0xf8] sm:$0xff]
    %v3002 = vrot.slane %v2989, 7
    %v3003 = vsel %vm760, %v3002, %v2900
    %v3004 = vsel %vm57, %v3003, 0
    %3006 = vmatprep.subr.mxu0 0.0
    %3007 = vmatpush1.msra.mxu0 0.0
    %3008 = vmatprep.subr.mxu0 0.0
    %3009 = vmatpush1.msra.mxu0 0.0
    %3010 = vmatprep.subr.mxu0 0.0
    %3011 = vmatpush1.msra.mxu0 0.0
    %3012 = vmatprep.subr.mxu0 0.0
    %3013 = vmatpush1.msra.mxu0 0.0
    %3014 = vmatprep.subr.mxu0 0.0
    %3015 = vmatpush1.msra.mxu0 0.0
    %3016 = vmatprep.subr.mxu0 0.0
    %3017 = vmatpush1.msra.mxu0 0.0
    %3018 = vmatprep.subr.mxu0 0.0
    %3019 = vmatpush1.msra.mxu0 0.0
    %3020 = vmatprep.subr.mxu0 0.0
    %3021 = vmatpush1.msra.mxu0 0.0
    %3022 = vmatprep.subr.mxu0 0.0
    %3023 = vmatpush1.msra.mxu0 0.0
    %3024 = vmatprep.subr.mxu0 0.0
    %3025 = vmatpush1.msra.mxu0 0.0
    %3026 = vmatprep.subr.mxu0 0.0
    %3027 = vmatpush1.msra.mxu0 0.0
    %3028 = vmatprep.subr.mxu0 0.0
    %3029 = vmatpush1.msra.mxu0 0.0
    %3030 = vmatprep.subr.mxu0 0.0
    %3031 = vmatpush1.msra.mxu0 %v2999
    %3032 = vmatprep.subr.mxu0 0.0
    %3033 = vmatpush1.msra.mxu0 %v2998
    %3034 = vmatprep.subr.mxu0 0.0
    %3035 = vmatpush1.msra.mxu0 %v2997
    %3036 = vmatprep.subr.mxu0 0.0
    %3037 = vmatpush1.msra.mxu0 %v2996
    %3038 = vmatprep.subr.mxu0 0.0
    %3039 = vmatpush2.msra.mxu0 0.0
    %3040 = vmatprep.subr.mxu0 0.0
    %3041 = vmatpush2.msra.mxu0 0.0
    %3042 = vmatprep.subr.mxu0 0.0
    %3043 = vmatpush2.msra.mxu0 0.0
    %3044 = vmatprep.subr.mxu0 0.0
    %3045 = vmatpush2.msra.mxu0 0.0
    %3046 = vmatprep.subr.mxu0 0.0
    %3047 = vmatpush2.msra.mxu0 0.0
    %3048 = vmatprep.subr.mxu0 0.0
    %3049 = vmatpush2.msra.mxu0 0.0
    %3050 = vmatprep.subr.mxu0 0.0
    %3051 = vmatpush2.msra.mxu0 0.0
    %3052 = vmatprep.subr.mxu0 0.0
    %3053 = vmatpush2.msra.mxu0 0.0
    %3054 = vmatprep.subr.mxu0 0.0
    %3055 = vmatpush2.msra.mxu0 0.0
    %3056 = vmatprep.subr.mxu0 0.0
    %3057 = vmatpush2.msra.mxu0 0.0
    %3058 = vmatprep.subr.mxu0 0.0
    %3059 = vmatpush2.msra.mxu0 0.0
    %3060 = vmatprep.subr.mxu0 0.0
    %3061 = vmatpush2.msra.mxu0 0.0
    %3062 = vmatprep.subr.mxu0 0.0
    %3063 = vmatpush2.msra.mxu0 0.0
    %3064 = vmatprep.subr.mxu0 0.0
    %3065 = vmatpush2.msra.mxu0 0.0
    %3066 = vmatprep.subr.mxu0 0.0
    %3067 = vmatpush2.msra.mxu0 0.0
    %3068 = vmatprep.subr.mxu0 0.0
    %3069 = vmatpush2.msra.mxu0 0.0
    %3070 = vmatprep.mubr.f32.mxu0 0.0
    %3071 = vmatmul.mubr.f32.gmra.mxu0 %v3004
    %v3072 = vpop.f32.mrf.mxu0
    %v3073 = vadd.f32 0.0, %v3072
    %v3074 = vpop.f32.mrf.mxu0
    %3075 = vdwg.mxu0
    %3076 = vmatprep.subr.mxu0 0.0
    %3077 = vmatpush1.msra.mxu0 0.0
    %3078 = vmatprep.subr.mxu0 0.0
    %3079 = vmatpush1.msra.mxu0 0.0
    %3080 = vmatprep.subr.mxu0 0.0
    %3081 = vmatpush1.msra.mxu0 0.0
    %3082 = vmatprep.subr.mxu0 0.0
    %3083 = vmatpush1.msra.mxu0 0.0
    %3084 = vmatprep.subr.mxu0 0.0
    %3085 = vmatpush1.msra.mxu0 0.0
    %3086 = vmatprep.subr.mxu0 0.0
    %3087 = vmatpush1.msra.mxu0 0.0
    %3088 = vmatprep.subr.mxu0 0.0
    %3089 = vmatpush1.msra.mxu0 0.0
    %3090 = vmatprep.subr.mxu0 0.0
    %3091 = vmatpush1.msra.mxu0 0.0
    %3092 = vmatprep.subr.mxu0 0.0
    %3093 = vmatpush1.msra.mxu0 0.0
    %3094 = vmatprep.subr.mxu0 0.0
    %3095 = vmatpush1.msra.mxu0 0.0
    %3096 = vmatprep.subr.mxu0 0.0
    %3097 = vmatpush1.msra.mxu0 0.0
    %3098 = vmatprep.subr.mxu0 0.0
    %3099 = vmatpush1.msra.mxu0 0.0
    %3100 = vmatprep.subr.mxu0 0.0
    %3101 = vmatpush1.msra.mxu0 %v2995
    %3102 = vmatprep.subr.mxu0 0.0
    %3103 = vmatpush1.msra.mxu0 %v2994
    %3104 = vmatprep.subr.mxu0 0.0
    %3105 = vmatpush1.msra.mxu0 %v2993
    %3106 = vmatprep.subr.mxu0 0.0
    %3107 = vmatpush1.msra.mxu0 %v2992
    %3108 = vmatprep.subr.mxu0 0.0
    %3109 = vmatpush2.msra.mxu0 0.0
    %3110 = vmatprep.subr.mxu0 0.0
    %3111 = vmatpush2.msra.mxu0 0.0
    %3112 = vmatprep.subr.mxu0 0.0
    %3113 = vmatpush2.msra.mxu0 0.0
    %3114 = vmatprep.subr.mxu0 0.0
    %3115 = vmatpush2.msra.mxu0 0.0
    %3116 = vmatprep.subr.mxu0 0.0
    %3117 = vmatpush2.msra.mxu0 0.0
    %3118 = vmatprep.subr.mxu0 0.0
    %3119 = vmatpush2.msra.mxu0 0.0
    %3120 = vmatprep.subr.mxu0 0.0
    %3121 = vmatpush2.msra.mxu0 0.0
    %3122 = vmatprep.subr.mxu0 0.0
    %3123 = vmatpush2.msra.mxu0 0.0
    %3124 = vmatprep.subr.mxu0 0.0
    %3125 = vmatpush2.msra.mxu0 0.0
    %3126 = vmatprep.subr.mxu0 0.0
    %3127 = vmatpush2.msra.mxu0 0.0
    %3128 = vmatprep.subr.mxu0 0.0
    %3129 = vmatpush2.msra.mxu0 0.0
    %3130 = vmatprep.subr.mxu0 0.0
    %3131 = vmatpush2.msra.mxu0 0.0
    %3132 = vmatprep.subr.mxu0 0.0
    %3133 = vmatpush2.msra.mxu0 0.0
    %3134 = vmatprep.subr.mxu0 0.0
    %3135 = vmatpush2.msra.mxu0 0.0
    %3136 = vmatprep.subr.mxu0 0.0
    %3137 = vmatpush2.msra.mxu0 0.0
    %3138 = vmatprep.subr.mxu0 0.0
    %3139 = vmatpush2.msra.mxu0 0.0
    %3140 = vmatprep.mubr.f32.mxu0 0.0
    %3141 = vmatmul.mubr.f32.gmra.mxu0 %v2567
    %v3142 = vpop.f32.mrf.mxu0
    %v3143 = vadd.f32 %v3073, %v3142
    %v3144 = vpop.f32.mrf.mxu0
    %3145 = vdwg.mxu0
    %v3146 = vadd.f32 %v3143, %v1181
    %v3147 = vsel %vm1183, %v3146, -inf
    %3148 = vmax.xlane.f32.xlu0 %v3147
    %v3149 = vpop.xlane.xlu0 %3148
    %v3150 = vsub.f32 %v3146, %v3149
    %v3151 = vmul.f32 %v3150, 1.442695
    %v3152 = vpow.pop %v3151
    %v3153 = vsel %vm1183, %v3152, 0.0
    %3154 = vadd.xlane.f32.xlu0 %v3153
    %v3155 = vpop.xlane.xlu0 %3154
    %v3156 = vlog2.pop %v3155
    %v3157 = vmul.f32 %v3156, 0.6931472
    %v3158 = vadd.f32 %v3157, %v3149
    %v3159 = vsub.f32 %v3146, %v3158
    %v3162 = vunpack.c.l.s4 1966171168
    %v3163 = vunpack.c.0.s8 %v3162
    %v3164 = vlaneseq
    %v3165 = vshrl.u32 %v3164, 7
    %v3166 = vsub.s32 %v3163, %v3165
    %v3167 = vrot.slane %v3159, %v3166
    %v3168 = vcombine.high %v3167, %v3167
    %v3170 = vunpack.c.l.s4 1966171168
    %v3171 = vunpack.c.0.s8 %v3170
    %v3172 = vlaneseq
    %v3173 = vshrl.u32 %v3172, 7
    %v3174 = vsub.s32 %v3171, %v3173
    %v3175 = vrot.slane %v3167, %v3174
    %v3177 = vunpack.c.l.s4 1966171168
    %v3178 = vunpack.c.0.s8 %v3177
    %v3179 = vlaneseq
    %v3180 = vshrl.u32 %v3179, 7
    %v3181 = vsub.s32 %v3178, %v3180
    %v3182 = vrot.slane %v3168, %v3181
    %3185 = vst.msk [vmem:[%s2 + $0x2] sm:$0x1] %vm1222, %v3175
    %3186 = vst.msk [vmem:[%s2 + $0xa] sm:$0x1] %vm1222, %v3182
    %v3187 = vsel %vm1183, %v3159, -inf
    %3188 = vmax.xlane.f32.xlu0 %v3187
    %v3189 = vpop.xlane.xlu0 %3188
    %vm3190 = vcmp.eq.f32.partialorder %v3159, %v3189
    %v3191 = vsel %vm3190, %v221, 24
    %v3192 = vsel %vm1183, %v3191, 2147483647
    %v3193 = vand.u32 %v3192, 65535
    %v3194 = vshra.s32 %v3192, 16
    %v3195 = vcvt.s32.f32 %v3193
    %v3196 = vcvt.s32.f32 %v3194
    %3197 = vmin.xlane.f32.xlu0 %v3196
    %v3198 = vpop.xlane.xlu0 %3197
    %vm3199 = vcmp.eq.f32.partialorder %v3196, %v3198
    %v3200 = vsel %vm3199, %v3195, inf
    %3201 = vmin.xlane.f32.xlu0 %v3200
    %v3202 = vpop.xlane.xlu0 %3201
    %v3203 = vcvt.f32.s32 %v3202
    %v3204 = vcvt.f32.s32 %v3198
    %v3205 = vshll.u32 %v3204, 16
    %v3206 = vadd.s32 %v3205, %v3203
    %vm3207 = vcmp.eq.s32.totalorder %v221, %v3206
    %v3208 = vsel %vm3207, 1, 0
    %v3209 = vcvt.s32.f32 %v3208
    %v3210 = vld [vmem:[#allocation4] sm:$0xff]
    %v3211 = vld [vmem:[#allocation4 + $0x8] sm:$0xff]
    %v3212 = vld [vmem:[#allocation4 + $0x10] sm:$0xff]
    %v3213 = vld [vmem:[#allocation4 + $0x18] sm:$0xff]
    %v3214 = vld [vmem:[#allocation4 + $0x20] sm:$0xff]
    %v3215 = vld [vmem:[#allocation4 + $0x28] sm:$0xff]
    %v3216 = vld [vmem:[#allocation4 + $0x30] sm:$0xff]
    %v3217 = vld [vmem:[#allocation4 + $0x38] sm:$0xff]
    %v3218 = vld [vmem:[#allocation4 + $0x40] sm:$0xff]
    %v3219 = vld [vmem:[#allocation4 + $0x48] sm:$0xff]
    %v3220 = vld [vmem:[#allocation4 + $0x50] sm:$0xff]
    %v3221 = vld [vmem:[#allocation4 + $0x58] sm:$0xff]
    %v3222 = vld [vmem:[#allocation4 + $0x60] sm:$0xff]
    %v3223 = vld [vmem:[#allocation4 + $0x68] sm:$0xff]
    %v3224 = vld [vmem:[#allocation4 + $0x70] sm:$0xff]
    %v3225 = vld [vmem:[#allocation4 + $0x78] sm:$0xff]
    %v3226 = vld [vmem:[#allocation4 + $0x80] sm:$0xff]
    %v3227 = vld [vmem:[#allocation4 + $0x88] sm:$0xff]
    %v3228 = vld [vmem:[#allocation4 + $0x90] sm:$0xff]
    %v3229 = vld [vmem:[#allocation4 + $0x98] sm:$0xff]
    %3230 = vmatprep.subr.mxu0 0.0
    %3231 = vmatpush1.msra.mxu0 %v3225
    %3232 = vmatprep.subr.mxu0 0.0
    %3233 = vmatpush1.msra.mxu0 %v3224
    %3234 = vmatprep.subr.mxu0 0.0
    %3235 = vmatpush1.msra.mxu0 %v3223
    %3236 = vmatprep.subr.mxu0 0.0
    %3237 = vmatpush1.msra.mxu0 %v3222
    %3238 = vmatprep.subr.mxu0 0.0
    %3239 = vmatpush1.msra.mxu0 %v3221
    %3240 = vmatprep.subr.mxu0 0.0
    %3241 = vmatpush1.msra.mxu0 %v3220
    %3242 = vmatprep.subr.mxu0 0.0
    %3243 = vmatpush1.msra.mxu0 %v3219
    %3244 = vmatprep.subr.mxu0 0.0
    %3245 = vmatpush1.msra.mxu0 %v3218
    %3246 = vmatprep.subr.mxu0 0.0
    %3247 = vmatpush1.msra.mxu0 %v3217
    %3248 = vmatprep.subr.mxu0 0.0
    %3249 = vmatpush1.msra.mxu0 %v3216
    %3250 = vmatprep.subr.mxu0 0.0
    %3251 = vmatpush1.msra.mxu0 %v3215
    %3252 = vmatprep.subr.mxu0 0.0
    %3253 = vmatpush1.msra.mxu0 %v3214
    %3254 = vmatprep.subr.mxu0 0.0
    %3255 = vmatpush1.msra.mxu0 %v3213
    %3256 = vmatprep.subr.mxu0 0.0
    %3257 = vmatpush1.msra.mxu0 %v3212
    %3258 = vmatprep.subr.mxu0 0.0
    %3259 = vmatpush1.msra.mxu0 %v3211
    %3260 = vmatprep.subr.mxu0 0.0
    %3261 = vmatpush1.msra.mxu0 %v3210
    %3262 = vmatprep.subr.mxu0 0.0
    %3263 = vmatpush2.msra.mxu0 0.0
    %3264 = vmatprep.subr.mxu0 0.0
    %3265 = vmatpush2.msra.mxu0 0.0
    %3266 = vmatprep.subr.mxu0 0.0
    %3267 = vmatpush2.msra.mxu0 0.0
    %3268 = vmatprep.subr.mxu0 0.0
    %3269 = vmatpush2.msra.mxu0 0.0
    %3270 = vmatprep.subr.mxu0 0.0
    %3271 = vmatpush2.msra.mxu0 0.0
    %3272 = vmatprep.subr.mxu0 0.0
    %3273 = vmatpush2.msra.mxu0 0.0
    %3274 = vmatprep.subr.mxu0 0.0
    %3275 = vmatpush2.msra.mxu0 0.0
    %3276 = vmatprep.subr.mxu0 0.0
    %3277 = vmatpush2.msra.mxu0 0.0
    %3278 = vmatprep.subr.mxu0 0.0
    %3279 = vmatpush2.msra.mxu0 0.0
    %3280 = vmatprep.subr.mxu0 0.0
    %3281 = vmatpush2.msra.mxu0 0.0
    %3282 = vmatprep.subr.mxu0 0.0
    %3283 = vmatpush2.msra.mxu0 0.0
    %3284 = vmatprep.subr.mxu0 0.0
    %3285 = vmatpush2.msra.mxu0 0.0
    %3286 = vmatprep.subr.mxu0 0.0
    %3287 = vmatpush2.msra.mxu0 %v3229
    %3288 = vmatprep.subr.mxu0 0.0
    %3289 = vmatpush2.msra.mxu0 %v3228
    %3290 = vmatprep.subr.mxu0 0.0
    %3291 = vmatpush2.msra.mxu0 %v3227
    %3292 = vmatprep.subr.mxu0 0.0
    %3293 = vmatpush2.msra.mxu0 %v3226
    %3294 = vmatprep.mubr.f32.mxu0 %v3004
    %3295 = vmatmul.mubr.f32.gmra.mxu0 %v3209
    %v3296 = vpop.f32.mrf.mxu0
    %v3297 = vadd.f32 %v248, %v3296
    %v3298 = vpop.f32.mrf.mxu0
    %3299 = vdwg.mxu0
    %v3300 = vld [vmem:[#allocation4 + $0xa0] sm:$0xff]
    %v3301 = vld [vmem:[#allocation4 + $0xa8] sm:$0xff]
    %v3302 = vld [vmem:[#allocation4 + $0xb0] sm:$0xff]
    %v3303 = vld [vmem:[#allocation4 + $0xb8] sm:$0xff]
    %3304 = vmatprep.subr.mxu0 0.0
    %3305 = vmatpush1.msra.mxu0 0.0
    %3306 = vmatprep.subr.mxu0 0.0
    %3307 = vmatpush1.msra.mxu0 0.0
    %3308 = vmatprep.subr.mxu0 0.0
    %3309 = vmatpush1.msra.mxu0 0.0
    %3310 = vmatprep.subr.mxu0 0.0
    %3311 = vmatpush1.msra.mxu0 0.0
    %3312 = vmatprep.subr.mxu0 0.0
    %3313 = vmatpush1.msra.mxu0 0.0
    %3314 = vmatprep.subr.mxu0 0.0
    %3315 = vmatpush1.msra.mxu0 0.0
    %3316 = vmatprep.subr.mxu0 0.0
    %3317 = vmatpush1.msra.mxu0 0.0
    %3318 = vmatprep.subr.mxu0 0.0
    %3319 = vmatpush1.msra.mxu0 0.0
    %3320 = vmatprep.subr.mxu0 0.0
    %3321 = vmatpush1.msra.mxu0 0.0
    %3322 = vmatprep.subr.mxu0 0.0
    %3323 = vmatpush1.msra.mxu0 0.0
    %3324 = vmatprep.subr.mxu0 0.0
    %3325 = vmatpush1.msra.mxu0 0.0
    %3326 = vmatprep.subr.mxu0 0.0
    %3327 = vmatpush1.msra.mxu0 0.0
    %3328 = vmatprep.subr.mxu0 0.0
    %3329 = vmatpush1.msra.mxu0 %v3303
    %3330 = vmatprep.subr.mxu0 0.0
    %3331 = vmatpush1.msra.mxu0 %v3302
    %3332 = vmatprep.subr.mxu0 0.0
    %3333 = vmatpush1.msra.mxu0 %v3301
    %3334 = vmatprep.subr.mxu0 0.0
    %3335 = vmatpush1.msra.mxu0 %v3300
    %3336 = vmatprep.subr.mxu0 0.0
    %3337 = vmatpush2.msra.mxu0 0.0
    %3338 = vmatprep.subr.mxu0 0.0
    %3339 = vmatpush2.msra.mxu0 0.0
    %3340 = vmatprep.subr.mxu0 0.0
    %3341 = vmatpush2.msra.mxu0 0.0
    %3342 = vmatprep.subr.mxu0 0.0
    %3343 = vmatpush2.msra.mxu0 0.0
    %3344 = vmatprep.subr.mxu0 0.0
    %3345 = vmatpush2.msra.mxu0 0.0
    %3346 = vmatprep.subr.mxu0 0.0
    %3347 = vmatpush2.msra.mxu0 0.0
    %3348 = vmatprep.subr.mxu0 0.0
    %3349 = vmatpush2.msra.mxu0 0.0
    %3350 = vmatprep.subr.mxu0 0.0
    %3351 = vmatpush2.msra.mxu0 0.0
    %3352 = vmatprep.subr.mxu0 0.0
    %3353 = vmatpush2.msra.mxu0 0.0
    %3354 = vmatprep.subr.mxu0 0.0
    %3355 = vmatpush2.msra.mxu0 0.0
    %3356 = vmatprep.subr.mxu0 0.0
    %3357 = vmatpush2.msra.mxu0 0.0
    %3358 = vmatprep.subr.mxu0 0.0
    %3359 = vmatpush2.msra.mxu0 0.0
    %3360 = vmatprep.subr.mxu0 0.0
    %3361 = vmatpush2.msra.mxu0 0.0
    %3362 = vmatprep.subr.mxu0 0.0
    %3363 = vmatpush2.msra.mxu0 0.0
    %3364 = vmatprep.subr.mxu0 0.0
    %3365 = vmatpush2.msra.mxu0 0.0
    %3366 = vmatprep.subr.mxu0 0.0
    %3367 = vmatpush2.msra.mxu0 0.0
    %3368 = vmatprep.mubr.f32.mxu0 0.0
    %3369 = vmatmul.mubr.f32.gmra.mxu0 %v2567
    %v3370 = vpop.f32.mrf.mxu0
    %v3371 = vadd.f32 %v329, %v3370
    %v3372 = vpop.f32.mrf.mxu0
    %3373 = vdwg.mxu0
    %v3374 = vadd.f32 %v3297, %v3371
    %v3375 = vxor.u32 %v3374, 2147483648
    %v3376 = vmul.f32 %v3375, 1.442695
    %v3377 = vpow.pop %v3376
    %v3378 = vadd.f32 %v3377, 1.0
    %v3379 = vrcp.pop %v3378
    %v3380 = vmul.f32 1.0, %v3379
    %3382 = vrot.lane.b32.xlu0 %v3371, 64
    %v3383 = vpop.permute.xlu0 %3382
    %v3385 = vmul.f32 %v3380, %v3383
    %3387 = vrot.lane.b32.xlu0 %v3385, 64
    %v3388 = vpop.permute.xlu0 %3387
    %v3390 = vadd.f32 %v3297, %v3388
    %v3391 = vtanh.pop %v3390
    %v3392 = vsub.f32 1.0, %v3380
    %3394 = vrot.lane.b32.xlu0 %v3391, 96
    %v3395 = vpop.permute.xlu0 %3394
    %v3397 = vmul.f32 %v3392, %v3395
    %v3398 = vmul.f32 %v3380, %v2418
    %v3399 = vadd.f32 %v3397, %v3398
    %v3400 = vld [vmem:[#allocation4 + $0x140] sm:$0xff]
    %v3401 = vld [vmem:[#allocation4 + $0x148] sm:$0xff]
    %v3402 = vsel %vm760, %v2919, %v2830
    %v3403 = vsel %vm428, %v3402, 0
    %3405 = vmatprep.subr.mxu0 0.0
    %3406 = vmatpush1.msra.mxu0 0.0
    %3407 = vmatprep.subr.mxu0 0.0
    %3408 = vmatpush1.msra.mxu0 0.0
    %3409 = vmatprep.subr.mxu0 0.0
    %3410 = vmatpush1.msra.mxu0 0.0
    %3411 = vmatprep.subr.mxu0 0.0
    %3412 = vmatpush1.msra.mxu0 0.0
    %3413 = vmatprep.subr.mxu0 0.0
    %3414 = vmatpush1.msra.mxu0 0.0
    %3415 = vmatprep.subr.mxu0 0.0
    %3416 = vmatpush1.msra.mxu0 0.0
    %3417 = vmatprep.subr.mxu0 0.0
    %3418 = vmatpush1.msra.mxu0 0.0
    %3419 = vmatprep.subr.mxu0 0.0
    %3420 = vmatpush1.msra.mxu0 0.0
    %3421 = vmatprep.subr.mxu0 0.0
    %3422 = vmatpush1.msra.mxu0 0.0
    %3423 = vmatprep.subr.mxu0 0.0
    %3424 = vmatpush1.msra.mxu0 0.0
    %3425 = vmatprep.subr.mxu0 0.0
    %3426 = vmatpush1.msra.mxu0 0.0
    %3427 = vmatprep.subr.mxu0 0.0
    %3428 = vmatpush1.msra.mxu0 0.0
    %3429 = vmatprep.subr.mxu0 0.0
    %3430 = vmatpush1.msra.mxu0 0.0
    %3431 = vmatprep.subr.mxu0 0.0
    %3432 = vmatpush1.msra.mxu0 0.0
    %3433 = vmatprep.subr.mxu0 0.0
    %3434 = vmatpush1.msra.mxu0 %v3401
    %3435 = vmatprep.subr.mxu0 0.0
    %3436 = vmatpush1.msra.mxu0 %v3400
    %3437 = vmatprep.subr.mxu0 0.0
    %3438 = vmatpush2.msra.mxu0 0.0
    %3439 = vmatprep.subr.mxu0 0.0
    %3440 = vmatpush2.msra.mxu0 0.0
    %3441 = vmatprep.subr.mxu0 0.0
    %3442 = vmatpush2.msra.mxu0 0.0
    %3443 = vmatprep.subr.mxu0 0.0
    %3444 = vmatpush2.msra.mxu0 0.0
    %3445 = vmatprep.subr.mxu0 0.0
    %3446 = vmatpush2.msra.mxu0 0.0
    %3447 = vmatprep.subr.mxu0 0.0
    %3448 = vmatpush2.msra.mxu0 0.0
    %3449 = vmatprep.subr.mxu0 0.0
    %3450 = vmatpush2.msra.mxu0 0.0
    %3451 = vmatprep.subr.mxu0 0.0
    %3452 = vmatpush2.msra.mxu0 0.0
    %3453 = vmatprep.subr.mxu0 0.0
    %3454 = vmatpush2.msra.mxu0 0.0
    %3455 = vmatprep.subr.mxu0 0.0
    %3456 = vmatpush2.msra.mxu0 0.0
    %3457 = vmatprep.subr.mxu0 0.0
    %3458 = vmatpush2.msra.mxu0 0.0
    %3459 = vmatprep.subr.mxu0 0.0
    %3460 = vmatpush2.msra.mxu0 0.0
    %3461 = vmatprep.subr.mxu0 0.0
    %3462 = vmatpush2.msra.mxu0 0.0
    %3463 = vmatprep.subr.mxu0 0.0
    %3464 = vmatpush2.msra.mxu0 0.0
    %3465 = vmatprep.subr.mxu0 0.0
    %3466 = vmatpush2.msra.mxu0 0.0
    %3467 = vmatprep.subr.mxu0 0.0
    %3468 = vmatpush2.msra.mxu0 0.0
    %3469 = vmatprep.mubr.f32.mxu0 0.0
    %3470 = vmatmul.mubr.f32.gmra.mxu0 %v3403
    %v3471 = vpop.f32.mrf.mxu0
    %v3472 = vadd.f32 0.0, %v3471
    %v3473 = vpop.f32.mrf.mxu0
    %3474 = vdwg.mxu0
    %v3475 = vlaneseq
    %v3476 = vshrl.u32 %v3475, 7
    %v3477 = vsub.s32 0, %v3476
    %v3478 = vrot.slane %v3472, %v3477
    %3480 = vbcast.lane.b32.xlu0 %v3478, 256
    %v3481 = vpop.permute.xlu0 %3480
    %s3483 = sor.u32 256, 8
    %3484 = vbcast.lane.b32.xlu0 %v3478, %s3483
    %v3485 = vpop.permute.xlu0 %3484
    %v3486 = vlaneseq
    %v3487 = vshrl.u32 %v3486, 7
    %v3488 = vsub.s32 1, %v3487
    %v3489 = vrot.slane %v3472, %v3488
    %3491 = vbcast.lane.b32.xlu0 %v3489, 256
    %v3492 = vpop.permute.xlu0 %3491
    %s3494 = sor.u32 256, 8
    %3495 = vbcast.lane.b32.xlu0 %v3489, %s3494
    %v3496 = vpop.permute.xlu0 %3495
    %v3497 = vmul.f32 %v3481, %v526
    %v3498 = vmul.f32 %v3485, %v526
    %v3499 = vmul.f32 %v3492, %v526
    %v3500 = vmul.f32 %v3496, %v526
    %v3505 = vmul.f32 %v2818, %v534
    %v3506 = vmul.f32 %v2821, %v534
    %v3507 = vmul.f32 %v2907, %v534
    %v3508 = vmul.f32 %v2910, %v534
    %v3509 = vadd.f32 %v3497, %v3505
    %v3510 = vadd.f32 %v3498, %v3506
    %v3511 = vadd.f32 %v3499, %v3507
    %v3512 = vadd.f32 %v3500, %v3508
    %s3514 = sor.u32 256, 16
    %3515 = vbcast.lane.b32.xlu0 %v3478, %s3514
    %v3516 = vpop.permute.xlu0 %3515
    %s3518 = sor.u32 256, 24
    %3519 = vbcast.lane.b32.xlu0 %v3478, %s3518
    %v3520 = vpop.permute.xlu0 %3519
    %s3522 = sor.u32 256, 16
    %3523 = vbcast.lane.b32.xlu0 %v3489, %s3522
    %v3524 = vpop.permute.xlu0 %3523
    %s3526 = sor.u32 256, 24
    %3527 = vbcast.lane.b32.xlu0 %v3489, %s3526
    %v3528 = vpop.permute.xlu0 %3527
    %v3529 = vmul.f32 %v3516, %v559
    %v3530 = vmul.f32 %v3520, %v559
    %v3531 = vmul.f32 %v3524, %v559
    %v3532 = vmul.f32 %v3528, %v559
    %v3533 = vadd.f32 %v3509, %v3529
    %v3534 = vadd.f32 %v3510, %v3530
    %v3535 = vadd.f32 %v3511, %v3531
    %v3536 = vadd.f32 %v3512, %v3532
    %v3537 = vadd.f32 %v3533, %v571
    %v3538 = vadd.f32 %v3534, %v571
    %v3539 = vadd.f32 %v3535, %v571
    %v3540 = vadd.f32 %v3536, %v571
    %v3541 = vld [vmem:[#allocation4 + $0x100] sm:$0xff]
    %v3542 = vld [vmem:[#allocation4 + $0x108] sm:$0xff]
    %v3543 = vld [vmem:[#allocation4 + $0x110] sm:$0xff]
    %v3544 = vld [vmem:[#allocation4 + $0x118] sm:$0xff]
    %3546 = vrot.lane.b32.xlu0 %v3399, 96
    %v3547 = vpop.permute.xlu0 %3546
    %v3548 = vsel %vm57, %v3547, 0
    %3550 = vmatprep.subr.mxu0 0.0
    %3551 = vmatpush1.msra.mxu0 0.0
    %3552 = vmatprep.subr.mxu0 0.0
    %3553 = vmatpush1.msra.mxu0 0.0
    %3554 = vmatprep.subr.mxu0 0.0
    %3555 = vmatpush1.msra.mxu0 0.0
    %3556 = vmatprep.subr.mxu0 0.0
    %3557 = vmatpush1.msra.mxu0 0.0
    %3558 = vmatprep.subr.mxu0 0.0
    %3559 = vmatpush1.msra.mxu0 0.0
    %3560 = vmatprep.subr.mxu0 0.0
    %3561 = vmatpush1.msra.mxu0 0.0
    %3562 = vmatprep.subr.mxu0 0.0
    %3563 = vmatpush1.msra.mxu0 0.0
    %3564 = vmatprep.subr.mxu0 0.0
    %3565 = vmatpush1.msra.mxu0 0.0
    %3566 = vmatprep.subr.mxu0 0.0
    %3567 = vmatpush1.msra.mxu0 0.0
    %3568 = vmatprep.subr.mxu0 0.0
    %3569 = vmatpush1.msra.mxu0 0.0
    %3570 = vmatprep.subr.mxu0 0.0
    %3571 = vmatpush1.msra.mxu0 0.0
    %3572 = vmatprep.subr.mxu0 0.0
    %3573 = vmatpush1.msra.mxu0 0.0
    %3574 = vmatprep.subr.mxu0 0.0
    %3575 = vmatpush1.msra.mxu0 %v3544
    %3576 = vmatprep.subr.mxu0 0.0
    %3577 = vmatpush1.msra.mxu0 %v3543
    %3578 = vmatprep.subr.mxu0 0.0
    %3579 = vmatpush1.msra.mxu0 %v3542
    %3580 = vmatprep.subr.mxu0 0.0
    %3581 = vmatpush1.msra.mxu0 %v3541
    %3582 = vmatprep.subr.mxu0 0.0
    %3583 = vmatpush2.msra.mxu0 0.0
    %3584 = vmatprep.subr.mxu0 0.0
    %3585 = vmatpush2.msra.mxu0 0.0
    %3586 = vmatprep.subr.mxu0 0.0
    %3587 = vmatpush2.msra.mxu0 0.0
    %3588 = vmatprep.subr.mxu0 0.0
    %3589 = vmatpush2.msra.mxu0 0.0
    %3590 = vmatprep.subr.mxu0 0.0
    %3591 = vmatpush2.msra.mxu0 0.0
    %3592 = vmatprep.subr.mxu0 0.0
    %3593 = vmatpush2.msra.mxu0 0.0
    %3594 = vmatprep.subr.mxu0 0.0
    %3595 = vmatpush2.msra.mxu0 0.0
    %3596 = vmatprep.subr.mxu0 0.0
    %3597 = vmatpush2.msra.mxu0 0.0
    %3598 = vmatprep.subr.mxu0 0.0
    %3599 = vmatpush2.msra.mxu0 0.0
    %3600 = vmatprep.subr.mxu0 0.0
    %3601 = vmatpush2.msra.mxu0 0.0
    %3602 = vmatprep.subr.mxu0 0.0
    %3603 = vmatpush2.msra.mxu0 0.0
    %3604 = vmatprep.subr.mxu0 0.0
    %3605 = vmatpush2.msra.mxu0 0.0
    %3606 = vmatprep.subr.mxu0 0.0
    %3607 = vmatpush2.msra.mxu0 0.0
    %3608 = vmatprep.subr.mxu0 0.0
    %3609 = vmatpush2.msra.mxu0 0.0
    %3610 = vmatprep.subr.mxu0 0.0
    %3611 = vmatpush2.msra.mxu0 0.0
    %3612 = vmatprep.subr.mxu0 0.0
    %3613 = vmatpush2.msra.mxu0 0.0
    %3614 = vmatprep.mubr.f32.mxu0 0.0
    %3615 = vmatmul.mubr.f32.gmra.mxu0 %v3548
    %v3616 = vpop.f32.mrf.mxu0
    %v3617 = vadd.f32 0.0, %v3616
    %v3618 = vpop.f32.mrf.mxu0
    %3619 = vdwg.mxu0
    %v3622 = vunpack.c.l.s4 1966171168
    %v3623 = vunpack.c.0.s8 %v3622
    %v3624 = vlaneseq
    %v3625 = vshrl.u32 %v3624, 7
    %v3626 = vsub.s32 %v3623, %v3625
    %v3627 = vrot.slane %v3617, %v3626
    %v3628 = vcombine.high %v3627, %v3627
    %v3630 = vunpack.c.l.s4 1966171168
    %v3631 = vunpack.c.0.s8 %v3630
    %v3632 = vlaneseq
    %v3633 = vshrl.u32 %v3632, 7
    %v3634 = vsub.s32 %v3631, %v3633
    %v3635 = vrot.slane %v3627, %v3634
    %v3637 = vunpack.c.l.s4 1966171168
    %v3638 = vunpack.c.0.s8 %v3637
    %v3639 = vlaneseq
    %v3640 = vshrl.u32 %v3639, 7
    %v3641 = vsub.s32 %v3638, %v3640
    %v3642 = vrot.slane %v3628, %v3641
    %v3643 = vlaneseq
    %v3644 = vshrl.u32 %v3643, 7
    %v3645 = vsub.s32 0, %v3644
    %v3646 = vrot.slane %v3635, %v3645
    %v3647 = vlaneseq
    %v3648 = vshrl.u32 %v3647, 7
    %v3649 = vsub.s32 0, %v3648
    %v3650 = vrot.slane %v3642, %v3649
    %v3653 = vadd.f32 %v3646, %v131
    %v3654 = vadd.f32 %v3646, %v136
    %v3655 = vadd.f32 %v3650, %v212
    %v3656 = vadd.f32 %v3650, %v217
    %v3657 = vadd.f32 %v3653, %v3537
    %v3658 = vadd.f32 %v3654, %v3538
    %v3659 = vadd.f32 %v3655, %v3539
    %v3660 = vadd.f32 %v3656, %v3540
    %v3661 = vadd.f32 %v3657, %v699
    %v3662 = vadd.f32 %v3658, %v699
    %v3663 = vadd.f32 %v3659, %v699
    %v3664 = vadd.f32 %v3660, %v699
    %v3665 = vtanh.pop %v3661
    %v3666 = vtanh.pop %v3662
    %v3667 = vtanh.pop %v3663
    %v3668 = vtanh.pop %v3664
    %v3669 = vmul.f32 %v3665, %v711
    %v3670 = vmul.f32 %v3666, %v711
    %v3671 = vmul.f32 %v3667, %v711
    %v3672 = vmul.f32 %v3668, %v711
    %v3673 = vsel %vm57, %v3669, 0.0
    %3674 = vadd.xlane.f32.xlu0 %v3673
    %v3675 = vpop.xlane.xlu0 %3674
    %v3676 = vsel %vm57, %v3670, 0.0
    %3677 = vadd.xlane.f32.xlu0 %v3676
    %v3678 = vpop.xlane.xlu0 %3677
    %v3679 = vsel %vm57, %v3671, 0.0
    %3680 = vadd.xlane.f32.xlu0 %v3679
    %v3681 = vpop.xlane.xlu0 %3680
    %v3682 = vsel %vm57, %v3672, 0.0
    %3683 = vadd.xlane.f32.xlu0 %v3682
    %v3684 = vpop.xlane.xlu0 %3683
    %v3685 = vadd.f32 %v3675, %v730
    %v3686 = vadd.f32 %v3678, %v730
    %v3687 = vadd.f32 %v3681, %v730
    %v3688 = vadd.f32 %v3684, %v730
    %v3693 = vlaneseq
    %v3694 = vshrl.u32 %v3693, 7
    %v3695 = vsub.s32 %v221, %v3694
    %v3696 = vrot.slane %v3685, %v3695
    %v3697 = vlaneseq
    %v3698 = vshrl.u32 %v3697, 7
    %v3699 = vsub.s32 %v744, %v3698
    %v3700 = vrot.slane %v3686, %v3699
    %v3701 = vsel %vm749, %v3700, %v3696
    %v3702 = vlaneseq
    %v3703 = vshrl.u32 %v3702, 7
    %v3704 = vsub.s32 %v221, %v3703
    %v3705 = vrot.slane %v3687, %v3704
    %v3706 = vlaneseq
    %v3707 = vshrl.u32 %v3706, 7
    %v3708 = vsub.s32 %v744, %v3707
    %v3709 = vrot.slane %v3688, %v3708
    %v3710 = vsel %vm749, %v3709, %v3705
    %v3711 = vsel %vm760, %v3710, %v3701
    %v3713 = vsel %vm763, %v3711, -inf
    %3714 = vmax.xlane.f32.xlu0 %v3713
    %v3715 = vpop.xlane.xlu0 %3714
    %v3717 = vlaneseq
    %v3718 = vshrl.u32 %v3717, 7
    %v3719 = vsub.s32 0, %v3718
    %v3720 = vrot.slane %v3715, %v3719
    %v3721 = vlaneseq
    %v3722 = vshrl.u32 %v3721, 7
    %v3723 = vsub.s32 1, %v3722
    %v3724 = vrot.slane %v3715, %v3723
    %v3727 = vsub.f32 %v3685, %v3720
    %v3728 = vsub.f32 %v3686, %v3720
    %v3729 = vsub.f32 %v3687, %v3724
    %v3730 = vsub.f32 %v3688, %v3724
    %v3731 = vmul.f32 %v3727, 1.442695
    %v3732 = vpow.pop %v3731
    %v3733 = vmul.f32 %v3728, 1.442695
    %v3734 = vpow.pop %v3733
    %v3735 = vmul.f32 %v3729, 1.442695
    %v3736 = vpow.pop %v3735
    %v3737 = vmul.f32 %v3730, 1.442695
    %v3738 = vpow.pop %v3737
    %3743 = vset.pattern.permute.xlu0 0
    %3744 = vperm.xlu0 %3743, %v3732
    %v3745 = vpop.permute.xlu0 %3744
    %3746 = vset.pattern.permute.xlu0 0
    %3747 = vperm.xlu0 %3746, %v3734
    %v3748 = vpop.permute.xlu0 %3747
    %3749 = vset.pattern.permute.xlu0 0
    %3750 = vperm.xlu0 %3749, %v3736
    %v3751 = vpop.permute.xlu0 %3750
    %3752 = vset.pattern.permute.xlu0 0
    %3753 = vperm.xlu0 %3752, %v3738
    %v3754 = vpop.permute.xlu0 %3753
    %v3755 = vlaneseq
    %v3756 = vshrl.u32 %v3755, 7
    %v3757 = vsub.s32 %v221, %v3756
    %v3758 = vrot.slane %v3745, %v3757
    %v3759 = vlaneseq
    %v3760 = vshrl.u32 %v3759, 7
    %v3761 = vsub.s32 %v744, %v3760
    %v3762 = vrot.slane %v3748, %v3761
    %v3763 = vsel %vm749, %v3762, %v3758
    %v3764 = vlaneseq
    %v3765 = vshrl.u32 %v3764, 7
    %v3766 = vsub.s32 %v221, %v3765
    %v3767 = vrot.slane %v3751, %v3766
    %v3768 = vlaneseq
    %v3769 = vshrl.u32 %v3768, 7
    %v3770 = vsub.s32 %v744, %v3769
    %v3771 = vrot.slane %v3754, %v3770
    %v3772 = vsel %vm749, %v3771, %v3767
    %v3773 = vsel %vm760, %v3772, %v3763
    %v3775 = vsel %vm763, %v3773, 0.0
    %3776 = vadd.xlane.f32.xlu0 %v3775
    %v3777 = vpop.xlane.xlu0 %3776
    %v3779 = vlaneseq
    %v3780 = vshrl.u32 %v3779, 7
    %v3781 = vsub.s32 0, %v3780
    %v3782 = vrot.slane %v3777, %v3781
    %v3783 = vlaneseq
    %v3784 = vshrl.u32 %v3783, 7
    %v3785 = vsub.s32 1, %v3784
    %v3786 = vrot.slane %v3777, %v3785
    %v3789 = vrcp.pop %v3782
    %v3790 = vmul.f32 %v3732, %v3789
    %v3791 = vmul.f32 %v3734, %v3789
    %v3792 = vrcp.pop %v3786
    %v3793 = vmul.f32 %v3736, %v3792
    %v3794 = vmul.f32 %v3738, %v3792
    %3797 = vset.pattern.permute.xlu0 0
    %3798 = vperm.xlu0 %3797, %v3790
    %v3799 = vpop.permute.xlu0 %3798
    %3800 = vset.pattern.permute.xlu0 0
    %3801 = vperm.xlu0 %3800, %v3791
    %v3802 = vpop.permute.xlu0 %3801
    %v3803 = vlaneseq
    %v3804 = vshrl.u32 %v3803, 7
    %v3805 = vsub.s32 %v221, %v3804
    %v3806 = vrot.slane %v3799, %v3805
    %v3807 = vlaneseq
    %v3808 = vshrl.u32 %v3807, 7
    %v3809 = vsub.s32 %v744, %v3808
    %v3810 = vrot.slane %v3802, %v3809
    %v3811 = vsel %vm749, %v3810, %v3806
    %v3812 = vsel %vm428, %v3811, 0
    %3814 = vmatprep.subr.mxu0 0.0
    %3815 = vmatpush1.msra.mxu0 0.0
    %3816 = vmatprep.subr.mxu0 0.0
    %3817 = vmatpush1.msra.mxu0 0.0
    %3818 = vmatprep.subr.mxu0 0.0
    %3819 = vmatpush1.msra.mxu0 0.0
    %3820 = vmatprep.subr.mxu0 0.0
    %3821 = vmatpush1.msra.mxu0 0.0
    %3822 = vmatprep.subr.mxu0 0.0
    %3823 = vmatpush1.msra.mxu0 0.0
    %3824 = vmatprep.subr.mxu0 0.0
    %3825 = vmatpush1.msra.mxu0 0.0
    %3826 = vmatprep.subr.mxu0 0.0
    %3827 = vmatpush1.msra.mxu0 0.0
    %3828 = vmatprep.subr.mxu0 0.0
    %3829 = vmatpush1.msra.mxu0 0.0
    %3830 = vmatprep.subr.mxu0 0.0
    %3831 = vmatpush1.msra.mxu0 0.0
    %3832 = vmatprep.subr.mxu0 0.0
    %3833 = vmatpush1.msra.mxu0 0.0
    %3834 = vmatprep.subr.mxu0 0.0
    %3835 = vmatpush1.msra.mxu0 0.0
    %3836 = vmatprep.subr.mxu0 0.0
    %3837 = vmatpush1.msra.mxu0 0.0
    %3838 = vmatprep.subr.mxu0 0.0
    %3839 = vmatpush1.msra.mxu0 0.0
    %3840 = vmatprep.subr.mxu0 0.0
    %3841 = vmatpush1.msra.mxu0 0.0
    %3842 = vmatprep.subr.mxu0 0.0
    %3843 = vmatpush1.msra.mxu0 %v50
    %3844 = vmatprep.subr.mxu0 0.0
    %3845 = vmatpush1.msra.mxu0 %v49
    %3846 = vmatprep.subr.mxu0 0.0
    %3847 = vmatpush2.msra.mxu0 0.0
    %3848 = vmatprep.subr.mxu0 0.0
    %3849 = vmatpush2.msra.mxu0 0.0
    %3850 = vmatprep.subr.mxu0 0.0
    %3851 = vmatpush2.msra.mxu0 0.0
    %3852 = vmatprep.subr.mxu0 0.0
    %3853 = vmatpush2.msra.mxu0 0.0
    %3854 = vmatprep.subr.mxu0 0.0
    %3855 = vmatpush2.msra.mxu0 0.0
    %3856 = vmatprep.subr.mxu0 0.0
    %3857 = vmatpush2.msra.mxu0 0.0
    %3858 = vmatprep.subr.mxu0 0.0
    %3859 = vmatpush2.msra.mxu0 0.0
    %3860 = vmatprep.subr.mxu0 0.0
    %3861 = vmatpush2.msra.mxu0 0.0
    %3862 = vmatprep.subr.mxu0 0.0
    %3863 = vmatpush2.msra.mxu0 0.0
    %3864 = vmatprep.subr.mxu0 0.0
    %3865 = vmatpush2.msra.mxu0 0.0
    %3866 = vmatprep.subr.mxu0 0.0
    %3867 = vmatpush2.msra.mxu0 0.0
    %3868 = vmatprep.subr.mxu0 0.0
    %3869 = vmatpush2.msra.mxu0 0.0
    %3870 = vmatprep.subr.mxu0 0.0
    %3871 = vmatpush2.msra.mxu0 0.0
    %3872 = vmatprep.subr.mxu0 0.0
    %3873 = vmatpush2.msra.mxu0 0.0
    %3874 = vmatprep.subr.mxu0 0.0
    %3875 = vmatpush2.msra.mxu0 0.0
    %3876 = vmatprep.subr.mxu0 0.0
    %3877 = vmatpush2.msra.mxu0 0.0
    %3878 = vmatprep.mubr.f32.mxu0 0.0
    %3879 = vmatmul.mubr.f32.gmra.mxu0 %v3812
    %v3880 = vpop.f32.mrf.mxu0
    %v3881 = vadd.f32 0.0, %v3880
    %v3882 = vpop.f32.mrf.mxu0
    %3883 = vdwg.mxu0
    %3886 = vset.pattern.permute.xlu0 0
    %3887 = vperm.xlu0 %3886, %v3793
    %v3888 = vpop.permute.xlu0 %3887
    %3889 = vset.pattern.permute.xlu0 0
    %3890 = vperm.xlu0 %3889, %v3794
    %v3891 = vpop.permute.xlu0 %3890
    %v3892 = vlaneseq
    %v3893 = vshrl.u32 %v3892, 7
    %v3894 = vsub.s32 %v221, %v3893
    %v3895 = vrot.slane %v3888, %v3894
    %v3896 = vlaneseq
    %v3897 = vshrl.u32 %v3896, 7
    %v3898 = vsub.s32 %v744, %v3897
    %v3899 = vrot.slane %v3891, %v3898
    %v3900 = vsel %vm749, %v3899, %v3895
    %v3901 = vsel %vm428, %v3900, 0
    %3903 = vmatprep.subr.mxu0 0.0
    %3904 = vmatpush1.msra.mxu0 0.0
    %3905 = vmatprep.subr.mxu0 0.0
    %3906 = vmatpush1.msra.mxu0 0.0
    %3907 = vmatprep.subr.mxu0 0.0
    %3908 = vmatpush1.msra.mxu0 0.0
    %3909 = vmatprep.subr.mxu0 0.0
    %3910 = vmatpush1.msra.mxu0 0.0
    %3911 = vmatprep.subr.mxu0 0.0
    %3912 = vmatpush1.msra.mxu0 0.0
    %3913 = vmatprep.subr.mxu0 0.0
    %3914 = vmatpush1.msra.mxu0 0.0
    %3915 = vmatprep.subr.mxu0 0.0
    %3916 = vmatpush1.msra.mxu0 0.0
    %3917 = vmatprep.subr.mxu0 0.0
    %3918 = vmatpush1.msra.mxu0 0.0
    %3919 = vmatprep.subr.mxu0 0.0
    %3920 = vmatpush1.msra.mxu0 0.0
    %3921 = vmatprep.subr.mxu0 0.0
    %3922 = vmatpush1.msra.mxu0 0.0
    %3923 = vmatprep.subr.mxu0 0.0
    %3924 = vmatpush1.msra.mxu0 0.0
    %3925 = vmatprep.subr.mxu0 0.0
    %3926 = vmatpush1.msra.mxu0 0.0
    %3927 = vmatprep.subr.mxu0 0.0
    %3928 = vmatpush1.msra.mxu0 0.0
    %3929 = vmatprep.subr.mxu0 0.0
    %3930 = vmatpush1.msra.mxu0 0.0
    %3931 = vmatprep.subr.mxu0 0.0
    %3932 = vmatpush1.msra.mxu0 %v52
    %3933 = vmatprep.subr.mxu0 0.0
    %3934 = vmatpush1.msra.mxu0 %v51
    %3935 = vmatprep.subr.mxu0 0.0
    %3936 = vmatpush2.msra.mxu0 0.0
    %3937 = vmatprep.subr.mxu0 0.0
    %3938 = vmatpush2.msra.mxu0 0.0
    %3939 = vmatprep.subr.mxu0 0.0
    %3940 = vmatpush2.msra.mxu0 0.0
    %3941 = vmatprep.subr.mxu0 0.0
    %3942 = vmatpush2.msra.mxu0 0.0
    %3943 = vmatprep.subr.mxu0 0.0
    %3944 = vmatpush2.msra.mxu0 0.0
    %3945 = vmatprep.subr.mxu0 0.0
    %3946 = vmatpush2.msra.mxu0 0.0
    %3947 = vmatprep.subr.mxu0 0.0
    %3948 = vmatpush2.msra.mxu0 0.0
    %3949 = vmatprep.subr.mxu0 0.0
    %3950 = vmatpush2.msra.mxu0 0.0
    %3951 = vmatprep.subr.mxu0 0.0
    %3952 = vmatpush2.msra.mxu0 0.0
    %3953 = vmatprep.subr.mxu0 0.0
    %3954 = vmatpush2.msra.mxu0 0.0
    %3955 = vmatprep.subr.mxu0 0.0
    %3956 = vmatpush2.msra.mxu0 0.0
    %3957 = vmatprep.subr.mxu0 0.0
    %3958 = vmatpush2.msra.mxu0 0.0
    %3959 = vmatprep.subr.mxu0 0.0
    %3960 = vmatpush2.msra.mxu0 0.0
    %3961 = vmatprep.subr.mxu0 0.0
    %3962 = vmatpush2.msra.mxu0 0.0
    %3963 = vmatprep.subr.mxu0 0.0
    %3964 = vmatpush2.msra.mxu0 0.0
    %3965 = vmatprep.subr.mxu0 0.0
    %3966 = vmatpush2.msra.mxu0 0.0
    %3967 = vmatprep.mubr.f32.mxu0 0.0
    %3968 = vmatmul.mubr.f32.gmra.mxu0 %v3901
    %v3969 = vpop.f32.mrf.mxu0
    %v3970 = vadd.f32 0.0, %v3969
    %v3971 = vpop.f32.mrf.mxu0
    %3972 = vdwg.mxu0
    %v3973 = vld [vmem:[#allocation4 + $0xc0] sm:$0xff]
    %v3974 = vld [vmem:[#allocation4 + $0xc8] sm:$0xff]
    %v3975 = vld [vmem:[#allocation4 + $0xd0] sm:$0xff]
    %v3976 = vld [vmem:[#allocation4 + $0xd8] sm:$0xff]
    %v3977 = vld [vmem:[#allocation4 + $0xe0] sm:$0xff]
    %v3978 = vld [vmem:[#allocation4 + $0xe8] sm:$0xff]
    %v3979 = vld [vmem:[#allocation4 + $0xf0] sm:$0xff]
    %v3980 = vld [vmem:[#allocation4 + $0xf8] sm:$0xff]
    %v3983 = vrot.slane %v3970, 7
    %v3984 = vsel %vm760, %v3983, %v3881
    %v3985 = vsel %vm57, %v3984, 0
    %3987 = vmatprep.subr.mxu0 0.0
    %3988 = vmatpush1.msra.mxu0 0.0
    %3989 = vmatprep.subr.mxu0 0.0
    %3990 = vmatpush1.msra.mxu0 0.0
    %3991 = vmatprep.subr.mxu0 0.0
    %3992 = vmatpush1.msra.mxu0 0.0
    %3993 = vmatprep.subr.mxu0 0.0
    %3994 = vmatpush1.msra.mxu0 0.0
    %3995 = vmatprep.subr.mxu0 0.0
    %3996 = vmatpush1.msra.mxu0 0.0
    %3997 = vmatprep.subr.mxu0 0.0
    %3998 = vmatpush1.msra.mxu0 0.0
    %3999 = vmatprep.subr.mxu0 0.0
    %4000 = vmatpush1.msra.mxu0 0.0
    %4001 = vmatprep.subr.mxu0 0.0
    %4002 = vmatpush1.msra.mxu0 0.0
    %4003 = vmatprep.subr.mxu0 0.0
    %4004 = vmatpush1.msra.mxu0 0.0
    %4005 = vmatprep.subr.mxu0 0.0
    %4006 = vmatpush1.msra.mxu0 0.0
    %4007 = vmatprep.subr.mxu0 0.0
    %4008 = vmatpush1.msra.mxu0 0.0
    %4009 = vmatprep.subr.mxu0 0.0
    %4010 = vmatpush1.msra.mxu0 0.0
    %4011 = vmatprep.subr.mxu0 0.0
    %4012 = vmatpush1.msra.mxu0 %v3980
    %4013 = vmatprep.subr.mxu0 0.0
    %4014 = vmatpush1.msra.mxu0 %v3979
    %4015 = vmatprep.subr.mxu0 0.0
    %4016 = vmatpush1.msra.mxu0 %v3978
    %4017 = vmatprep.subr.mxu0 0.0
    %4018 = vmatpush1.msra.mxu0 %v3977
    %4019 = vmatprep.subr.mxu0 0.0
    %4020 = vmatpush2.msra.mxu0 0.0
    %4021 = vmatprep.subr.mxu0 0.0
    %4022 = vmatpush2.msra.mxu0 0.0
    %4023 = vmatprep.subr.mxu0 0.0
    %4024 = vmatpush2.msra.mxu0 0.0
    %4025 = vmatprep.subr.mxu0 0.0
    %4026 = vmatpush2.msra.mxu0 0.0
    %4027 = vmatprep.subr.mxu0 0.0
    %4028 = vmatpush2.msra.mxu0 0.0
    %4029 = vmatprep.subr.mxu0 0.0
    %4030 = vmatpush2.msra.mxu0 0.0
    %4031 = vmatprep.subr.mxu0 0.0
    %4032 = vmatpush2.msra.mxu0 0.0
    %4033 = vmatprep.subr.mxu0 0.0
    %4034 = vmatpush2.msra.mxu0 0.0
    %4035 = vmatprep.subr.mxu0 0.0
    %4036 = vmatpush2.msra.mxu0 0.0
    %4037 = vmatprep.subr.mxu0 0.0
    %4038 = vmatpush2.msra.mxu0 0.0
    %4039 = vmatprep.subr.mxu0 0.0
    %4040 = vmatpush2.msra.mxu0 0.0
    %4041 = vmatprep.subr.mxu0 0.0
    %4042 = vmatpush2.msra.mxu0 0.0
    %4043 = vmatprep.subr.mxu0 0.0
    %4044 = vmatpush2.msra.mxu0 0.0
    %4045 = vmatprep.subr.mxu0 0.0
    %4046 = vmatpush2.msra.mxu0 0.0
    %4047 = vmatprep.subr.mxu0 0.0
    %4048 = vmatpush2.msra.mxu0 0.0
    %4049 = vmatprep.subr.mxu0 0.0
    %4050 = vmatpush2.msra.mxu0 0.0
    %4051 = vmatprep.mubr.f32.mxu0 0.0
    %4052 = vmatmul.mubr.f32.gmra.mxu0 %v3985
    %v4053 = vpop.f32.mrf.mxu0
    %v4054 = vadd.f32 0.0, %v4053
    %v4055 = vpop.f32.mrf.mxu0
    %4056 = vdwg.mxu0
    %4057 = vmatprep.subr.mxu0 0.0
    %4058 = vmatpush1.msra.mxu0 0.0
    %4059 = vmatprep.subr.mxu0 0.0
    %4060 = vmatpush1.msra.mxu0 0.0
    %4061 = vmatprep.subr.mxu0 0.0
    %4062 = vmatpush1.msra.mxu0 0.0
    %4063 = vmatprep.subr.mxu0 0.0
    %4064 = vmatpush1.msra.mxu0 0.0
    %4065 = vmatprep.subr.mxu0 0.0
    %4066 = vmatpush1.msra.mxu0 0.0
    %4067 = vmatprep.subr.mxu0 0.0
    %4068 = vmatpush1.msra.mxu0 0.0
    %4069 = vmatprep.subr.mxu0 0.0
    %4070 = vmatpush1.msra.mxu0 0.0
    %4071 = vmatprep.subr.mxu0 0.0
    %4072 = vmatpush1.msra.mxu0 0.0
    %4073 = vmatprep.subr.mxu0 0.0
    %4074 = vmatpush1.msra.mxu0 0.0
    %4075 = vmatprep.subr.mxu0 0.0
    %4076 = vmatpush1.msra.mxu0 0.0
    %4077 = vmatprep.subr.mxu0 0.0
    %4078 = vmatpush1.msra.mxu0 0.0
    %4079 = vmatprep.subr.mxu0 0.0
    %4080 = vmatpush1.msra.mxu0 0.0
    %4081 = vmatprep.subr.mxu0 0.0
    %4082 = vmatpush1.msra.mxu0 %v3976
    %4083 = vmatprep.subr.mxu0 0.0
    %4084 = vmatpush1.msra.mxu0 %v3975
    %4085 = vmatprep.subr.mxu0 0.0
    %4086 = vmatpush1.msra.mxu0 %v3974
    %4087 = vmatprep.subr.mxu0 0.0
    %4088 = vmatpush1.msra.mxu0 %v3973
    %4089 = vmatprep.subr.mxu0 0.0
    %4090 = vmatpush2.msra.mxu0 0.0
    %4091 = vmatprep.subr.mxu0 0.0
    %4092 = vmatpush2.msra.mxu0 0.0
    %4093 = vmatprep.subr.mxu0 0.0
    %4094 = vmatpush2.msra.mxu0 0.0
    %4095 = vmatprep.subr.mxu0 0.0
    %4096 = vmatpush2.msra.mxu0 0.0
    %4097 = vmatprep.subr.mxu0 0.0
    %4098 = vmatpush2.msra.mxu0 0.0
    %4099 = vmatprep.subr.mxu0 0.0
    %4100 = vmatpush2.msra.mxu0 0.0
    %4101 = vmatprep.subr.mxu0 0.0
    %4102 = vmatpush2.msra.mxu0 0.0
    %4103 = vmatprep.subr.mxu0 0.0
    %4104 = vmatpush2.msra.mxu0 0.0
    %4105 = vmatprep.subr.mxu0 0.0
    %4106 = vmatpush2.msra.mxu0 0.0
    %4107 = vmatprep.subr.mxu0 0.0
    %4108 = vmatpush2.msra.mxu0 0.0
    %4109 = vmatprep.subr.mxu0 0.0
    %4110 = vmatpush2.msra.mxu0 0.0
    %4111 = vmatprep.subr.mxu0 0.0
    %4112 = vmatpush2.msra.mxu0 0.0
    %4113 = vmatprep.subr.mxu0 0.0
    %4114 = vmatpush2.msra.mxu0 0.0
    %4115 = vmatprep.subr.mxu0 0.0
    %4116 = vmatpush2.msra.mxu0 0.0
    %4117 = vmatprep.subr.mxu0 0.0
    %4118 = vmatpush2.msra.mxu0 0.0
    %4119 = vmatprep.subr.mxu0 0.0
    %4120 = vmatpush2.msra.mxu0 0.0
    %4121 = vmatprep.mubr.f32.mxu0 0.0
    %4122 = vmatmul.mubr.f32.gmra.mxu0 %v3548
    %v4123 = vpop.f32.mrf.mxu0
    %v4124 = vadd.f32 %v4054, %v4123
    %v4125 = vpop.f32.mrf.mxu0
    %4126 = vdwg.mxu0
    %v4127 = vadd.f32 %v4124, %v1181
    %v4128 = vsel %vm1183, %v4127, -inf
    %4129 = vmax.xlane.f32.xlu0 %v4128
    %v4130 = vpop.xlane.xlu0 %4129
    %v4131 = vsub.f32 %v4127, %v4130
    %v4132 = vmul.f32 %v4131, 1.442695
    %v4133 = vpow.pop %v4132
    %v4134 = vsel %vm1183, %v4133, 0.0
    %4135 = vadd.xlane.f32.xlu0 %v4134
    %v4136 = vpop.xlane.xlu0 %4135
    %v4137 = vlog2.pop %v4136
    %v4138 = vmul.f32 %v4137, 0.6931472
    %v4139 = vadd.f32 %v4138, %v4130
    %v4140 = vsub.f32 %v4127, %v4139
    %v4143 = vunpack.c.l.s4 1966171168
    %v4144 = vunpack.c.0.s8 %v4143
    %v4145 = vlaneseq
    %v4146 = vshrl.u32 %v4145, 7
    %v4147 = vsub.s32 %v4144, %v4146
    %v4148 = vrot.slane %v4140, %v4147
    %v4149 = vcombine.high %v4148, %v4148
    %v4151 = vunpack.c.l.s4 1966171168
    %v4152 = vunpack.c.0.s8 %v4151
    %v4153 = vlaneseq
    %v4154 = vshrl.u32 %v4153, 7
    %v4155 = vsub.s32 %v4152, %v4154
    %v4156 = vrot.slane %v4148, %v4155
    %v4158 = vunpack.c.l.s4 1966171168
    %v4159 = vunpack.c.0.s8 %v4158
    %v4160 = vlaneseq
    %v4161 = vshrl.u32 %v4160, 7
    %v4162 = vsub.s32 %v4159, %v4161
    %v4163 = vrot.slane %v4149, %v4162
    %4166 = vst.msk [vmem:[%s2 + $0x3] sm:$0x1] %vm1222, %v4156
    %4167 = vst.msk [vmem:[%s2 + $0xb] sm:$0x1] %vm1222, %v4163
    %v4168 = vsel %vm1183, %v4140, -inf
    %4169 = vmax.xlane.f32.xlu0 %v4168
    %v4170 = vpop.xlane.xlu0 %4169
    %vm4171 = vcmp.eq.f32.partialorder %v4140, %v4170
    %v4172 = vsel %vm4171, %v221, 24
    %v4173 = vsel %vm1183, %v4172, 2147483647
    %v4174 = vand.u32 %v4173, 65535
    %v4175 = vshra.s32 %v4173, 16
    %v4176 = vcvt.s32.f32 %v4174
    %v4177 = vcvt.s32.f32 %v4175
    %4178 = vmin.xlane.f32.xlu0 %v4177
    %v4179 = vpop.xlane.xlu0 %4178
    %vm4180 = vcmp.eq.f32.partialorder %v4177, %v4179
    %v4181 = vsel %vm4180, %v4176, inf
    %4182 = vmin.xlane.f32.xlu0 %v4181
    %v4183 = vpop.xlane.xlu0 %4182
    %v4184 = vcvt.f32.s32 %v4183
    %v4185 = vcvt.f32.s32 %v4179
    %v4186 = vshll.u32 %v4185, 16
    %v4187 = vadd.s32 %v4186, %v4184
    %vm4188 = vcmp.eq.s32.totalorder %v221, %v4187
    %v4189 = vsel %vm4188, 1, 0
    %v4190 = vcvt.s32.f32 %v4189
    %v4191 = vld [vmem:[#allocation4] sm:$0xff]
    %v4192 = vld [vmem:[#allocation4 + $0x8] sm:$0xff]
    %v4193 = vld [vmem:[#allocation4 + $0x10] sm:$0xff]
    %v4194 = vld [vmem:[#allocation4 + $0x18] sm:$0xff]
    %v4195 = vld [vmem:[#allocation4 + $0x20] sm:$0xff]
    %v4196 = vld [vmem:[#allocation4 + $0x28] sm:$0xff]
    %v4197 = vld [vmem:[#allocation4 + $0x30] sm:$0xff]
    %v4198 = vld [vmem:[#allocation4 + $0x38] sm:$0xff]
    %v4199 = vld [vmem:[#allocation4 + $0x40] sm:$0xff]
    %v4200 = vld [vmem:[#allocation4 + $0x48] sm:$0xff]
    %v4201 = vld [vmem:[#allocation4 + $0x50] sm:$0xff]
    %v4202 = vld [vmem:[#allocation4 + $0x58] sm:$0xff]
    %v4203 = vld [vmem:[#allocation4 + $0x60] sm:$0xff]
    %v4204 = vld [vmem:[#allocation4 + $0x68] sm:$0xff]
    %v4205 = vld [vmem:[#allocation4 + $0x70] sm:$0xff]
    %v4206 = vld [vmem:[#allocation4 + $0x78] sm:$0xff]
    %v4207 = vld [vmem:[#allocation4 + $0x80] sm:$0xff]
    %v4208 = vld [vmem:[#allocation4 + $0x88] sm:$0xff]
    %v4209 = vld [vmem:[#allocation4 + $0x90] sm:$0xff]
    %v4210 = vld [vmem:[#allocation4 + $0x98] sm:$0xff]
    %4211 = vmatprep.subr.mxu0 0.0
    %4212 = vmatpush1.msra.mxu0 %v4206
    %4213 = vmatprep.subr.mxu0 0.0
    %4214 = vmatpush1.msra.mxu0 %v4205
    %4215 = vmatprep.subr.mxu0 0.0
    %4216 = vmatpush1.msra.mxu0 %v4204
    %4217 = vmatprep.subr.mxu0 0.0
    %4218 = vmatpush1.msra.mxu0 %v4203
    %4219 = vmatprep.subr.mxu0 0.0
    %4220 = vmatpush1.msra.mxu0 %v4202
    %4221 = vmatprep.subr.mxu0 0.0
    %4222 = vmatpush1.msra.mxu0 %v4201
    %4223 = vmatprep.subr.mxu0 0.0
    %4224 = vmatpush1.msra.mxu0 %v4200
    %4225 = vmatprep.subr.mxu0 0.0
    %4226 = vmatpush1.msra.mxu0 %v4199
    %4227 = vmatprep.subr.mxu0 0.0
    %4228 = vmatpush1.msra.mxu0 %v4198
    %4229 = vmatprep.subr.mxu0 0.0
    %4230 = vmatpush1.msra.mxu0 %v4197
    %4231 = vmatprep.subr.mxu0 0.0
    %4232 = vmatpush1.msra.mxu0 %v4196
    %4233 = vmatprep.subr.mxu0 0.0
    %4234 = vmatpush1.msra.mxu0 %v4195
    %4235 = vmatprep.subr.mxu0 0.0
    %4236 = vmatpush1.msra.mxu0 %v4194
    %4237 = vmatprep.subr.mxu0 0.0
    %4238 = vmatpush1.msra.mxu0 %v4193
    %4239 = vmatprep.subr.mxu0 0.0
    %4240 = vmatpush1.msra.mxu0 %v4192
    %4241 = vmatprep.subr.mxu0 0.0
    %4242 = vmatpush1.msra.mxu0 %v4191
    %4243 = vmatprep.subr.mxu0 0.0
    %4244 = vmatpush2.msra.mxu0 0.0
    %4245 = vmatprep.subr.mxu0 0.0
    %4246 = vmatpush2.msra.mxu0 0.0
    %4247 = vmatprep.subr.mxu0 0.0
    %4248 = vmatpush2.msra.mxu0 0.0
    %4249 = vmatprep.subr.mxu0 0.0
    %4250 = vmatpush2.msra.mxu0 0.0
    %4251 = vmatprep.subr.mxu0 0.0
    %4252 = vmatpush2.msra.mxu0 0.0
    %4253 = vmatprep.subr.mxu0 0.0
    %4254 = vmatpush2.msra.mxu0 0.0
    %4255 = vmatprep.subr.mxu0 0.0
    %4256 = vmatpush2.msra.mxu0 0.0
    %4257 = vmatprep.subr.mxu0 0.0
    %4258 = vmatpush2.msra.mxu0 0.0
    %4259 = vmatprep.subr.mxu0 0.0
    %4260 = vmatpush2.msra.mxu0 0.0
    %4261 = vmatprep.subr.mxu0 0.0
    %4262 = vmatpush2.msra.mxu0 0.0
    %4263 = vmatprep.subr.mxu0 0.0
    %4264 = vmatpush2.msra.mxu0 0.0
    %4265 = vmatprep.subr.mxu0 0.0
    %4266 = vmatpush2.msra.mxu0 0.0
    %4267 = vmatprep.subr.mxu0 0.0
    %4268 = vmatpush2.msra.mxu0 %v4210
    %4269 = vmatprep.subr.mxu0 0.0
    %4270 = vmatpush2.msra.mxu0 %v4209
    %4271 = vmatprep.subr.mxu0 0.0
    %4272 = vmatpush2.msra.mxu0 %v4208
    %4273 = vmatprep.subr.mxu0 0.0
    %4274 = vmatpush2.msra.mxu0 %v4207
    %4275 = vmatprep.mubr.f32.mxu0 %v3985
    %4276 = vmatmul.mubr.f32.gmra.mxu0 %v4190
    %v4277 = vpop.f32.mrf.mxu0
    %v4278 = vadd.f32 %v248, %v4277
    %v4279 = vpop.f32.mrf.mxu0
    %4280 = vdwg.mxu0
    %v4281 = vld [vmem:[#allocation4 + $0xa0] sm:$0xff]
    %v4282 = vld [vmem:[#allocation4 + $0xa8] sm:$0xff]
    %v4283 = vld [vmem:[#allocation4 + $0xb0] sm:$0xff]
    %v4284 = vld [vmem:[#allocation4 + $0xb8] sm:$0xff]
    %4285 = vmatprep.subr.mxu0 0.0
    %4286 = vmatpush1.msra.mxu0 0.0
    %4287 = vmatprep.subr.mxu0 0.0
    %4288 = vmatpush1.msra.mxu0 0.0
    %4289 = vmatprep.subr.mxu0 0.0
    %4290 = vmatpush1.msra.mxu0 0.0
    %4291 = vmatprep.subr.mxu0 0.0
    %4292 = vmatpush1.msra.mxu0 0.0
    %4293 = vmatprep.subr.mxu0 0.0
    %4294 = vmatpush1.msra.mxu0 0.0
    %4295 = vmatprep.subr.mxu0 0.0
    %4296 = vmatpush1.msra.mxu0 0.0
    %4297 = vmatprep.subr.mxu0 0.0
    %4298 = vmatpush1.msra.mxu0 0.0
    %4299 = vmatprep.subr.mxu0 0.0
    %4300 = vmatpush1.msra.mxu0 0.0
    %4301 = vmatprep.subr.mxu0 0.0
    %4302 = vmatpush1.msra.mxu0 0.0
    %4303 = vmatprep.subr.mxu0 0.0
    %4304 = vmatpush1.msra.mxu0 0.0
    %4305 = vmatprep.subr.mxu0 0.0
    %4306 = vmatpush1.msra.mxu0 0.0
    %4307 = vmatprep.subr.mxu0 0.0
    %4308 = vmatpush1.msra.mxu0 0.0
    %4309 = vmatprep.subr.mxu0 0.0
    %4310 = vmatpush1.msra.mxu0 %v4284
    %4311 = vmatprep.subr.mxu0 0.0
    %4312 = vmatpush1.msra.mxu0 %v4283
    %4313 = vmatprep.subr.mxu0 0.0
    %4314 = vmatpush1.msra.mxu0 %v4282
    %4315 = vmatprep.subr.mxu0 0.0
    %4316 = vmatpush1.msra.mxu0 %v4281
    %4317 = vmatprep.subr.mxu0 0.0
    %4318 = vmatpush2.msra.mxu0 0.0
    %4319 = vmatprep.subr.mxu0 0.0
    %4320 = vmatpush2.msra.mxu0 0.0
    %4321 = vmatprep.subr.mxu0 0.0
    %4322 = vmatpush2.msra.mxu0 0.0
    %4323 = vmatprep.subr.mxu0 0.0
    %4324 = vmatpush2.msra.mxu0 0.0
    %4325 = vmatprep.subr.mxu0 0.0
    %4326 = vmatpush2.msra.mxu0 0.0
    %4327 = vmatprep.subr.mxu0 0.0
    %4328 = vmatpush2.msra.mxu0 0.0
    %4329 = vmatprep.subr.mxu0 0.0
    %4330 = vmatpush2.msra.mxu0 0.0
    %4331 = vmatprep.subr.mxu0 0.0
    %4332 = vmatpush2.msra.mxu0 0.0
    %4333 = vmatprep.subr.mxu0 0.0
    %4334 = vmatpush2.msra.mxu0 0.0
    %4335 = vmatprep.subr.mxu0 0.0
    %4336 = vmatpush2.msra.mxu0 0.0
    %4337 = vmatprep.subr.mxu0 0.0
    %4338 = vmatpush2.msra.mxu0 0.0
    %4339 = vmatprep.subr.mxu0 0.0
    %4340 = vmatpush2.msra.mxu0 0.0
    %4341 = vmatprep.subr.mxu0 0.0
    %4342 = vmatpush2.msra.mxu0 0.0
    %4343 = vmatprep.subr.mxu0 0.0
    %4344 = vmatpush2.msra.mxu0 0.0
    %4345 = vmatprep.subr.mxu0 0.0
    %4346 = vmatpush2.msra.mxu0 0.0
    %4347 = vmatprep.subr.mxu0 0.0
    %4348 = vmatpush2.msra.mxu0 0.0
    %4349 = vmatprep.mubr.f32.mxu0 0.0
    %4350 = vmatmul.mubr.f32.gmra.mxu0 %v3548
    %v4351 = vpop.f32.mrf.mxu0
    %v4352 = vadd.f32 %v329, %v4351
    %v4353 = vpop.f32.mrf.mxu0
    %4354 = vdwg.mxu0
    %v4355 = vadd.f32 %v4278, %v4352
    %v4356 = vxor.u32 %v4355, 2147483648
    %v4357 = vmul.f32 %v4356, 1.442695
    %v4358 = vpow.pop %v4357
    %v4359 = vadd.f32 %v4358, 1.0
    %v4360 = vrcp.pop %v4359
    %v4361 = vmul.f32 1.0, %v4360
    %4363 = vrot.lane.b32.xlu0 %v4352, 64
    %v4364 = vpop.permute.xlu0 %4363
    %v4366 = vmul.f32 %v4361, %v4364
    %4368 = vrot.lane.b32.xlu0 %v4366, 64
    %v4369 = vpop.permute.xlu0 %4368
    %v4371 = vadd.f32 %v4278, %v4369
    %v4372 = vtanh.pop %v4371
    %v4373 = vsub.f32 1.0, %v4361
    %4375 = vrot.lane.b32.xlu0 %v4372, 96
    %v4376 = vpop.permute.xlu0 %4375
    %v4378 = vmul.f32 %v4373, %v4376
    %v4379 = vmul.f32 %v4361, %v3399
    %v4380 = vadd.f32 %v4378, %v4379
    %v4381 = vld [vmem:[#allocation4 + $0x140] sm:$0xff]
    %v4382 = vld [vmem:[#allocation4 + $0x148] sm:$0xff]
    %v4383 = vsel %vm760, %v3900, %v3811
    %v4384 = vsel %vm428, %v4383, 0
    %4386 = vmatprep.subr.mxu0 0.0
    %4387 = vmatpush1.msra.mxu0 0.0
    %4388 = vmatprep.subr.mxu0 0.0
    %4389 = vmatpush1.msra.mxu0 0.0
    %4390 = vmatprep.subr.mxu0 0.0
    %4391 = vmatpush1.msra.mxu0 0.0
    %4392 = vmatprep.subr.mxu0 0.0
    %4393 = vmatpush1.msra.mxu0 0.0
    %4394 = vmatprep.subr.mxu0 0.0
    %4395 = vmatpush1.msra.mxu0 0.0
    %4396 = vmatprep.subr.mxu0 0.0
    %4397 = vmatpush1.msra.mxu0 0.0
    %4398 = vmatprep.subr.mxu0 0.0
    %4399 = vmatpush1.msra.mxu0 0.0
    %4400 = vmatprep.subr.mxu0 0.0
    %4401 = vmatpush1.msra.mxu0 0.0
    %4402 = vmatprep.subr.mxu0 0.0
    %4403 = vmatpush1.msra.mxu0 0.0
    %4404 = vmatprep.subr.mxu0 0.0
    %4405 = vmatpush1.msra.mxu0 0.0
    %4406 = vmatprep.subr.mxu0 0.0
    %4407 = vmatpush1.msra.mxu0 0.0
    %4408 = vmatprep.subr.mxu0 0.0
    %4409 = vmatpush1.msra.mxu0 0.0
    %4410 = vmatprep.subr.mxu0 0.0
    %4411 = vmatpush1.msra.mxu0 0.0
    %4412 = vmatprep.subr.mxu0 0.0
    %4413 = vmatpush1.msra.mxu0 0.0
    %4414 = vmatprep.subr.mxu0 0.0
    %4415 = vmatpush1.msra.mxu0 %v4382
    %4416 = vmatprep.subr.mxu0 0.0
    %4417 = vmatpush1.msra.mxu0 %v4381
    %4418 = vmatprep.subr.mxu0 0.0
    %4419 = vmatpush2.msra.mxu0 0.0
    %4420 = vmatprep.subr.mxu0 0.0
    %4421 = vmatpush2.msra.mxu0 0.0
    %4422 = vmatprep.subr.mxu0 0.0
    %4423 = vmatpush2.msra.mxu0 0.0
    %4424 = vmatprep.subr.mxu0 0.0
    %4425 = vmatpush2.msra.mxu0 0.0
    %4426 = vmatprep.subr.mxu0 0.0
    %4427 = vmatpush2.msra.mxu0 0.0
    %4428 = vmatprep.subr.mxu0 0.0
    %4429 = vmatpush2.msra.mxu0 0.0
    %4430 = vmatprep.subr.mxu0 0.0
    %4431 = vmatpush2.msra.mxu0 0.0
    %4432 = vmatprep.subr.mxu0 0.0
    %4433 = vmatpush2.msra.mxu0 0.0
    %4434 = vmatprep.subr.mxu0 0.0
    %4435 = vmatpush2.msra.mxu0 0.0
    %4436 = vmatprep.subr.mxu0 0.0
    %4437 = vmatpush2.msra.mxu0 0.0
    %4438 = vmatprep.subr.mxu0 0.0
    %4439 = vmatpush2.msra.mxu0 0.0
    %4440 = vmatprep.subr.mxu0 0.0
    %4441 = vmatpush2.msra.mxu0 0.0
    %4442 = vmatprep.subr.mxu0 0.0
    %4443 = vmatpush2.msra.mxu0 0.0
    %4444 = vmatprep.subr.mxu0 0.0
    %4445 = vmatpush2.msra.mxu0 0.0
    %4446 = vmatprep.subr.mxu0 0.0
    %4447 = vmatpush2.msra.mxu0 0.0
    %4448 = vmatprep.subr.mxu0 0.0
    %4449 = vmatpush2.msra.mxu0 0.0
    %4450 = vmatprep.mubr.f32.mxu0 0.0
    %4451 = vmatmul.mubr.f32.gmra.mxu0 %v4384
    %v4452 = vpop.f32.mrf.mxu0
    %v4453 = vadd.f32 0.0, %v4452
    %v4454 = vpop.f32.mrf.mxu0
    %4455 = vdwg.mxu0
    %v4456 = vlaneseq
    %v4457 = vshrl.u32 %v4456, 7
    %v4458 = vsub.s32 0, %v4457
    %v4459 = vrot.slane %v4453, %v4458
    %4461 = vbcast.lane.b32.xlu0 %v4459, 256
    %v4462 = vpop.permute.xlu0 %4461
    %s4464 = sor.u32 256, 8
    %4465 = vbcast.lane.b32.xlu0 %v4459, %s4464
    %v4466 = vpop.permute.xlu0 %4465
    %v4467 = vlaneseq
    %v4468 = vshrl.u32 %v4467, 7
    %v4469 = vsub.s32 1, %v4468
    %v4470 = vrot.slane %v4453, %v4469
    %4472 = vbcast.lane.b32.xlu0 %v4470, 256
    %v4473 = vpop.permute.xlu0 %4472
    %s4475 = sor.u32 256, 8
    %4476 = vbcast.lane.b32.xlu0 %v4470, %s4475
    %v4477 = vpop.permute.xlu0 %4476
    %v4478 = vmul.f32 %v4462, %v526
    %v4479 = vmul.f32 %v4466, %v526
    %v4480 = vmul.f32 %v4473, %v526
    %v4481 = vmul.f32 %v4477, %v526
    %v4486 = vmul.f32 %v3799, %v534
    %v4487 = vmul.f32 %v3802, %v534
    %v4488 = vmul.f32 %v3888, %v534
    %v4489 = vmul.f32 %v3891, %v534
    %v4490 = vadd.f32 %v4478, %v4486
    %v4491 = vadd.f32 %v4479, %v4487
    %v4492 = vadd.f32 %v4480, %v4488
    %v4493 = vadd.f32 %v4481, %v4489
    %s4495 = sor.u32 256, 16
    %4496 = vbcast.lane.b32.xlu0 %v4459, %s4495
    %v4497 = vpop.permute.xlu0 %4496
    %s4499 = sor.u32 256, 24
    %4500 = vbcast.lane.b32.xlu0 %v4459, %s4499
    %v4501 = vpop.permute.xlu0 %4500
    %s4503 = sor.u32 256, 16
    %4504 = vbcast.lane.b32.xlu0 %v4470, %s4503
    %v4505 = vpop.permute.xlu0 %4504
    %s4507 = sor.u32 256, 24
    %4508 = vbcast.lane.b32.xlu0 %v4470, %s4507
    %v4509 = vpop.permute.xlu0 %4508
    %v4510 = vmul.f32 %v4497, %v559
    %v4511 = vmul.f32 %v4501, %v559
    %v4512 = vmul.f32 %v4505, %v559
    %v4513 = vmul.f32 %v4509, %v559
    %v4514 = vadd.f32 %v4490, %v4510
    %v4515 = vadd.f32 %v4491, %v4511
    %v4516 = vadd.f32 %v4492, %v4512
    %v4517 = vadd.f32 %v4493, %v4513
    %v4518 = vadd.f32 %v4514, %v571
    %v4519 = vadd.f32 %v4515, %v571
    %v4520 = vadd.f32 %v4516, %v571
    %v4521 = vadd.f32 %v4517, %v571
    %v4522 = vld [vmem:[#allocation4 + $0x100] sm:$0xff]
    %v4523 = vld [vmem:[#allocation4 + $0x108] sm:$0xff]
    %v4524 = vld [vmem:[#allocation4 + $0x110] sm:$0xff]
    %v4525 = vld [vmem:[#allocation4 + $0x118] sm:$0xff]
    %4527 = vrot.lane.b32.xlu0 %v4380, 96
    %v4528 = vpop.permute.xlu0 %4527
    %v4529 = vsel %vm57, %v4528, 0
    %4531 = vmatprep.subr.mxu0 0.0
    %4532 = vmatpush1.msra.mxu0 0.0
    %4533 = vmatprep.subr.mxu0 0.0
    %4534 = vmatpush1.msra.mxu0 0.0
    %4535 = vmatprep.subr.mxu0 0.0
    %4536 = vmatpush1.msra.mxu0 0.0
    %4537 = vmatprep.subr.mxu0 0.0
    %4538 = vmatpush1.msra.mxu0 0.0
    %4539 = vmatprep.subr.mxu0 0.0
    %4540 = vmatpush1.msra.mxu0 0.0
    %4541 = vmatprep.subr.mxu0 0.0
    %4542 = vmatpush1.msra.mxu0 0.0
    %4543 = vmatprep.subr.mxu0 0.0
    %4544 = vmatpush1.msra.mxu0 0.0
    %4545 = vmatprep.subr.mxu0 0.0
    %4546 = vmatpush1.msra.mxu0 0.0
    %4547 = vmatprep.subr.mxu0 0.0
    %4548 = vmatpush1.msra.mxu0 0.0
    %4549 = vmatprep.subr.mxu0 0.0
    %4550 = vmatpush1.msra.mxu0 0.0
    %4551 = vmatprep.subr.mxu0 0.0
    %4552 = vmatpush1.msra.mxu0 0.0
    %4553 = vmatprep.subr.mxu0 0.0
    %4554 = vmatpush1.msra.mxu0 0.0
    %4555 = vmatprep.subr.mxu0 0.0
    %4556 = vmatpush1.msra.mxu0 %v4525
    %4557 = vmatprep.subr.mxu0 0.0
    %4558 = vmatpush1.msra.mxu0 %v4524
    %4559 = vmatprep.subr.mxu0 0.0
    %4560 = vmatpush1.msra.mxu0 %v4523
    %4561 = vmatprep.subr.mxu0 0.0
    %4562 = vmatpush1.msra.mxu0 %v4522
    %4563 = vmatprep.subr.mxu0 0.0
    %4564 = vmatpush2.msra.mxu0 0.0
    %4565 = vmatprep.subr.mxu0 0.0
    %4566 = vmatpush2.msra.mxu0 0.0
    %4567 = vmatprep.subr.mxu0 0.0
    %4568 = vmatpush2.msra.mxu0 0.0
    %4569 = vmatprep.subr.mxu0 0.0
    %4570 = vmatpush2.msra.mxu0 0.0
    %4571 = vmatprep.subr.mxu0 0.0
    %4572 = vmatpush2.msra.mxu0 0.0
    %4573 = vmatprep.subr.mxu0 0.0
    %4574 = vmatpush2.msra.mxu0 0.0
    %4575 = vmatprep.subr.mxu0 0.0
    %4576 = vmatpush2.msra.mxu0 0.0
    %4577 = vmatprep.subr.mxu0 0.0
    %4578 = vmatpush2.msra.mxu0 0.0
    %4579 = vmatprep.subr.mxu0 0.0
    %4580 = vmatpush2.msra.mxu0 0.0
    %4581 = vmatprep.subr.mxu0 0.0
    %4582 = vmatpush2.msra.mxu0 0.0
    %4583 = vmatprep.subr.mxu0 0.0
    %4584 = vmatpush2.msra.mxu0 0.0
    %4585 = vmatprep.subr.mxu0 0.0
    %4586 = vmatpush2.msra.mxu0 0.0
    %4587 = vmatprep.subr.mxu0 0.0
    %4588 = vmatpush2.msra.mxu0 0.0
    %4589 = vmatprep.subr.mxu0 0.0
    %4590 = vmatpush2.msra.mxu0 0.0
    %4591 = vmatprep.subr.mxu0 0.0
    %4592 = vmatpush2.msra.mxu0 0.0
    %4593 = vmatprep.subr.mxu0 0.0
    %4594 = vmatpush2.msra.mxu0 0.0
    %4595 = vmatprep.mubr.f32.mxu0 0.0
    %4596 = vmatmul.mubr.f32.gmra.mxu0 %v4529
    %v4597 = vpop.f32.mrf.mxu0
    %v4598 = vadd.f32 0.0, %v4597
    %v4599 = vpop.f32.mrf.mxu0
    %4600 = vdwg.mxu0
    %v4603 = vunpack.c.l.s4 1966171168
    %v4604 = vunpack.c.0.s8 %v4603
    %v4605 = vlaneseq
    %v4606 = vshrl.u32 %v4605, 7
    %v4607 = vsub.s32 %v4604, %v4606
    %v4608 = vrot.slane %v4598, %v4607
    %v4609 = vcombine.high %v4608, %v4608
    %v4611 = vunpack.c.l.s4 1966171168
    %v4612 = vunpack.c.0.s8 %v4611
    %v4613 = vlaneseq
    %v4614 = vshrl.u32 %v4613, 7
    %v4615 = vsub.s32 %v4612, %v4614
    %v4616 = vrot.slane %v4608, %v4615
    %v4618 = vunpack.c.l.s4 1966171168
    %v4619 = vunpack.c.0.s8 %v4618
    %v4620 = vlaneseq
    %v4621 = vshrl.u32 %v4620, 7
    %v4622 = vsub.s32 %v4619, %v4621
    %v4623 = vrot.slane %v4609, %v4622
    %v4624 = vlaneseq
    %v4625 = vshrl.u32 %v4624, 7
    %v4626 = vsub.s32 0, %v4625
    %v4627 = vrot.slane %v4616, %v4626
    %v4628 = vlaneseq
    %v4629 = vshrl.u32 %v4628, 7
    %v4630 = vsub.s32 0, %v4629
    %v4631 = vrot.slane %v4623, %v4630
    %v4634 = vadd.f32 %v4627, %v131
    %v4635 = vadd.f32 %v4627, %v136
    %v4636 = vadd.f32 %v4631, %v212
    %v4637 = vadd.f32 %v4631, %v217
    %v4638 = vadd.f32 %v4634, %v4518
    %v4639 = vadd.f32 %v4635, %v4519
    %v4640 = vadd.f32 %v4636, %v4520
    %v4641 = vadd.f32 %v4637, %v4521
    %v4642 = vadd.f32 %v4638, %v699
    %v4643 = vadd.f32 %v4639, %v699
    %v4644 = vadd.f32 %v4640, %v699
    %v4645 = vadd.f32 %v4641, %v699
    %v4646 = vtanh.pop %v4642
    %v4647 = vtanh.pop %v4643
    %v4648 = vtanh.pop %v4644
    %v4649 = vtanh.pop %v4645
    %v4650 = vmul.f32 %v4646, %v711
    %v4651 = vmul.f32 %v4647, %v711
    %v4652 = vmul.f32 %v4648, %v711
    %v4653 = vmul.f32 %v4649, %v711
    %v4654 = vsel %vm57, %v4650, 0.0
    %4655 = vadd.xlane.f32.xlu0 %v4654
    %v4656 = vpop.xlane.xlu0 %4655
    %v4657 = vsel %vm57, %v4651, 0.0
    %4658 = vadd.xlane.f32.xlu0 %v4657
    %v4659 = vpop.xlane.xlu0 %4658
    %v4660 = vsel %vm57, %v4652, 0.0
    %4661 = vadd.xlane.f32.xlu0 %v4660
    %v4662 = vpop.xlane.xlu0 %4661
    %v4663 = vsel %vm57, %v4653, 0.0
    %4664 = vadd.xlane.f32.xlu0 %v4663
    %v4665 = vpop.xlane.xlu0 %4664
    %v4666 = vadd.f32 %v4656, %v730
    %v4667 = vadd.f32 %v4659, %v730
    %v4668 = vadd.f32 %v4662, %v730
    %v4669 = vadd.f32 %v4665, %v730
    %v4674 = vlaneseq
    %v4675 = vshrl.u32 %v4674, 7
    %v4676 = vsub.s32 %v221, %v4675
    %v4677 = vrot.slane %v4666, %v4676
    %v4678 = vlaneseq
    %v4679 = vshrl.u32 %v4678, 7
    %v4680 = vsub.s32 %v744, %v4679
    %v4681 = vrot.slane %v4667, %v4680
    %v4682 = vsel %vm749, %v4681, %v4677
    %v4683 = vlaneseq
    %v4684 = vshrl.u32 %v4683, 7
    %v4685 = vsub.s32 %v221, %v4684
    %v4686 = vrot.slane %v4668, %v4685
    %v4687 = vlaneseq
    %v4688 = vshrl.u32 %v4687, 7
    %v4689 = vsub.s32 %v744, %v4688
    %v4690 = vrot.slane %v4669, %v4689
    %v4691 = vsel %vm749, %v4690, %v4686
    %v4692 = vsel %vm760, %v4691, %v4682
    %v4694 = vsel %vm763, %v4692, -inf
    %4695 = vmax.xlane.f32.xlu0 %v4694
    %v4696 = vpop.xlane.xlu0 %4695
    %v4698 = vlaneseq
    %v4699 = vshrl.u32 %v4698, 7
    %v4700 = vsub.s32 0, %v4699
    %v4701 = vrot.slane %v4696, %v4700
    %v4702 = vlaneseq
    %v4703 = vshrl.u32 %v4702, 7
    %v4704 = vsub.s32 1, %v4703
    %v4705 = vrot.slane %v4696, %v4704
    %v4708 = vsub.f32 %v4666, %v4701
    %v4709 = vsub.f32 %v4667, %v4701
    %v4710 = vsub.f32 %v4668, %v4705
    %v4711 = vsub.f32 %v4669, %v4705
    %v4712 = vmul.f32 %v4708, 1.442695
    %v4713 = vpow.pop %v4712
    %v4714 = vmul.f32 %v4709, 1.442695
    %v4715 = vpow.pop %v4714
    %v4716 = vmul.f32 %v4710, 1.442695
    %v4717 = vpow.pop %v4716
    %v4718 = vmul.f32 %v4711, 1.442695
    %v4719 = vpow.pop %v4718
    %4724 = vset.pattern.permute.xlu0 0
    %4725 = vperm.xlu0 %4724, %v4713
    %v4726 = vpop.permute.xlu0 %4725
    %4727 = vset.pattern.permute.xlu0 0
    %4728 = vperm.xlu0 %4727, %v4715
    %v4729 = vpop.permute.xlu0 %4728
    %4730 = vset.pattern.permute.xlu0 0
    %4731 = vperm.xlu0 %4730, %v4717
    %v4732 = vpop.permute.xlu0 %4731
    %4733 = vset.pattern.permute.xlu0 0
    %4734 = vperm.xlu0 %4733, %v4719
    %v4735 = vpop.permute.xlu0 %4734
    %v4736 = vlaneseq
    %v4737 = vshrl.u32 %v4736, 7
    %v4738 = vsub.s32 %v221, %v4737
    %v4739 = vrot.slane %v4726, %v4738
    %v4740 = vlaneseq
    %v4741 = vshrl.u32 %v4740, 7
    %v4742 = vsub.s32 %v744, %v4741
    %v4743 = vrot.slane %v4729, %v4742
    %v4744 = vsel %vm749, %v4743, %v4739
    %v4745 = vlaneseq
    %v4746 = vshrl.u32 %v4745, 7
    %v4747 = vsub.s32 %v221, %v4746
    %v4748 = vrot.slane %v4732, %v4747
    %v4749 = vlaneseq
    %v4750 = vshrl.u32 %v4749, 7
    %v4751 = vsub.s32 %v744, %v4750
    %v4752 = vrot.slane %v4735, %v4751
    %v4753 = vsel %vm749, %v4752, %v4748
    %v4754 = vsel %vm760, %v4753, %v4744
    %v4756 = vsel %vm763, %v4754, 0.0
    %4757 = vadd.xlane.f32.xlu0 %v4756
    %v4758 = vpop.xlane.xlu0 %4757
    %v4760 = vlaneseq
    %v4761 = vshrl.u32 %v4760, 7
    %v4762 = vsub.s32 0, %v4761
    %v4763 = vrot.slane %v4758, %v4762
    %v4764 = vlaneseq
    %v4765 = vshrl.u32 %v4764, 7
    %v4766 = vsub.s32 1, %v4765
    %v4767 = vrot.slane %v4758, %v4766
    %v4770 = vrcp.pop %v4763
    %v4771 = vmul.f32 %v4713, %v4770
    %v4772 = vmul.f32 %v4715, %v4770
    %v4773 = vrcp.pop %v4767
    %v4774 = vmul.f32 %v4717, %v4773
    %v4775 = vmul.f32 %v4719, %v4773
    %4778 = vset.pattern.permute.xlu0 0
    %4779 = vperm.xlu0 %4778, %v4771
    %v4780 = vpop.permute.xlu0 %4779
    %4781 = vset.pattern.permute.xlu0 0
    %4782 = vperm.xlu0 %4781, %v4772
    %v4783 = vpop.permute.xlu0 %4782
    %v4784 = vlaneseq
    %v4785 = vshrl.u32 %v4784, 7
    %v4786 = vsub.s32 %v221, %v4785
    %v4787 = vrot.slane %v4780, %v4786
    %v4788 = vlaneseq
    %v4789 = vshrl.u32 %v4788, 7
    %v4790 = vsub.s32 %v744, %v4789
    %v4791 = vrot.slane %v4783, %v4790
    %v4792 = vsel %vm749, %v4791, %v4787
    %v4793 = vsel %vm428, %v4792, 0
    %4795 = vmatprep.subr.mxu0 0.0
    %4796 = vmatpush1.msra.mxu0 0.0
    %4797 = vmatprep.subr.mxu0 0.0
    %4798 = vmatpush1.msra.mxu0 0.0
    %4799 = vmatprep.subr.mxu0 0.0
    %4800 = vmatpush1.msra.mxu0 0.0
    %4801 = vmatprep.subr.mxu0 0.0
    %4802 = vmatpush1.msra.mxu0 0.0
    %4803 = vmatprep.subr.mxu0 0.0
    %4804 = vmatpush1.msra.mxu0 0.0
    %4805 = vmatprep.subr.mxu0 0.0
    %4806 = vmatpush1.msra.mxu0 0.0
    %4807 = vmatprep.subr.mxu0 0.0
    %4808 = vmatpush1.msra.mxu0 0.0
    %4809 = vmatprep.subr.mxu0 0.0
    %4810 = vmatpush1.msra.mxu0 0.0
    %4811 = vmatprep.subr.mxu0 0.0
    %4812 = vmatpush1.msra.mxu0 0.0
    %4813 = vmatprep.subr.mxu0 0.0
    %4814 = vmatpush1.msra.mxu0 0.0
    %4815 = vmatprep.subr.mxu0 0.0
    %4816 = vmatpush1.msra.mxu0 0.0
    %4817 = vmatprep.subr.mxu0 0.0
    %4818 = vmatpush1.msra.mxu0 0.0
    %4819 = vmatprep.subr.mxu0 0.0
    %4820 = vmatpush1.msra.mxu0 0.0
    %4821 = vmatprep.subr.mxu0 0.0
    %4822 = vmatpush1.msra.mxu0 0.0
    %4823 = vmatprep.subr.mxu0 0.0
    %4824 = vmatpush1.msra.mxu0 %v50
    %4825 = vmatprep.subr.mxu0 0.0
    %4826 = vmatpush1.msra.mxu0 %v49
    %4827 = vmatprep.subr.mxu0 0.0
    %4828 = vmatpush2.msra.mxu0 0.0
    %4829 = vmatprep.subr.mxu0 0.0
    %4830 = vmatpush2.msra.mxu0 0.0
    %4831 = vmatprep.subr.mxu0 0.0
    %4832 = vmatpush2.msra.mxu0 0.0
    %4833 = vmatprep.subr.mxu0 0.0
    %4834 = vmatpush2.msra.mxu0 0.0
    %4835 = vmatprep.subr.mxu0 0.0
    %4836 = vmatpush2.msra.mxu0 0.0
    %4837 = vmatprep.subr.mxu0 0.0
    %4838 = vmatpush2.msra.mxu0 0.0
    %4839 = vmatprep.subr.mxu0 0.0
    %4840 = vmatpush2.msra.mxu0 0.0
    %4841 = vmatprep.subr.mxu0 0.0
    %4842 = vmatpush2.msra.mxu0 0.0
    %4843 = vmatprep.subr.mxu0 0.0
    %4844 = vmatpush2.msra.mxu0 0.0
    %4845 = vmatprep.subr.mxu0 0.0
    %4846 = vmatpush2.msra.mxu0 0.0
    %4847 = vmatprep.subr.mxu0 0.0
    %4848 = vmatpush2.msra.mxu0 0.0
    %4849 = vmatprep.subr.mxu0 0.0
    %4850 = vmatpush2.msra.mxu0 0.0
    %4851 = vmatprep.subr.mxu0 0.0
    %4852 = vmatpush2.msra.mxu0 0.0
    %4853 = vmatprep.subr.mxu0 0.0
    %4854 = vmatpush2.msra.mxu0 0.0
    %4855 = vmatprep.subr.mxu0 0.0
    %4856 = vmatpush2.msra.mxu0 0.0
    %4857 = vmatprep.subr.mxu0 0.0
    %4858 = vmatpush2.msra.mxu0 0.0
    %4859 = vmatprep.mubr.f32.mxu0 0.0
    %4860 = vmatmul.mubr.f32.gmra.mxu0 %v4793
    %v4861 = vpop.f32.mrf.mxu0
    %v4862 = vadd.f32 0.0, %v4861
    %v4863 = vpop.f32.mrf.mxu0
    %4864 = vdwg.mxu0
    %4867 = vset.pattern.permute.xlu0 0
    %4868 = vperm.xlu0 %4867, %v4774
    %v4869 = vpop.permute.xlu0 %4868
    %4870 = vset.pattern.permute.xlu0 0
    %4871 = vperm.xlu0 %4870, %v4775
    %v4872 = vpop.permute.xlu0 %4871
    %v4873 = vlaneseq
    %v4874 = vshrl.u32 %v4873, 7
    %v4875 = vsub.s32 %v221, %v4874
    %v4876 = vrot.slane %v4869, %v4875
    %v4877 = vlaneseq
    %v4878 = vshrl.u32 %v4877, 7
    %v4879 = vsub.s32 %v744, %v4878
    %v4880 = vrot.slane %v4872, %v4879
    %v4881 = vsel %vm749, %v4880, %v4876
    %v4882 = vsel %vm428, %v4881, 0
    %4884 = vmatprep.subr.mxu0 0.0
    %4885 = vmatpush1.msra.mxu0 0.0
    %4886 = vmatprep.subr.mxu0 0.0
    %4887 = vmatpush1.msra.mxu0 0.0
    %4888 = vmatprep.subr.mxu0 0.0
    %4889 = vmatpush1.msra.mxu0 0.0
    %4890 = vmatprep.subr.mxu0 0.0
    %4891 = vmatpush1.msra.mxu0 0.0
    %4892 = vmatprep.subr.mxu0 0.0
    %4893 = vmatpush1.msra.mxu0 0.0
    %4894 = vmatprep.subr.mxu0 0.0
    %4895 = vmatpush1.msra.mxu0 0.0
    %4896 = vmatprep.subr.mxu0 0.0
    %4897 = vmatpush1.msra.mxu0 0.0
    %4898 = vmatprep.subr.mxu0 0.0
    %4899 = vmatpush1.msra.mxu0 0.0
    %4900 = vmatprep.subr.mxu0 0.0
    %4901 = vmatpush1.msra.mxu0 0.0
    %4902 = vmatprep.subr.mxu0 0.0
    %4903 = vmatpush1.msra.mxu0 0.0
    %4904 = vmatprep.subr.mxu0 0.0
    %4905 = vmatpush1.msra.mxu0 0.0
    %4906 = vmatprep.subr.mxu0 0.0
    %4907 = vmatpush1.msra.mxu0 0.0
    %4908 = vmatprep.subr.mxu0 0.0
    %4909 = vmatpush1.msra.mxu0 0.0
    %4910 = vmatprep.subr.mxu0 0.0
    %4911 = vmatpush1.msra.mxu0 0.0
    %4912 = vmatprep.subr.mxu0 0.0
    %4913 = vmatpush1.msra.mxu0 %v52
    %4914 = vmatprep.subr.mxu0 0.0
    %4915 = vmatpush1.msra.mxu0 %v51
    %4916 = vmatprep.subr.mxu0 0.0
    %4917 = vmatpush2.msra.mxu0 0.0
    %4918 = vmatprep.subr.mxu0 0.0
    %4919 = vmatpush2.msra.mxu0 0.0
    %4920 = vmatprep.subr.mxu0 0.0
    %4921 = vmatpush2.msra.mxu0 0.0
    %4922 = vmatprep.subr.mxu0 0.0
    %4923 = vmatpush2.msra.mxu0 0.0
    %4924 = vmatprep.subr.mxu0 0.0
    %4925 = vmatpush2.msra.mxu0 0.0
    %4926 = vmatprep.subr.mxu0 0.0
    %4927 = vmatpush2.msra.mxu0 0.0
    %4928 = vmatprep.subr.mxu0 0.0
    %4929 = vmatpush2.msra.mxu0 0.0
    %4930 = vmatprep.subr.mxu0 0.0
    %4931 = vmatpush2.msra.mxu0 0.0
    %4932 = vmatprep.subr.mxu0 0.0
    %4933 = vmatpush2.msra.mxu0 0.0
    %4934 = vmatprep.subr.mxu0 0.0
    %4935 = vmatpush2.msra.mxu0 0.0
    %4936 = vmatprep.subr.mxu0 0.0
    %4937 = vmatpush2.msra.mxu0 0.0
    %4938 = vmatprep.subr.mxu0 0.0
    %4939 = vmatpush2.msra.mxu0 0.0
    %4940 = vmatprep.subr.mxu0 0.0
    %4941 = vmatpush2.msra.mxu0 0.0
    %4942 = vmatprep.subr.mxu0 0.0
    %4943 = vmatpush2.msra.mxu0 0.0
    %4944 = vmatprep.subr.mxu0 0.0
    %4945 = vmatpush2.msra.mxu0 0.0
    %4946 = vmatprep.subr.mxu0 0.0
    %4947 = vmatpush2.msra.mxu0 0.0
    %4948 = vmatprep.mubr.f32.mxu0 0.0
    %4949 = vmatmul.mubr.f32.gmra.mxu0 %v4882
    %v4950 = vpop.f32.mrf.mxu0
    %v4951 = vadd.f32 0.0, %v4950
    %v4952 = vpop.f32.mrf.mxu0
    %4953 = vdwg.mxu0
    %v4954 = vld [vmem:[#allocation4 + $0xc0] sm:$0xff]
    %v4955 = vld [vmem:[#allocation4 + $0xc8] sm:$0xff]
    %v4956 = vld [vmem:[#allocation4 + $0xd0] sm:$0xff]
    %v4957 = vld [vmem:[#allocation4 + $0xd8] sm:$0xff]
    %v4958 = vld [vmem:[#allocation4 + $0xe0] sm:$0xff]
    %v4959 = vld [vmem:[#allocation4 + $0xe8] sm:$0xff]
    %v4960 = vld [vmem:[#allocation4 + $0xf0] sm:$0xff]
    %v4961 = vld [vmem:[#allocation4 + $0xf8] sm:$0xff]
    %v4964 = vrot.slane %v4951, 7
    %v4965 = vsel %vm760, %v4964, %v4862
    %v4966 = vsel %vm57, %v4965, 0
    %4968 = vmatprep.subr.mxu0 0.0
    %4969 = vmatpush1.msra.mxu0 0.0
    %4970 = vmatprep.subr.mxu0 0.0
    %4971 = vmatpush1.msra.mxu0 0.0
    %4972 = vmatprep.subr.mxu0 0.0
    %4973 = vmatpush1.msra.mxu0 0.0
    %4974 = vmatprep.subr.mxu0 0.0
    %4975 = vmatpush1.msra.mxu0 0.0
    %4976 = vmatprep.subr.mxu0 0.0
    %4977 = vmatpush1.msra.mxu0 0.0
    %4978 = vmatprep.subr.mxu0 0.0
    %4979 = vmatpush1.msra.mxu0 0.0
    %4980 = vmatprep.subr.mxu0 0.0
    %4981 = vmatpush1.msra.mxu0 0.0
    %4982 = vmatprep.subr.mxu0 0.0
    %4983 = vmatpush1.msra.mxu0 0.0
    %4984 = vmatprep.subr.mxu0 0.0
    %4985 = vmatpush1.msra.mxu0 0.0
    %4986 = vmatprep.subr.mxu0 0.0
    %4987 = vmatpush1.msra.mxu0 0.0
    %4988 = vmatprep.subr.mxu0 0.0
    %4989 = vmatpush1.msra.mxu0 0.0
    %4990 = vmatprep.subr.mxu0 0.0
    %4991 = vmatpush1.msra.mxu0 0.0
    %4992 = vmatprep.subr.mxu0 0.0
    %4993 = vmatpush1.msra.mxu0 %v4961
    %4994 = vmatprep.subr.mxu0 0.0
    %4995 = vmatpush1.msra.mxu0 %v4960
    %4996 = vmatprep.subr.mxu0 0.0
    %4997 = vmatpush1.msra.mxu0 %v4959
    %4998 = vmatprep.subr.mxu0 0.0
    %4999 = vmatpush1.msra.mxu0 %v4958
    %5000 = vmatprep.subr.mxu0 0.0
    %5001 = vmatpush2.msra.mxu0 0.0
    %5002 = vmatprep.subr.mxu0 0.0
    %5003 = vmatpush2.msra.mxu0 0.0
    %5004 = vmatprep.subr.mxu0 0.0
    %5005 = vmatpush2.msra.mxu0 0.0
    %5006 = vmatprep.subr.mxu0 0.0
    %5007 = vmatpush2.msra.mxu0 0.0
    %5008 = vmatprep.subr.mxu0 0.0
    %5009 = vmatpush2.msra.mxu0 0.0
    %5010 = vmatprep.subr.mxu0 0.0
    %5011 = vmatpush2.msra.mxu0 0.0
    %5012 = vmatprep.subr.mxu0 0.0
    %5013 = vmatpush2.msra.mxu0 0.0
    %5014 = vmatprep.subr.mxu0 0.0
    %5015 = vmatpush2.msra.mxu0 0.0
    %5016 = vmatprep.subr.mxu0 0.0
    %5017 = vmatpush2.msra.mxu0 0.0
    %5018 = vmatprep.subr.mxu0 0.0
    %5019 = vmatpush2.msra.mxu0 0.0
    %5020 = vmatprep.subr.mxu0 0.0
    %5021 = vmatpush2.msra.mxu0 0.0
    %5022 = vmatprep.subr.mxu0 0.0
    %5023 = vmatpush2.msra.mxu0 0.0
    %5024 = vmatprep.subr.mxu0 0.0
    %5025 = vmatpush2.msra.mxu0 0.0
    %5026 = vmatprep.subr.mxu0 0.0
    %5027 = vmatpush2.msra.mxu0 0.0
    %5028 = vmatprep.subr.mxu0 0.0
    %5029 = vmatpush2.msra.mxu0 0.0
    %5030 = vmatprep.subr.mxu0 0.0
    %5031 = vmatpush2.msra.mxu0 0.0
    %5032 = vmatprep.mubr.f32.mxu0 0.0
    %5033 = vmatmul.mubr.f32.gmra.mxu0 %v4966
    %v5034 = vpop.f32.mrf.mxu0
    %v5035 = vadd.f32 0.0, %v5034
    %v5036 = vpop.f32.mrf.mxu0
    %5037 = vdwg.mxu0
    %5038 = vmatprep.subr.mxu0 0.0
    %5039 = vmatpush1.msra.mxu0 0.0
    %5040 = vmatprep.subr.mxu0 0.0
    %5041 = vmatpush1.msra.mxu0 0.0
    %5042 = vmatprep.subr.mxu0 0.0
    %5043 = vmatpush1.msra.mxu0 0.0
    %5044 = vmatprep.subr.mxu0 0.0
    %5045 = vmatpush1.msra.mxu0 0.0
    %5046 = vmatprep.subr.mxu0 0.0
    %5047 = vmatpush1.msra.mxu0 0.0
    %5048 = vmatprep.subr.mxu0 0.0
    %5049 = vmatpush1.msra.mxu0 0.0
    %5050 = vmatprep.subr.mxu0 0.0
    %5051 = vmatpush1.msra.mxu0 0.0
    %5052 = vmatprep.subr.mxu0 0.0
    %5053 = vmatpush1.msra.mxu0 0.0
    %5054 = vmatprep.subr.mxu0 0.0
    %5055 = vmatpush1.msra.mxu0 0.0
    %5056 = vmatprep.subr.mxu0 0.0
    %5057 = vmatpush1.msra.mxu0 0.0
    %5058 = vmatprep.subr.mxu0 0.0
    %5059 = vmatpush1.msra.mxu0 0.0
    %5060 = vmatprep.subr.mxu0 0.0
    %5061 = vmatpush1.msra.mxu0 0.0
    %5062 = vmatprep.subr.mxu0 0.0
    %5063 = vmatpush1.msra.mxu0 %v4957
    %5064 = vmatprep.subr.mxu0 0.0
    %5065 = vmatpush1.msra.mxu0 %v4956
    %5066 = vmatprep.subr.mxu0 0.0
    %5067 = vmatpush1.msra.mxu0 %v4955
    %5068 = vmatprep.subr.mxu0 0.0
    %5069 = vmatpush1.msra.mxu0 %v4954
    %5070 = vmatprep.subr.mxu0 0.0
    %5071 = vmatpush2.msra.mxu0 0.0
    %5072 = vmatprep.subr.mxu0 0.0
    %5073 = vmatpush2.msra.mxu0 0.0
    %5074 = vmatprep.subr.mxu0 0.0
    %5075 = vmatpush2.msra.mxu0 0.0
    %5076 = vmatprep.subr.mxu0 0.0
    %5077 = vmatpush2.msra.mxu0 0.0
    %5078 = vmatprep.subr.mxu0 0.0
    %5079 = vmatpush2.msra.mxu0 0.0
    %5080 = vmatprep.subr.mxu0 0.0
    %5081 = vmatpush2.msra.mxu0 0.0
    %5082 = vmatprep.subr.mxu0 0.0
    %5083 = vmatpush2.msra.mxu0 0.0
    %5084 = vmatprep.subr.mxu0 0.0
    %5085 = vmatpush2.msra.mxu0 0.0
    %5086 = vmatprep.subr.mxu0 0.0
    %5087 = vmatpush2.msra.mxu0 0.0
    %5088 = vmatprep.subr.mxu0 0.0
    %5089 = vmatpush2.msra.mxu0 0.0
    %5090 = vmatprep.subr.mxu0 0.0
    %5091 = vmatpush2.msra.mxu0 0.0
    %5092 = vmatprep.subr.mxu0 0.0
    %5093 = vmatpush2.msra.mxu0 0.0
    %5094 = vmatprep.subr.mxu0 0.0
    %5095 = vmatpush2.msra.mxu0 0.0
    %5096 = vmatprep.subr.mxu0 0.0
    %5097 = vmatpush2.msra.mxu0 0.0
    %5098 = vmatprep.subr.mxu0 0.0
    %5099 = vmatpush2.msra.mxu0 0.0
    %5100 = vmatprep.subr.mxu0 0.0
    %5101 = vmatpush2.msra.mxu0 0.0
    %5102 = vmatprep.mubr.f32.mxu0 0.0
    %5103 = vmatmul.mubr.f32.gmra.mxu0 %v4529
    %v5104 = vpop.f32.mrf.mxu0
    %v5105 = vadd.f32 %v5035, %v5104
    %v5106 = vpop.f32.mrf.mxu0
    %5107 = vdwg.mxu0
    %v5108 = vadd.f32 %v5105, %v1181
    %v5109 = vsel %vm1183, %v5108, -inf
    %5110 = vmax.xlane.f32.xlu0 %v5109
    %v5111 = vpop.xlane.xlu0 %5110
    %v5112 = vsub.f32 %v5108, %v5111
    %v5113 = vmul.f32 %v5112, 1.442695
    %v5114 = vpow.pop %v5113
    %v5115 = vsel %vm1183, %v5114, 0.0
    %5116 = vadd.xlane.f32.xlu0 %v5115
    %v5117 = vpop.xlane.xlu0 %5116
    %v5118 = vlog2.pop %v5117
    %v5119 = vmul.f32 %v5118, 0.6931472
    %v5120 = vadd.f32 %v5119, %v5111
    %v5121 = vsub.f32 %v5108, %v5120
    %v5124 = vunpack.c.l.s4 1966171168
    %v5125 = vunpack.c.0.s8 %v5124
    %v5126 = vlaneseq
    %v5127 = vshrl.u32 %v5126, 7
    %v5128 = vsub.s32 %v5125, %v5127
    %v5129 = vrot.slane %v5121, %v5128
    %v5130 = vcombine.high %v5129, %v5129
    %v5132 = vunpack.c.l.s4 1966171168
    %v5133 = vunpack.c.0.s8 %v5132
    %v5134 = vlaneseq
    %v5135 = vshrl.u32 %v5134, 7
    %v5136 = vsub.s32 %v5133, %v5135
    %v5137 = vrot.slane %v5129, %v5136
    %v5139 = vunpack.c.l.s4 1966171168
    %v5140 = vunpack.c.0.s8 %v5139
    %v5141 = vlaneseq
    %v5142 = vshrl.u32 %v5141, 7
    %v5143 = vsub.s32 %v5140, %v5142
    %v5144 = vrot.slane %v5130, %v5143
    %5147 = vst.msk [vmem:[%s2 + $0x4] sm:$0x1] %vm1222, %v5137
    %5148 = vst.msk [vmem:[%s2 + $0xc] sm:$0x1] %vm1222, %v5144
    // Predicated region
    $region18: #{decode.1} parent=1 // pred_check
      _
    $region19: #{decode.1} parent=1 // pred_check_branch
      %5150 = sbr.rel (0) target = $region21
    $region20: #{decode.1} parent=1 // pred_region
      _
    $region21: #{decode.1} parent=1 // pred_fallthru
      _
    // Predicated region
    $region22: #{decode.1} parent=1 // pred_check
      _
    $region23: #{decode.1} parent=1 // pred_check_branch
      %5152 = sbr.rel (0) target = $region25
    $region24: #{decode.1} parent=1 // pred_region
      _
    $region25: #{decode.1} parent=1 // pred_fallthru
      _
    %5153 = vsyncpa [#allocation3], 1
    %5154 = vsyncpa [#allocation5], 1

</llo_original>
